<compile_context>
chip_gen: v6e
topology: v6e:2x2x1
jax: 0.10.0
libtpu: 0.0.40
codegen_flags: <defaults>
</compile_context>

<pallas_src>
import jax
import jax.numpy as jnp
from jax import lax
from jax.experimental import pallas as pl
from jax.experimental.pallas import tpu as pltpu


def _rcab_kernel(xp_ref, w1_ref, b1_ref, w2_ref, b2_ref,
                 wdn_ref, bdn_ref, wup_ref, bup_ref,
                 o_ref, ypad_ref):
    """Fused RCAB forward for one batch element (NHWC tiles).

    xp_ref : (1, H+2p, W+2p, C)  zero-padded input (p = k//2)
    w1_ref : (k*k*C, C)          conv1 weight, taps folded into contraction
    b1_ref : (1, C)
    w2_ref : (k*k*C, C)          conv2 weight, same folding
    b2_ref : (1, C)
    wdn_ref: (C, Cr), bdn_ref: (1, Cr)   CA "squeeze" 1x1 conv
    wup_ref: (Cr, C), bup_ref: (1, C)    CA "excite"  1x1 conv
    o_ref  : (1, H, W, C)
    ypad_ref: (H+2p, W+2p, C) VMEM scratch: zero-padded relu(conv1) output
    """
    _, H, W, C = o_ref.shape
    k = xp_ref.shape[1] - H + 1          # square odd kernel (k = 3 here)
    p = k // 2

    def conv_kxk(tap, w, b):
        # Fold all k*k taps into ONE (H*W, k*k*C) @ (k*k*C, C) MXU matmul.
        # Each tap chunk is exactly C (=128) lanes, so the concat is a clean
        # lane-tile placement and the reshape never crosses the lane dim.
        cols = [tap(dy, dx).reshape(H * W, C)
                for dy in range(k) for dx in range(k)]
        slab = jnp.concatenate(cols, axis=-1)                 # (H*W, k*k*C)
        return jnp.dot(slab, w, preferred_element_type=jnp.float32) + b

    # ---- conv1 + ReLU -----------------------------------------------------
    h1 = conv_kxk(lambda dy, dx: xp_ref[0, dy:dy + H, dx:dx + W, :],
                  w1_ref[...], b1_ref[...])
    h1 = jnp.maximum(h1, 0.0)

    # zero-pad relu(conv1) into VMEM scratch so conv2 sees padding = k//2
    ypad_ref[...] = jnp.zeros_like(ypad_ref)
    ypad_ref[p:p + H, p:p + W, :] = h1.reshape(H, W, C)

    # ---- conv2 (no activation) ---------------------------------------------
    r2 = conv_kxk(lambda dy, dx: ypad_ref[dy:dy + H, dx:dx + W, :],
                  w2_ref[...], b2_ref[...])

    # ---- CALayer: GAP -> 1x1 conv -> ReLU -> 1x1 conv -> sigmoid ------------
    pooled = jnp.sum(r2, axis=0, keepdims=True) * (1.0 / (H * W))    # (1, C)
    z = jnp.dot(pooled, wdn_ref[...],
                preferred_element_type=jnp.float32) + bdn_ref[...]
    z = jnp.maximum(z, 0.0)                                          # (1, Cr)
    logit = jnp.dot(z, wup_ref[...],
                    preferred_element_type=jnp.float32) + bup_ref[...]
    att = 1.0 / (1.0 + jnp.exp(-logit))                              # (1, C)

    # ---- channel attention + residual with the original input --------------
    x_in = xp_ref[0, p:p + H, p:p + W, :].reshape(H * W, C)
    out = r2 * att + x_in
    o_ref[...] = out.reshape(1, H, W, C).astype(o_ref.dtype)


def prepare_rcab_params(w1, b1, w2, b2, w_down, b_down, w_up, b_up):
    """Fold PyTorch-layout weights into the kernel layouts (done once, hoisted
    out of the per-step forward)."""
    C = w1.shape[0]
    k = w1.shape[2]
    Cr = w_down.shape[0]

    def fold(w):  # (O=C, I=C, k, k) -> (k*k*C, C); row index = (dy, dx, c_in)
        return jnp.transpose(w, (2, 3, 1, 0)).reshape(k * k * C, C)

    return dict(
        w1=fold(w1), b1=b1.reshape(1, C),
        w2=fold(w2), b2=b2.reshape(1, C),
        w_down=jnp.transpose(w_down.reshape(Cr, C)),   # (C, Cr)
        b_down=b_down.reshape(1, Cr),
        w_up=jnp.transpose(w_up.reshape(C, Cr)),       # (Cr, C)
        b_up=b_up.reshape(1, C),
    )


def rcab_forward(x_nchw, params):
    """x_nchw: (N, C, H, W) float32. Returns (N, C, H, W)."""
    N, C, H, W = x_nchw.shape
    kkC = params["w1"].shape[0]
    k = int(round((kkC // C) ** 0.5))
    p = k // 2
    Cr = params["w_down"].shape[1]
    Hp, Wp = H + 2 * p, W + 2 * p

    x = jnp.transpose(x_nchw, (0, 2, 3, 1))                    # NHWC
    xp = jnp.pad(x, ((0, 0), (p, p), (p, p), (0, 0)))          # pad once

    out_nhwc = pl.pallas_call(
        _rcab_kernel,
        out_shape=jax.ShapeDtypeStruct((N, H, W, C), x.dtype),
        grid_spec=pltpu.PrefetchScalarGridSpec(
            num_scalar_prefetch=0,
            grid=(N,),
            in_specs=[
                pl.BlockSpec((1, Hp, Wp, C), lambda n: (n, 0, 0, 0)),
                pl.BlockSpec((kkC, C), lambda n: (0, 0)),
                pl.BlockSpec((1, C), lambda n: (0, 0)),
                pl.BlockSpec((kkC, C), lambda n: (0, 0)),
                pl.BlockSpec((1, C), lambda n: (0, 0)),
                pl.BlockSpec((C, Cr), lambda n: (0, 0)),
                pl.BlockSpec((1, Cr), lambda n: (0, 0)),
                pl.BlockSpec((Cr, C), lambda n: (0, 0)),
                pl.BlockSpec((1, C), lambda n: (0, 0)),
            ],
            out_specs=pl.BlockSpec((1, H, W, C), lambda n: (n, 0, 0, 0)),
            scratch_shapes=[pltpu.VMEM((Hp, Wp, C), jnp.float32)],
        ),
        compiler_params=pltpu.CompilerParams(
            dimension_semantics=("parallel",)),
    )(xp, params["w1"], params["b1"], params["w2"], params["b2"],
      params["w_down"], params["b_down"], params["w_up"], params["b_up"])

    return jnp.transpose(out_nhwc, (0, 3, 1, 2))


if __name__ == "__main__":
    # RCAB(default_conv, n_feat=128, kernel_size=3, reduction=16, bias=True)
    N, C, H, W = 2, 128, 16, 16
    reduction, k = 16, 3
    Cr = C // reduction

    key = jax.random.PRNGKey(0)
    ks = jax.random.split(key, 9)
    x = jax.random.normal(ks[0], (N, C, H, W), jnp.float32)
    w1 = 0.05 * jax.random.normal(ks[1], (C, C, k, k), jnp.float32)
    b1 = 0.05 * jax.random.normal(ks[2], (C,), jnp.float32)
    w2 = 0.05 * jax.random.normal(ks[3], (C, C, k, k), jnp.float32)
    b2 = 0.05 * jax.random.normal(ks[4], (C,), jnp.float32)
    w_down = 0.1 * jax.random.normal(ks[5], (Cr, C, 1, 1), jnp.float32)
    b_down = 0.1 * jax.random.normal(ks[6], (Cr,), jnp.float32)
    w_up = 0.1 * jax.random.normal(ks[7], (C, Cr, 1, 1), jnp.float32)
    b_up = 0.1 * jax.random.normal(ks[8], (C,), jnp.float32)

    params = prepare_rcab_params(w1, b1, w2, b2, w_down, b_down, w_up, b_up)
    params = jax.tree_util.tree_map(jax.block_until_ready, params)

    fwd = jax.jit(rcab_forward)
    out = fwd(x, params)
    jax.block_until_ready(out)

    # -------- pure-JAX (XLA) reference, NCHW, for a correctness check --------
    def conv3x3(inp, w, b):
        y = lax.conv_general_dilated(
            inp, w, window_strides=(1, 1), padding=((1, 1), (1, 1)),
            dimension_numbers=("NCHW", "OIHW", "NCHW"))
        return y + b[None, :, None, None]

    y1 = jnp.maximum(conv3x3(x, w1, b1), 0.0)
    y2 = conv3x3(y1, w2, b2)
    pooled = jnp.mean(y2, axis=(2, 3))                                 # (N, C)
    z = jnp.maximum(pooled @ w_down.reshape(Cr, C).T + b_down, 0.0)
    att = jax.nn.sigmoid(z @ w_up.reshape(C, Cr).T + b_up)             # (N, C)
    ref = y2 * att[:, :, None, None] + x

    assert out.shape == (N, C, H, W), out.shape
    assert jnp.allclose(out, ref, atol=1e-3, rtol=1e-3), \
        float(jnp.max(jnp.abs(out - ref)))

    print("KERNEL_OK")
</pallas_src>

<mosaic_0001>
module attributes {stable_mosaic.version = 11 : i64} {
  func.func @_rcab_kernel(%arg0: i32, %arg1: memref<1x18x18x128xf32, #tpu.memory_space<vmem>>, %arg2: memref<1152x128xf32, #tpu.memory_space<vmem>>, %arg3: memref<1x128xf32, #tpu.memory_space<vmem>>, %arg4: memref<1152x128xf32, #tpu.memory_space<vmem>>, %arg5: memref<1x128xf32, #tpu.memory_space<vmem>>, %arg6: memref<128x8xf32, #tpu.memory_space<vmem>>, %arg7: memref<1x8xf32, #tpu.memory_space<vmem>>, %arg8: memref<8x128xf32, #tpu.memory_space<vmem>>, %arg9: memref<1x128xf32, #tpu.memory_space<vmem>>, %arg10: memref<1x16x16x128xf32, #tpu.memory_space<vmem>>, %arg11: memref<18x18x128xf32, #tpu.memory_space<vmem>>) attributes {dimension_semantics = [#tpu.dimension_semantics<parallel>], iteration_bounds = array<i64: 2>, scalar_prefetch = 0 : i64, scratch_operands = 1 : i64, tpu.core_type = #tpu.core_type<tc>, window_params = [{transform_indices = @transform_0, window_bounds = array<i64: 1, 18, 18, 128>}, {pipeline_mode = #tpu.pipeline_mode<synchronous>, transform_indices = @transform_1, window_bounds = array<i64: 1152, 128>}, {pipeline_mode = #tpu.pipeline_mode<synchronous>, transform_indices = @transform_2, window_bounds = array<i64: 1, 128>}, {pipeline_mode = #tpu.pipeline_mode<synchronous>, transform_indices = @transform_3, window_bounds = array<i64: 1152, 128>}, {pipeline_mode = #tpu.pipeline_mode<synchronous>, transform_indices = @transform_4, window_bounds = array<i64: 1, 128>}, {pipeline_mode = #tpu.pipeline_mode<synchronous>, transform_indices = @transform_5, window_bounds = array<i64: 128, 8>}, {pipeline_mode = #tpu.pipeline_mode<synchronous>, transform_indices = @transform_6, window_bounds = array<i64: 1, 8>}, {pipeline_mode = #tpu.pipeline_mode<synchronous>, transform_indices = @transform_7, window_bounds = array<i64: 8, 128>}, {pipeline_mode = #tpu.pipeline_mode<synchronous>, transform_indices = @transform_8, window_bounds = array<i64: 1, 128>}, {transform_indices = @transform_9, window_bounds = array<i64: 1, 16, 16, 128>}]} {
    %c0 = arith.constant 0 : index
    %c0_0 = arith.constant 0 : index
    %0 = vector.load %arg2[%c0, %c0_0] : memref<1152x128xf32, #tpu.memory_space<vmem>>, vector<1152x128xf32>
    %c0_1 = arith.constant 0 : index
    %c0_2 = arith.constant 0 : index
    %1 = vector.load %arg3[%c0_1, %c0_2] : memref<1x128xf32, #tpu.memory_space<vmem>>, vector<1x128xf32>
    %c0_3 = arith.constant 0 : index
    %c0_4 = arith.constant 0 : index
    %c0_5 = arith.constant 0 : index
    %c0_6 = arith.constant 0 : index
    %2 = vector.load %arg1[%c0_3, %c0_4, %c0_5, %c0_6] : memref<1x18x18x128xf32, #tpu.memory_space<vmem>>, vector<1x16x16x128xf32>
    %3 = vector.shape_cast %2 : vector<1x16x16x128xf32> to vector<16x16x128xf32>
    %4 = vector.shape_cast %3 : vector<16x16x128xf32> to vector<256x128xf32>
    %c0_7 = arith.constant 0 : index
    %c0_8 = arith.constant 0 : index
    %c1 = arith.constant 1 : index
    %c0_9 = arith.constant 0 : index
    %5 = vector.load %arg1[%c0_7, %c0_8, %c1, %c0_9] : memref<1x18x18x128xf32, #tpu.memory_space<vmem>>, vector<1x16x16x128xf32>
    %6 = vector.shape_cast %5 : vector<1x16x16x128xf32> to vector<16x16x128xf32>
    %7 = vector.shape_cast %6 : vector<16x16x128xf32> to vector<256x128xf32>
    %c0_10 = arith.constant 0 : index
    %c0_11 = arith.constant 0 : index
    %c2 = arith.constant 2 : index
    %c0_12 = arith.constant 0 : index
    %8 = vector.load %arg1[%c0_10, %c0_11, %c2, %c0_12] : memref<1x18x18x128xf32, #tpu.memory_space<vmem>>, vector<1x16x16x128xf32>
    %9 = vector.shape_cast %8 : vector<1x16x16x128xf32> to vector<16x16x128xf32>
    %10 = vector.shape_cast %9 : vector<16x16x128xf32> to vector<256x128xf32>
    %c0_13 = arith.constant 0 : index
    %c1_14 = arith.constant 1 : index
    %c0_15 = arith.constant 0 : index
    %c0_16 = arith.constant 0 : index
    %11 = vector.load %arg1[%c0_13, %c1_14, %c0_15, %c0_16] : memref<1x18x18x128xf32, #tpu.memory_space<vmem>>, vector<1x16x16x128xf32>
    %12 = vector.shape_cast %11 : vector<1x16x16x128xf32> to vector<16x16x128xf32>
    %13 = vector.shape_cast %12 : vector<16x16x128xf32> to vector<256x128xf32>
    %c0_17 = arith.constant 0 : index
    %c1_18 = arith.constant 1 : index
    %c1_19 = arith.constant 1 : index
    %c0_20 = arith.constant 0 : index
    %14 = vector.load %arg1[%c0_17, %c1_18, %c1_19, %c0_20] : memref<1x18x18x128xf32, #tpu.memory_space<vmem>>, vector<1x16x16x128xf32>
    %15 = vector.shape_cast %14 : vector<1x16x16x128xf32> to vector<16x16x128xf32>
    %16 = vector.shape_cast %15 : vector<16x16x128xf32> to vector<256x128xf32>
    %c0_21 = arith.constant 0 : index
    %c1_22 = arith.constant 1 : index
    %c2_23 = arith.constant 2 : index
    %c0_24 = arith.constant 0 : index
    %17 = vector.load %arg1[%c0_21, %c1_22, %c2_23, %c0_24] : memref<1x18x18x128xf32, #tpu.memory_space<vmem>>, vector<1x16x16x128xf32>
    %18 = vector.shape_cast %17 : vector<1x16x16x128xf32> to vector<16x16x128xf32>
    %19 = vector.shape_cast %18 : vector<16x16x128xf32> to vector<256x128xf32>
    %c0_25 = arith.constant 0 : index
    %c2_26 = arith.constant 2 : index
    %c0_27 = arith.constant 0 : index
    %c0_28 = arith.constant 0 : index
    %20 = vector.load %arg1[%c0_25, %c2_26, %c0_27, %c0_28] : memref<1x18x18x128xf32, #tpu.memory_space<vmem>>, vector<1x16x16x128xf32>
    %21 = vector.shape_cast %20 : vector<1x16x16x128xf32> to vector<16x16x128xf32>
    %22 = vector.shape_cast %21 : vector<16x16x128xf32> to vector<256x128xf32>
    %c0_29 = arith.constant 0 : index
    %c2_30 = arith.constant 2 : index
    %c1_31 = arith.constant 1 : index
    %c0_32 = arith.constant 0 : index
    %23 = vector.load %arg1[%c0_29, %c2_30, %c1_31, %c0_32] : memref<1x18x18x128xf32, #tpu.memory_space<vmem>>, vector<1x16x16x128xf32>
    %24 = vector.shape_cast %23 : vector<1x16x16x128xf32> to vector<16x16x128xf32>
    %25 = vector.shape_cast %24 : vector<16x16x128xf32> to vector<256x128xf32>
    %c0_33 = arith.constant 0 : index
    %c2_34 = arith.constant 2 : index
    %c2_35 = arith.constant 2 : index
    %c0_36 = arith.constant 0 : index
    %26 = vector.load %arg1[%c0_33, %c2_34, %c2_35, %c0_36] : memref<1x18x18x128xf32, #tpu.memory_space<vmem>>, vector<1x16x16x128xf32>
    %27 = vector.shape_cast %26 : vector<1x16x16x128xf32> to vector<16x16x128xf32>
    %28 = vector.shape_cast %27 : vector<16x16x128xf32> to vector<256x128xf32>
    %29 = tpu.concatenate %4, %7, %10, %13, %16, %19, %22, %25, %28 in 1 : vector<256x128xf32>, vector<256x128xf32>, vector<256x128xf32>, vector<256x128xf32>, vector<256x128xf32>, vector<256x128xf32>, vector<256x128xf32>, vector<256x128xf32>, vector<256x128xf32> -> vector<256x1152xf32>
    %cst = arith.constant dense<0.000000e+00> : vector<256x128xf32>
    %30 = tpu.matmul %29, %0, %cst {dimension_numbers = #tpu.dot_dimension_numbers<[1], [0], [0], [1], [0, 0, 1, 1], [], []>} : vector<256x1152xf32>, vector<1152x128xf32>, vector<256x128xf32> -> vector<256x128xf32>
    %31 = vector.broadcast %1 : vector<1x128xf32> to vector<256x128xf32>
    %32 = arith.addf %30, %31 : vector<256x128xf32>
    %cst_37 = arith.constant 0.000000e+00 : f32
    %33 = vector.broadcast %cst_37 : f32 to vector<256x128xf32>
    %34 = arith.maximumf %32, %33 : vector<256x128xf32>
    %cst_38 = arith.constant 0.000000e+00 : f32
    %35 = vector.broadcast %cst_38 : f32 to vector<18x18x128xf32>
    %c0_39 = arith.constant 0 : index
    %c0_40 = arith.constant 0 : index
    %c0_41 = arith.constant 0 : index
    %36 = vector.load %arg11[%c0_39, %c0_40, %c0_41] : memref<18x18x128xf32, #tpu.memory_space<vmem>>, vector<18x18x128xf32>
    tpu.vector_store %arg11[%c0_39, %c0_40, %c0_41], %35 {strides = array<i32>} : memref<18x18x128xf32, #tpu.memory_space<vmem>>, vector<18x18x128xf32>,
    %37 = vector.shape_cast %34 : vector<256x128xf32> to vector<16x16x128xf32>
    %c1_42 = arith.constant 1 : index
    %c1_43 = arith.constant 1 : index
    %c0_44 = arith.constant 0 : index
    %38 = vector.load %arg11[%c1_42, %c1_43, %c0_44] : memref<18x18x128xf32, #tpu.memory_space<vmem>>, vector<16x16x128xf32>
    tpu.vector_store %arg11[%c1_42, %c1_43, %c0_44], %37 {strides = array<i32>} : memref<18x18x128xf32, #tpu.memory_space<vmem>>, vector<16x16x128xf32>,
    %c0_45 = arith.constant 0 : index
    %c0_46 = arith.constant 0 : index
    %39 = vector.load %arg4[%c0_45, %c0_46] : memref<1152x128xf32, #tpu.memory_space<vmem>>, vector<1152x128xf32>
    %c0_47 = arith.constant 0 : index
    %c0_48 = arith.constant 0 : index
    %40 = vector.load %arg5[%c0_47, %c0_48] : memref<1x128xf32, #tpu.memory_space<vmem>>, vector<1x128xf32>
    %c0_49 = arith.constant 0 : index
    %c0_50 = arith.constant 0 : index
    %c0_51 = arith.constant 0 : index
    %41 = vector.load %arg11[%c0_49, %c0_50, %c0_51] : memref<18x18x128xf32, #tpu.memory_space<vmem>>, vector<16x16x128xf32>
    %42 = vector.shape_cast %41 : vector<16x16x128xf32> to vector<256x128xf32>
    %c0_52 = arith.constant 0 : index
    %c1_53 = arith.constant 1 : index
    %c0_54 = arith.constant 0 : index
    %43 = vector.load %arg11[%c0_52, %c1_53, %c0_54] : memref<18x18x128xf32, #tpu.memory_space<vmem>>, vector<16x16x128xf32>
    %44 = vector.shape_cast %43 : vector<16x16x128xf32> to vector<256x128xf32>
    %c0_55 = arith.constant 0 : index
    %c2_56 = arith.constant 2 : index
    %c0_57 = arith.constant 0 : index
    %45 = vector.load %arg11[%c0_55, %c2_56, %c0_57] : memref<18x18x128xf32, #tpu.memory_space<vmem>>, vector<16x16x128xf32>
    %46 = vector.shape_cast %45 : vector<16x16x128xf32> to vector<256x128xf32>
    %c1_58 = arith.constant 1 : index
    %c0_59 = arith.constant 0 : index
    %c0_60 = arith.constant 0 : index
    %47 = vector.load %arg11[%c1_58, %c0_59, %c0_60] : memref<18x18x128xf32, #tpu.memory_space<vmem>>, vector<16x16x128xf32>
    %48 = vector.shape_cast %47 : vector<16x16x128xf32> to vector<256x128xf32>
    %c1_61 = arith.constant 1 : index
    %c1_62 = arith.constant 1 : index
    %c0_63 = arith.constant 0 : index
    %49 = vector.load %arg11[%c1_61, %c1_62, %c0_63] : memref<18x18x128xf32, #tpu.memory_space<vmem>>, vector<16x16x128xf32>
    %50 = vector.shape_cast %49 : vector<16x16x128xf32> to vector<256x128xf32>
    %c1_64 = arith.constant 1 : index
    %c2_65 = arith.constant 2 : index
    %c0_66 = arith.constant 0 : index
    %51 = vector.load %arg11[%c1_64, %c2_65, %c0_66] : memref<18x18x128xf32, #tpu.memory_space<vmem>>, vector<16x16x128xf32>
    %52 = vector.shape_cast %51 : vector<16x16x128xf32> to vector<256x128xf32>
    %c2_67 = arith.constant 2 : index
    %c0_68 = arith.constant 0 : index
    %c0_69 = arith.constant 0 : index
    %53 = vector.load %arg11[%c2_67, %c0_68, %c0_69] : memref<18x18x128xf32, #tpu.memory_space<vmem>>, vector<16x16x128xf32>
    %54 = vector.shape_cast %53 : vector<16x16x128xf32> to vector<256x128xf32>
    %c2_70 = arith.constant 2 : index
    %c1_71 = arith.constant 1 : index
    %c0_72 = arith.constant 0 : index
    %55 = vector.load %arg11[%c2_70, %c1_71, %c0_72] : memref<18x18x128xf32, #tpu.memory_space<vmem>>, vector<16x16x128xf32>
    %56 = vector.shape_cast %55 : vector<16x16x128xf32> to vector<256x128xf32>
    %c2_73 = arith.constant 2 : index
    %c2_74 = arith.constant 2 : index
    %c0_75 = arith.constant 0 : index
    %57 = vector.load %arg11[%c2_73, %c2_74, %c0_75] : memref<18x18x128xf32, #tpu.memory_space<vmem>>, vector<16x16x128xf32>
    %58 = vector.shape_cast %57 : vector<16x16x128xf32> to vector<256x128xf32>
    %59 = tpu.concatenate %42, %44, %46, %48, %50, %52, %54, %56, %58 in 1 : vector<256x128xf32>, vector<256x128xf32>, vector<256x128xf32>, vector<256x128xf32>, vector<256x128xf32>, vector<256x128xf32>, vector<256x128xf32>, vector<256x128xf32>, vector<256x128xf32> -> vector<256x1152xf32>
    %cst_76 = arith.constant dense<0.000000e+00> : vector<256x128xf32>
    %60 = tpu.matmul %59, %39, %cst_76 {dimension_numbers = #tpu.dot_dimension_numbers<[1], [0], [0], [1], [0, 0, 1, 1], [], []>} : vector<256x1152xf32>, vector<1152x128xf32>, vector<256x128xf32> -> vector<256x128xf32>
    %61 = vector.broadcast %40 : vector<1x128xf32> to vector<256x128xf32>
    %62 = arith.addf %60, %61 : vector<256x128xf32>
    %cst_77 = arith.constant dense<0.000000e+00> : vector<128xf32>
    %63 = vector.multi_reduction <add>, %62, %cst_77 [0] : vector<256x128xf32> to vector<128xf32>
    %64 = vector.shape_cast %63 : vector<128xf32> to vector<1x128xf32>
    %cst_78 = arith.constant 3.906250e-03 : f32
    %65 = vector.broadcast %cst_78 : f32 to vector<1x128xf32>
    %66 = arith.mulf %64, %65 : vector<1x128xf32>
    %c0_79 = arith.constant 0 : index
    %c0_80 = arith.constant 0 : index
    %67 = vector.load %arg6[%c0_79, %c0_80] : memref<128x8xf32, #tpu.memory_space<vmem>>, vector<128x8xf32>
    %cst_81 = arith.constant dense<0.000000e+00> : vector<1x8xf32>
    %68 = tpu.matmul %66, %67, %cst_81 {dimension_numbers = #tpu.dot_dimension_numbers<[1], [0], [0], [1], [0, 0, 1, 1], [], []>} : vector<1x128xf32>, vector<128x8xf32>, vector<1x8xf32> -> vector<1x8xf32>
    %c0_82 = arith.constant 0 : index
    %c0_83 = arith.constant 0 : index
    %69 = vector.load %arg7[%c0_82, %c0_83] : memref<1x8xf32, #tpu.memory_space<vmem>>, vector<1x8xf32>
    %70 = arith.addf %68, %69 : vector<1x8xf32>
    %cst_84 = arith.constant 0.000000e+00 : f32
    %71 = vector.broadcast %cst_84 : f32 to vector<1x8xf32>
    %72 = arith.maximumf %70, %71 : vector<1x8xf32>
    %c0_85 = arith.constant 0 : index
    %c0_86 = arith.constant 0 : index
    %73 = vector.load %arg8[%c0_85, %c0_86] : memref<8x128xf32, #tpu.memory_space<vmem>>, vector<8x128xf32>
    %cst_87 = arith.constant dense<0.000000e+00> : vector<1x128xf32>
    %74 = tpu.matmul %72, %73, %cst_87 {dimension_numbers = #tpu.dot_dimension_numbers<[1], [0], [0], [1], [0, 0, 1, 1], [], []>} : vector<1x8xf32>, vector<8x128xf32>, vector<1x128xf32> -> vector<1x128xf32>
    %c0_88 = arith.constant 0 : index
    %c0_89 = arith.constant 0 : index
    %75 = vector.load %arg9[%c0_88, %c0_89] : memref<1x128xf32, #tpu.memory_space<vmem>>, vector<1x128xf32>
    %76 = arith.addf %74, %75 : vector<1x128xf32>
    %cst_90 = arith.constant 0.000000e+00 : f32
    %77 = vector.broadcast %cst_90 : f32 to vector<1x128xf32>
    %78 = arith.subf %77, %76 : vector<1x128xf32>
    %79 = math.exp %78 : vector<1x128xf32>
    %cst_91 = arith.constant 1.000000e+00 : f32
    %80 = vector.broadcast %cst_91 : f32 to vector<1x128xf32>
    %81 = arith.addf %80, %79 : vector<1x128xf32>
    %cst_92 = arith.constant 1.000000e+00 : f32
    %82 = vector.broadcast %cst_92 : f32 to vector<1x128xf32>
    %83 = arith.divf %82, %81 : vector<1x128xf32>
    %c0_93 = arith.constant 0 : index
    %c1_94 = arith.constant 1 : index
    %c1_95 = arith.constant 1 : index
    %c0_96 = arith.constant 0 : index
    %84 = vector.load %arg1[%c0_93, %c1_94, %c1_95, %c0_96] : memref<1x18x18x128xf32, #tpu.memory_space<vmem>>, vector<1x16x16x128xf32>
    %85 = vector.shape_cast %84 : vector<1x16x16x128xf32> to vector<16x16x128xf32>
    %86 = vector.shape_cast %85 : vector<16x16x128xf32> to vector<256x128xf32>
    %87 = vector.broadcast %83 : vector<1x128xf32> to vector<256x128xf32>
    %88 = arith.mulf %62, %87 : vector<256x128xf32>
    %89 = arith.addf %88, %86 : vector<256x128xf32>
    %90 = vector.shape_cast %89 : vector<256x128xf32> to vector<1x16x16x128xf32>
    %c0_97 = arith.constant 0 : index
    %c0_98 = arith.constant 0 : index
    %c0_99 = arith.constant 0 : index
    %c0_100 = arith.constant 0 : index
    %91 = vector.load %arg10[%c0_97, %c0_98, %c0_99, %c0_100] : memref<1x16x16x128xf32, #tpu.memory_space<vmem>>, vector<1x16x16x128xf32>
    tpu.vector_store %arg10[%c0_97, %c0_98, %c0_99, %c0_100], %90 {strides = array<i32>} : memref<1x16x16x128xf32, #tpu.memory_space<vmem>>, vector<1x16x16x128xf32>,
    return
  }
  func.func @transform_0(%arg0: i32) -> (i32, i32, i32, i32) {
    %c0_i32 = arith.constant 0 : i32
    %c0_i32_0 = arith.constant 0 : i32
    %c0_i32_1 = arith.constant 0 : i32
    %c0_i32_2 = arith.constant 0 : i32
    return %arg0, %c0_i32, %c0_i32_0, %c0_i32_1 : i32, i32, i32, i32
  }
  func.func @transform_1(%arg0: i32) -> (i32, i32) {
    %c0_i32 = arith.constant 0 : i32
    %c0_i32_0 = arith.constant 0 : i32
    %c0_i32_1 = arith.constant 0 : i32
    return %c0_i32, %c0_i32_0 : i32, i32
  }
  func.func @transform_2(%arg0: i32) -> (i32, i32) {
    %c0_i32 = arith.constant 0 : i32
    %c0_i32_0 = arith.constant 0 : i32
    %c0_i32_1 = arith.constant 0 : i32
    return %c0_i32, %c0_i32_0 : i32, i32
  }
  func.func @transform_3(%arg0: i32) -> (i32, i32) {
    %c0_i32 = arith.constant 0 : i32
    %c0_i32_0 = arith.constant 0 : i32
    %c0_i32_1 = arith.constant 0 : i32
    return %c0_i32, %c0_i32_0 : i32, i32
  }
  func.func @transform_4(%arg0: i32) -> (i32, i32) {
    %c0_i32 = arith.constant 0 : i32
    %c0_i32_0 = arith.constant 0 : i32
    %c0_i32_1 = arith.constant 0 : i32
    return %c0_i32, %c0_i32_0 : i32, i32
  }
  func.func @transform_5(%arg0: i32) -> (i32, i32) {
    %c0_i32 = arith.constant 0 : i32
    %c0_i32_0 = arith.constant 0 : i32
    %c0_i32_1 = arith.constant 0 : i32
    return %c0_i32, %c0_i32_0 : i32, i32
  }
  func.func @transform_6(%arg0: i32) -> (i32, i32) {
    %c0_i32 = arith.constant 0 : i32
    %c0_i32_0 = arith.constant 0 : i32
    %c0_i32_1 = arith.constant 0 : i32
    return %c0_i32, %c0_i32_0 : i32, i32
  }
  func.func @transform_7(%arg0: i32) -> (i32, i32) {
    %c0_i32 = arith.constant 0 : i32
    %c0_i32_0 = arith.constant 0 : i32
    %c0_i32_1 = arith.constant 0 : i32
    return %c0_i32, %c0_i32_0 : i32, i32
  }
  func.func @transform_8(%arg0: i32) -> (i32, i32) {
    %c0_i32 = arith.constant 0 : i32
    %c0_i32_0 = arith.constant 0 : i32
    %c0_i32_1 = arith.constant 0 : i32
    return %c0_i32, %c0_i32_0 : i32, i32
  }
  func.func @transform_9(%arg0: i32) -> (i32, i32, i32, i32) {
    %c0_i32 = arith.constant 0 : i32
    %c0_i32_0 = arith.constant 0 : i32
    %c0_i32_1 = arith.constant 0 : i32
    %c0_i32_2 = arith.constant 0 : i32
    return %arg0, %c0_i32, %c0_i32_0, %c0_i32_1 : i32, i32, i32, i32
  }
}

</mosaic_0001>

<llo_original>
// kernel: rcab_forward.1
$region0: #{rcab_forward.1}
  #allocation0 [shape = 'u32[]', space=smem, size = 0x4, offset = 0x4, fixed_abs, tag = 'smem constant byte address 0x4 - core index']
  #allocation1 [shape = 'u32[144,128]{1,0:T(1,128)}', space=vmem, size = 0x12000, scoped, tag = 'internal scratch']
  #allocation2 [shape = 'f32[18,18,128]{2,1,0:T(8,128)}', space=vmem, size = 0x36000, scoped, tag = 'scratch operand']
  %s0 = inlined_call_operand.vmem [shape: f32[2,18,18,128], index: 0, kind: input, shape index: {}]
  %s1 = inlined_call_operand.vmem [shape: f32[1152,128], index: 1, kind: input, shape index: {}]
  %s2 = inlined_call_operand.vmem [shape: f32[1,128], index: 2, kind: input, shape index: {}]
  %s3 = inlined_call_operand.hbm [shape: f32[1152,128], index: 3, kind: input, shape index: {}]
  %s4 = inlined_call_operand.vmem [shape: f32[1,128], index: 4, kind: input, shape index: {}]
  %s5 = inlined_call_operand.vmem [shape: f32[128,8], index: 5, kind: input, shape index: {}]
  %s6 = inlined_call_operand.vmem [shape: f32[1,8], index: 6, kind: input, shape index: {}]
  %s7 = inlined_call_operand.vmem [shape: f32[8,128], index: 7, kind: input, shape index: {}]
  %s8 = inlined_call_operand.vmem [shape: f32[1,128], index: 8, kind: input, shape index: {}]
  %s9 = inlined_call_operand.hbm [shape: f32[2,16,16,128], index: 9, kind: output, shape index: {}]
  %s10 = sld [smem:[#allocation0]]
  $region73: #{rcab_forward.1} parent=0
    _
  %s12 = ssub.s32 1, %s10
  %s13 = scalar_select 0, %s12, %s10
  $region1: #{rcab_forward.1} parent=0
    #allocation3 [shape = 'u8[589824]{0}', space=vmem, size = 0x90000, scoped, tag = 'input window, operand 3, single buffered']
    #allocation4 [shape = 's32[2]{0}', space=sflag, size = 0x8, scoped, tag = 'scoped memory for rcab_forward.1']
    #allocation5 [shape = 's32[2]{0}', space=sflag, size = 0x8, scoped, tag = 'scoped memory for rcab_forward.1']
    #allocation6 [shape = 'u8[262144]{0}', space=vmem, size = 0x40000, scoped, tag = 'output window, operand 0']
    %14 = vsyncpa [#allocation4], 0
    %15 = vsyncpa [#allocation5], 0
    %s16 = scalar_lea.sflag [#allocation5], 1
    %17 = vsyncpa %s16, 0
    loop: start=0, step=1, limit=4
    $region2: #{rcab_forward.1} parent=1 // loop_pre_header
      _
    $region3: #{rcab_forward.1} parent=1 // loop_header
      %s19 = sphi 0, %s23
      %p20 = scmp.ge.s32.totalorder %s19, 4
      %s29 = sphi 0, %s31
      %s32 = sphi 0, %s29
      %s33 = sphi 0, %s32
      %s49 = sphi 0, %s33
      %s53 = sphi 0, %s53
      %s55 = sphi 0, %s53
      %s56 = sphi 0, %s55
      %s70 = sphi 0, %s56
      %s74 = sphi 0, %s74
      %s76 = sphi 0, %s74
      %s77 = sphi 0, %s76
      %s91 = sphi 0, %s77
      %s95 = sphi 0, %s95
      %s97 = sphi 0, %s95
      %s98 = sphi 0, %s97
      %s112 = sphi 0, %s98
      %s116 = sphi 0, %s116
      %s118 = sphi 0, %s116
      %s119 = sphi 0, %s118
      %s133 = sphi 0, %s119
      %s137 = sphi 0, %s137
      %s139 = sphi 0, %s137
      %s140 = sphi 0, %s139
      %s154 = sphi 0, %s140
      %s158 = sphi 0, %s158
      %s160 = sphi 0, %s158
      %s161 = sphi 0, %s160
      %s175 = sphi 0, %s161
      %s179 = sphi 0, %s179
      %s181 = sphi 0, %s179
      %s182 = sphi 0, %s181
      %s196 = sphi 0, %s182
      %s200 = sphi 0, %s200
      %s202 = sphi 0, %s200
      %s203 = sphi 0, %s202
      %s217 = sphi 0, %s203
      %s223 = sphi 0, %s225
      %s226 = sphi 0, %s223
      %s227 = sphi 0, %s226
      %s243 = sphi 0, %s227
    $region4: #{rcab_forward.1} parent=1 // loop_header_branch
      %22 = sbr.rel (%p20) target = $region8
    $region5: #{rcab_forward.1} parent=1 // loop_body
      %s24 = ssub.s32 %s19, 1
      %s25 = ssub.s32 %s19, 2
      %s26 = sadd.s32 %s19, 1
      %s27 = ssub.s32 %s19, %s26
      %p28 = scmp.eq.s32.totalorder %s27, 0
      %s30 = sadd.s32 %s29, 1
      %s31 = scalar_select %p28, %s29, %s30
      %p34 = pneg %p28
      %p35 = scmp.eq.s32.totalorder %s19, 1
      %p36 = por %p34, %p35
      %p37 = scmp.ne.s32.totalorder %s29, %s32
      %p38 = scmp.eq.s32.totalorder %s19, 0
      %p39 = por %p37, %p38
      %p40 = scmp.ne.s32.totalorder %s29, %s32
      %p41 = scmp.eq.s32.totalorder %s24, 1
      %p42 = por %p40, %p41
      %p43 = scmp.ne.s32.totalorder %s32, %s33
      %p44 = scmp.eq.s32.totalorder %s24, 0
      %p45 = por %p43, %p44
      %p46 = scmp.ne.s32.totalorder %s32, %s33
      %p47 = scmp.eq.s32.totalorder %s25, 1
      %p48 = por %p46, %p47
      %p50 = scmp.ne.s32.totalorder %s33, %s49
      %p51 = scmp.eq.s32.totalorder %s25, 0
      %p52 = por %p50, %p51
      %s54 = sadd.s32 %s53, 1
      %p57 = scmp.eq.s32.totalorder %s19, 1
      %p58 = scmp.ne.s32.totalorder %s53, %s55
      %p59 = scmp.eq.s32.totalorder %s19, 0
      %p60 = por %p58, %p59
      %p61 = scmp.ne.s32.totalorder %s53, %s55
      %p62 = scmp.eq.s32.totalorder %s24, 1
      %p63 = por %p61, %p62
      %p64 = scmp.ne.s32.totalorder %s55, %s56
      %p65 = scmp.eq.s32.totalorder %s24, 0
      %p66 = por %p64, %p65
      %p67 = scmp.ne.s32.totalorder %s55, %s56
      %p68 = scmp.eq.s32.totalorder %s25, 1
      %p69 = por %p67, %p68
      %p71 = scmp.ne.s32.totalorder %s56, %s70
      %p72 = scmp.eq.s32.totalorder %s25, 0
      %p73 = por %p71, %p72
      %s75 = sadd.s32 %s74, 1
      %p78 = scmp.eq.s32.totalorder %s19, 1
      %p79 = scmp.ne.s32.totalorder %s74, %s76
      %p80 = scmp.eq.s32.totalorder %s19, 0
      %p81 = por %p79, %p80
      %p82 = scmp.ne.s32.totalorder %s74, %s76
      %p83 = scmp.eq.s32.totalorder %s24, 1
      %p84 = por %p82, %p83
      %p85 = scmp.ne.s32.totalorder %s76, %s77
      %p86 = scmp.eq.s32.totalorder %s24, 0
      %p87 = por %p85, %p86
      %p88 = scmp.ne.s32.totalorder %s76, %s77
      %p89 = scmp.eq.s32.totalorder %s25, 1
      %p90 = por %p88, %p89
      %p92 = scmp.ne.s32.totalorder %s77, %s91
      %p93 = scmp.eq.s32.totalorder %s25, 0
      %p94 = por %p92, %p93
      %s96 = sadd.s32 %s95, 1
      %p99 = scmp.eq.s32.totalorder %s19, 1
      %p100 = scmp.ne.s32.totalorder %s95, %s97
      %p101 = scmp.eq.s32.totalorder %s19, 0
      %p102 = por %p100, %p101
      %p103 = scmp.ne.s32.totalorder %s95, %s97
      %p104 = scmp.eq.s32.totalorder %s24, 1
      %p105 = por %p103, %p104
      %p106 = scmp.ne.s32.totalorder %s97, %s98
      %p107 = scmp.eq.s32.totalorder %s24, 0
      %p108 = por %p106, %p107
      %p109 = scmp.ne.s32.totalorder %s97, %s98
      %p110 = scmp.eq.s32.totalorder %s25, 1
      %p111 = por %p109, %p110
      %p113 = scmp.ne.s32.totalorder %s98, %s112
      %p114 = scmp.eq.s32.totalorder %s25, 0
      %p115 = por %p113, %p114
      %s117 = sadd.s32 %s116, 1
      %p120 = scmp.eq.s32.totalorder %s19, 1
      %p121 = scmp.ne.s32.totalorder %s116, %s118
      %p122 = scmp.eq.s32.totalorder %s19, 0
      %p123 = por %p121, %p122
      %p124 = scmp.ne.s32.totalorder %s116, %s118
      %p125 = scmp.eq.s32.totalorder %s24, 1
      %p126 = por %p124, %p125
      %p127 = scmp.ne.s32.totalorder %s118, %s119
      %p128 = scmp.eq.s32.totalorder %s24, 0
      %p129 = por %p127, %p128
      %p130 = scmp.ne.s32.totalorder %s118, %s119
      %p131 = scmp.eq.s32.totalorder %s25, 1
      %p132 = por %p130, %p131
      %p134 = scmp.ne.s32.totalorder %s119, %s133
      %p135 = scmp.eq.s32.totalorder %s25, 0
      %p136 = por %p134, %p135
      %s138 = sadd.s32 %s137, 1
      %p141 = scmp.eq.s32.totalorder %s19, 1
      %p142 = scmp.ne.s32.totalorder %s137, %s139
      %p143 = scmp.eq.s32.totalorder %s19, 0
      %p144 = por %p142, %p143
      %p145 = scmp.ne.s32.totalorder %s137, %s139
      %p146 = scmp.eq.s32.totalorder %s24, 1
      %p147 = por %p145, %p146
      %p148 = scmp.ne.s32.totalorder %s139, %s140
      %p149 = scmp.eq.s32.totalorder %s24, 0
      %p150 = por %p148, %p149
      %p151 = scmp.ne.s32.totalorder %s139, %s140
      %p152 = scmp.eq.s32.totalorder %s25, 1
      %p153 = por %p151, %p152
      %p155 = scmp.ne.s32.totalorder %s140, %s154
      %p156 = scmp.eq.s32.totalorder %s25, 0
      %p157 = por %p155, %p156
      %s159 = sadd.s32 %s158, 1
      %p162 = scmp.eq.s32.totalorder %s19, 1
      %p163 = scmp.ne.s32.totalorder %s158, %s160
      %p164 = scmp.eq.s32.totalorder %s19, 0
      %p165 = por %p163, %p164
      %p166 = scmp.ne.s32.totalorder %s158, %s160
      %p167 = scmp.eq.s32.totalorder %s24, 1
      %p168 = por %p166, %p167
      %p169 = scmp.ne.s32.totalorder %s160, %s161
      %p170 = scmp.eq.s32.totalorder %s24, 0
      %p171 = por %p169, %p170
      %p172 = scmp.ne.s32.totalorder %s160, %s161
      %p173 = scmp.eq.s32.totalorder %s25, 1
      %p174 = por %p172, %p173
      %p176 = scmp.ne.s32.totalorder %s161, %s175
      %p177 = scmp.eq.s32.totalorder %s25, 0
      %p178 = por %p176, %p177
      %s180 = sadd.s32 %s179, 1
      %p183 = scmp.eq.s32.totalorder %s19, 1
      %p184 = scmp.ne.s32.totalorder %s179, %s181
      %p185 = scmp.eq.s32.totalorder %s19, 0
      %p186 = por %p184, %p185
      %p187 = scmp.ne.s32.totalorder %s179, %s181
      %p188 = scmp.eq.s32.totalorder %s24, 1
      %p189 = por %p187, %p188
      %p190 = scmp.ne.s32.totalorder %s181, %s182
      %p191 = scmp.eq.s32.totalorder %s24, 0
      %p192 = por %p190, %p191
      %p193 = scmp.ne.s32.totalorder %s181, %s182
      %p194 = scmp.eq.s32.totalorder %s25, 1
      %p195 = por %p193, %p194
      %p197 = scmp.ne.s32.totalorder %s182, %s196
      %p198 = scmp.eq.s32.totalorder %s25, 0
      %p199 = por %p197, %p198
      %s201 = sadd.s32 %s200, 1
      %p204 = scmp.eq.s32.totalorder %s19, 1
      %p205 = scmp.ne.s32.totalorder %s200, %s202
      %p206 = scmp.eq.s32.totalorder %s19, 0
      %p207 = por %p205, %p206
      %p208 = scmp.ne.s32.totalorder %s200, %s202
      %p209 = scmp.eq.s32.totalorder %s24, 1
      %p210 = por %p208, %p209
      %p211 = scmp.ne.s32.totalorder %s202, %s203
      %p212 = scmp.eq.s32.totalorder %s24, 0
      %p213 = por %p211, %p212
      %p214 = scmp.ne.s32.totalorder %s202, %s203
      %p215 = scmp.eq.s32.totalorder %s25, 1
      %p216 = por %p214, %p215
      %p218 = scmp.ne.s32.totalorder %s203, %s217
      %p219 = scmp.eq.s32.totalorder %s25, 0
      %p220 = por %p218, %p219
      %s221 = ssub.s32 %s19, %s26
      %p222 = scmp.eq.s32.totalorder %s221, 0
      %s224 = sadd.s32 %s223, 1
      %s225 = scalar_select %p222, %s223, %s224
      %p228 = pneg %p222
      %p229 = scmp.eq.s32.totalorder %s19, 1
      %p230 = por %p228, %p229
      %p231 = scmp.ne.s32.totalorder %s223, %s226
      %p232 = scmp.eq.s32.totalorder %s19, 0
      %p233 = por %p231, %p232
      %p234 = scmp.ne.s32.totalorder %s223, %s226
      %p235 = scmp.eq.s32.totalorder %s24, 1
      %p236 = por %p234, %p235
      %p237 = scmp.ne.s32.totalorder %s226, %s227
      %p238 = scmp.eq.s32.totalorder %s24, 0
      %p239 = por %p237, %p238
      %p240 = scmp.ne.s32.totalorder %s226, %s227
      %p241 = scmp.eq.s32.totalorder %s25, 1
      %p242 = por %p240, %p241
      %p244 = scmp.ne.s32.totalorder %s227, %s243
      %p245 = scmp.eq.s32.totalorder %s25, 0
      %p246 = por %p244, %p245
      %p247 = scmp.le.s32.totalorder 1, %s19
      %p248 = scmp.lt.s32.totalorder %s19, 3
      %p249 = pnand %p247, %p248
      %p250 = pneg %p249
      // Predicated region
      $region9: #{rcab_forward.1} parent=5 // pred_check
        _
      $region10: #{rcab_forward.1} parent=5 // pred_check_branch
        %252 = sbr.rel (%p249) target = $region12
      $region11: #{rcab_forward.1} parent=5 // pred_region
        %s253 = ssub.s32 %s19, 1
        // Predicated region
        $region13: #{rcab_forward.1} parent=11 // pred_check
          %p254 = pneg %p66
        $region14: #{rcab_forward.1} parent=11 // pred_check_branch
          %256 = sbr.rel (%p254) target = $region16
        $region15: #{rcab_forward.1} parent=11 // pred_region
          _
        $region16: #{rcab_forward.1} parent=11 // pred_fallthru
          _
        // Predicated region
        $region17: #{rcab_forward.1} parent=11 // pred_check
          %p257 = pneg %p87
        $region18: #{rcab_forward.1} parent=11 // pred_check_branch
          %259 = sbr.rel (%p257) target = $region20
        $region19: #{rcab_forward.1} parent=11 // pred_region
          _
        $region20: #{rcab_forward.1} parent=11 // pred_fallthru
          _
        // Predicated region
        $region21: #{rcab_forward.1} parent=11 // pred_check
          %p260 = pneg %p108
        $region22: #{rcab_forward.1} parent=11 // pred_check_branch
          %262 = sbr.rel (%p260) target = $region24
        $region23: #{rcab_forward.1} parent=11 // pred_region
          %s264 = ssub.s32 18432, 18432
          %265 = vsyncadd [#allocation4], %s264
          %s266 = sshll.u32 [#allocation3], 4
          %s267 = int_to_ptr.vmem [resolvable:$true] %s266
          %272 = dma.hbm_to_vmem [thread:$0]  %s3, 18432, %s267, [#allocation4], 128, 128, 8
        $region24: #{rcab_forward.1} parent=11 // pred_fallthru
          _
        // Predicated region
        $region25: #{rcab_forward.1} parent=11 // pred_check
          %p273 = pneg %p129
        $region26: #{rcab_forward.1} parent=11 // pred_check_branch
          %275 = sbr.rel (%p273) target = $region28
        $region27: #{rcab_forward.1} parent=11 // pred_region
          _
        $region28: #{rcab_forward.1} parent=11 // pred_fallthru
          _
        // Predicated region
        $region29: #{rcab_forward.1} parent=11 // pred_check
          %p276 = pneg %p150
        $region30: #{rcab_forward.1} parent=11 // pred_check_branch
          %278 = sbr.rel (%p276) target = $region32
        $region31: #{rcab_forward.1} parent=11 // pred_region
          _
        $region32: #{rcab_forward.1} parent=11 // pred_fallthru
          _
        // Predicated region
        $region33: #{rcab_forward.1} parent=11 // pred_check
          %p279 = pneg %p171
        $region34: #{rcab_forward.1} parent=11 // pred_check_branch
          %281 = sbr.rel (%p279) target = $region36
        $region35: #{rcab_forward.1} parent=11 // pred_region
          _
        $region36: #{rcab_forward.1} parent=11 // pred_fallthru
          _
        // Predicated region
        $region37: #{rcab_forward.1} parent=11 // pred_check
          %p282 = pneg %p192
        $region38: #{rcab_forward.1} parent=11 // pred_check_branch
          %284 = sbr.rel (%p282) target = $region40
        $region39: #{rcab_forward.1} parent=11 // pred_region
          _
        $region40: #{rcab_forward.1} parent=11 // pred_fallthru
          _
        // Predicated region
        $region41: #{rcab_forward.1} parent=11 // pred_check
          %p285 = pneg %p213
        $region42: #{rcab_forward.1} parent=11 // pred_check_branch
          %287 = sbr.rel (%p285) target = $region44
        $region43: #{rcab_forward.1} parent=11 // pred_region
          _
        $region44: #{rcab_forward.1} parent=11 // pred_fallthru
          _
      $region12: #{rcab_forward.1} parent=5 // pred_fallthru
        _
      %p288 = scmp.lt.s32.totalorder %s19, 2
      // Predicated region
      $region45: #{rcab_forward.1} parent=5 // pred_check
        %p289 = pneg %p288
      $region46: #{rcab_forward.1} parent=5 // pred_check_branch
        %291 = sbr.rel (%p289) target = $region48
      $region47: #{rcab_forward.1} parent=5 // pred_region
        // Predicated region
        $region49: #{rcab_forward.1} parent=47 // pred_check
          %p292 = pneg %p39
        $region50: #{rcab_forward.1} parent=47 // pred_check_branch
          %294 = sbr.rel (%p292) target = $region52
        $region51: #{rcab_forward.1} parent=47 // pred_region
          %p295 = scmp.lt.s32.totalorder %s19, 1
          %s296 = scalar_select %p295, %s19, 1
          %s297 = smul.addr %s296, 54
          %s298 = smul.addr %s297, 8
          %s299 = scalar_lea.vmem %s0, %s298
        $region52: #{rcab_forward.1} parent=47 // pred_fallthru
          _
      $region48: #{rcab_forward.1} parent=5 // pred_fallthru
        _
      %p300 = scmp.le.s32.totalorder 1, %s19
      %p301 = scmp.lt.s32.totalorder %s19, 3
      %p302 = pnand %p300, %p301
      %p303 = pneg %p302
      // Predicated region
      $region53: #{rcab_forward.1} parent=5 // pred_check
        _
      $region54: #{rcab_forward.1} parent=5 // pred_check_branch
        %305 = sbr.rel (%p302) target = $region56
      $region55: #{rcab_forward.1} parent=5 // pred_region
        %s306 = ssub.s32 %s19, 1
        // Predicated region
        $region57: #{rcab_forward.1} parent=55 // pred_check
          %p307 = pneg %p108
        $region58: #{rcab_forward.1} parent=55 // pred_check_branch
          %309 = sbr.rel (%p307) target = $region60
        $region59: #{rcab_forward.1} parent=55 // pred_region
          %310 = dma.done [#allocation4], 18432
        $region60: #{rcab_forward.1} parent=55 // pred_fallthru
          _
        %p311 = scmp.lt.s32.totalorder %s24, 1
        %s312 = scalar_select %p311, %s24, 1
        %s313 = smul.addr %s312, 54
        %s314 = smul.addr %s313, 8
        %s315 = scalar_lea.vmem %s0, %s314
        %p316 = pneg %p45
        %p317 = pneg %p42
        %p318 = pneg %p66
        %p319 = pneg %p63
        %p320 = pneg %p87
        %p321 = pneg %p84
        %p322 = pneg %p108
        %p323 = pneg %p105
        %p324 = pneg %p129
        %p325 = pneg %p126
        %p326 = pneg %p150
        %p327 = pneg %p147
        %p328 = pneg %p171
        %p329 = pneg %p168
        %p330 = pneg %p192
        %p331 = pneg %p189
        %p332 = pneg %p213
        %p333 = pneg %p210
        %p334 = pneg %p239
        %p335 = pneg %p236
        %s336 = sand.u32 %s226, 1
        %s337 = scalar_lea.sflag [#allocation5], %s336
        %s338 = sand.u32 %s226, 1
        %s339 = smul.addr %s338, 256
        %s340 = scalar_lea.vmem [#allocation6], %s339
        %p341 = scmp.lt.s32.totalorder %s24, 1
        %s342 = scalar_select %p341, %s24, 1
        %s343 = smul.addr %s342, 54
        %s344 = smul.addr %s343, 8
        %s345 = scalar_lea.vmem %s0, %s344
        %v346 = vld [vmem:[%s1] sm:$0xff]
        %v347 = vld [vmem:[%s1 + $0x8] sm:$0xff]
        %v348 = vld [vmem:[%s1 + $0x10] sm:$0xff]
        %v349 = vld [vmem:[%s1 + $0x18] sm:$0xff]
        %v350 = vld [vmem:[%s1 + $0x20] sm:$0xff]
        %v351 = vld [vmem:[%s1 + $0x28] sm:$0xff]
        %v352 = vld [vmem:[%s1 + $0x30] sm:$0xff]
        %v353 = vld [vmem:[%s1 + $0x38] sm:$0xff]
        %v354 = vld [vmem:[%s1 + $0x40] sm:$0xff]
        %v355 = vld [vmem:[%s1 + $0x48] sm:$0xff]
        %v356 = vld [vmem:[%s1 + $0x50] sm:$0xff]
        %v357 = vld [vmem:[%s1 + $0x58] sm:$0xff]
        %v358 = vld [vmem:[%s1 + $0x60] sm:$0xff]
        %v359 = vld [vmem:[%s1 + $0x68] sm:$0xff]
        %v360 = vld [vmem:[%s1 + $0x70] sm:$0xff]
        %v361 = vld [vmem:[%s1 + $0x78] sm:$0xff]
        %v362 = vld [vmem:[%s1 + $0x80] sm:$0xff]
        %v363 = vld [vmem:[%s1 + $0x88] sm:$0xff]
        %v364 = vld [vmem:[%s1 + $0x90] sm:$0xff]
        %v365 = vld [vmem:[%s1 + $0x98] sm:$0xff]
        %v366 = vld [vmem:[%s1 + $0xa0] sm:$0xff]
        %v367 = vld [vmem:[%s1 + $0xa8] sm:$0xff]
        %v368 = vld [vmem:[%s1 + $0xb0] sm:$0xff]
        %v369 = vld [vmem:[%s1 + $0xb8] sm:$0xff]
        %v370 = vld [vmem:[%s1 + $0xc0] sm:$0xff]
        %v371 = vld [vmem:[%s1 + $0xc8] sm:$0xff]
        %v372 = vld [vmem:[%s1 + $0xd0] sm:$0xff]
        %v373 = vld [vmem:[%s1 + $0xd8] sm:$0xff]
        %v374 = vld [vmem:[%s1 + $0xe0] sm:$0xff]
        %v375 = vld [vmem:[%s1 + $0xe8] sm:$0xff]
        %v376 = vld [vmem:[%s1 + $0xf0] sm:$0xff]
        %v377 = vld [vmem:[%s1 + $0xf8] sm:$0xff]
        %v378 = vld [vmem:[%s1 + $0x100] sm:$0xff]
        %v379 = vld [vmem:[%s1 + $0x108] sm:$0xff]
        %v380 = vld [vmem:[%s1 + $0x110] sm:$0xff]
        %v381 = vld [vmem:[%s1 + $0x118] sm:$0xff]
        %v382 = vld [vmem:[%s1 + $0x120] sm:$0xff]
        %v383 = vld [vmem:[%s1 + $0x128] sm:$0xff]
        %v384 = vld [vmem:[%s1 + $0x130] sm:$0xff]
        %v385 = vld [vmem:[%s1 + $0x138] sm:$0xff]
        %v386 = vld [vmem:[%s1 + $0x140] sm:$0xff]
        %v387 = vld [vmem:[%s1 + $0x148] sm:$0xff]
        %v388 = vld [vmem:[%s1 + $0x150] sm:$0xff]
        %v389 = vld [vmem:[%s1 + $0x158] sm:$0xff]
        %v390 = vld [vmem:[%s1 + $0x160] sm:$0xff]
        %v391 = vld [vmem:[%s1 + $0x168] sm:$0xff]
        %v392 = vld [vmem:[%s1 + $0x170] sm:$0xff]
        %v393 = vld [vmem:[%s1 + $0x178] sm:$0xff]
        %v394 = vld [vmem:[%s1 + $0x180] sm:$0xff]
        %v395 = vld [vmem:[%s1 + $0x188] sm:$0xff]
        %v396 = vld [vmem:[%s1 + $0x190] sm:$0xff]
        %v397 = vld [vmem:[%s1 + $0x198] sm:$0xff]
        %v398 = vld [vmem:[%s1 + $0x1a0] sm:$0xff]
        %v399 = vld [vmem:[%s1 + $0x1a8] sm:$0xff]
        %v400 = vld [vmem:[%s1 + $0x1b0] sm:$0xff]
        %v401 = vld [vmem:[%s1 + $0x1b8] sm:$0xff]
        %v402 = vld [vmem:[%s1 + $0x1c0] sm:$0xff]
        %v403 = vld [vmem:[%s1 + $0x1c8] sm:$0xff]
        %v404 = vld [vmem:[%s1 + $0x1d0] sm:$0xff]
        %v405 = vld [vmem:[%s1 + $0x1d8] sm:$0xff]
        %v406 = vld [vmem:[%s1 + $0x1e0] sm:$0xff]
        %v407 = vld [vmem:[%s1 + $0x1e8] sm:$0xff]
        %v408 = vld [vmem:[%s1 + $0x1f0] sm:$0xff]
        %v409 = vld [vmem:[%s1 + $0x1f8] sm:$0xff]
        %v410 = vld [vmem:[%s1 + $0x200] sm:$0xff]
        %v411 = vld [vmem:[%s1 + $0x208] sm:$0xff]
        %v412 = vld [vmem:[%s1 + $0x210] sm:$0xff]
        %v413 = vld [vmem:[%s1 + $0x218] sm:$0xff]
        %v414 = vld [vmem:[%s1 + $0x220] sm:$0xff]
        %v415 = vld [vmem:[%s1 + $0x228] sm:$0xff]
        %v416 = vld [vmem:[%s1 + $0x230] sm:$0xff]
        %v417 = vld [vmem:[%s1 + $0x238] sm:$0xff]
        %v418 = vld [vmem:[%s1 + $0x240] sm:$0xff]
        %v419 = vld [vmem:[%s1 + $0x248] sm:$0xff]
        %v420 = vld [vmem:[%s1 + $0x250] sm:$0xff]
        %v421 = vld [vmem:[%s1 + $0x258] sm:$0xff]
        %v422 = vld [vmem:[%s1 + $0x260] sm:$0xff]
        %v423 = vld [vmem:[%s1 + $0x268] sm:$0xff]
        %v424 = vld [vmem:[%s1 + $0x270] sm:$0xff]
        %v425 = vld [vmem:[%s1 + $0x278] sm:$0xff]
        %v426 = vld [vmem:[%s1 + $0x280] sm:$0xff]
        %v427 = vld [vmem:[%s1 + $0x288] sm:$0xff]
        %v428 = vld [vmem:[%s1 + $0x290] sm:$0xff]
        %v429 = vld [vmem:[%s1 + $0x298] sm:$0xff]
        %v430 = vld [vmem:[%s1 + $0x2a0] sm:$0xff]
        %v431 = vld [vmem:[%s1 + $0x2a8] sm:$0xff]
        %v432 = vld [vmem:[%s1 + $0x2b0] sm:$0xff]
        %v433 = vld [vmem:[%s1 + $0x2b8] sm:$0xff]
        %v434 = vld [vmem:[%s1 + $0x2c0] sm:$0xff]
        %v435 = vld [vmem:[%s1 + $0x2c8] sm:$0xff]
        %v436 = vld [vmem:[%s1 + $0x2d0] sm:$0xff]
        %v437 = vld [vmem:[%s1 + $0x2d8] sm:$0xff]
        %v438 = vld [vmem:[%s1 + $0x2e0] sm:$0xff]
        %v439 = vld [vmem:[%s1 + $0x2e8] sm:$0xff]
        %v440 = vld [vmem:[%s1 + $0x2f0] sm:$0xff]
        %v441 = vld [vmem:[%s1 + $0x2f8] sm:$0xff]
        %v442 = vld [vmem:[%s1 + $0x300] sm:$0xff]
        %v443 = vld [vmem:[%s1 + $0x308] sm:$0xff]
        %v444 = vld [vmem:[%s1 + $0x310] sm:$0xff]
        %v445 = vld [vmem:[%s1 + $0x318] sm:$0xff]
        %v446 = vld [vmem:[%s1 + $0x320] sm:$0xff]
        %v447 = vld [vmem:[%s1 + $0x328] sm:$0xff]
        %v448 = vld [vmem:[%s1 + $0x330] sm:$0xff]
        %v449 = vld [vmem:[%s1 + $0x338] sm:$0xff]
        %v450 = vld [vmem:[%s1 + $0x340] sm:$0xff]
        %v451 = vld [vmem:[%s1 + $0x348] sm:$0xff]
        %v452 = vld [vmem:[%s1 + $0x350] sm:$0xff]
        %v453 = vld [vmem:[%s1 + $0x358] sm:$0xff]
        %v454 = vld [vmem:[%s1 + $0x360] sm:$0xff]
        %v455 = vld [vmem:[%s1 + $0x368] sm:$0xff]
        %v456 = vld [vmem:[%s1 + $0x370] sm:$0xff]
        %v457 = vld [vmem:[%s1 + $0x378] sm:$0xff]
        %v458 = vld [vmem:[%s1 + $0x380] sm:$0xff]
        %v459 = vld [vmem:[%s1 + $0x388] sm:$0xff]
        %v460 = vld [vmem:[%s1 + $0x390] sm:$0xff]
        %v461 = vld [vmem:[%s1 + $0x398] sm:$0xff]
        %v462 = vld [vmem:[%s1 + $0x3a0] sm:$0xff]
        %v463 = vld [vmem:[%s1 + $0x3a8] sm:$0xff]
        %v464 = vld [vmem:[%s1 + $0x3b0] sm:$0xff]
        %v465 = vld [vmem:[%s1 + $0x3b8] sm:$0xff]
        %v466 = vld [vmem:[%s1 + $0x3c0] sm:$0xff]
        %v467 = vld [vmem:[%s1 + $0x3c8] sm:$0xff]
        %v468 = vld [vmem:[%s1 + $0x3d0] sm:$0xff]
        %v469 = vld [vmem:[%s1 + $0x3d8] sm:$0xff]
        %v470 = vld [vmem:[%s1 + $0x3e0] sm:$0xff]
        %v471 = vld [vmem:[%s1 + $0x3e8] sm:$0xff]
        %v472 = vld [vmem:[%s1 + $0x3f0] sm:$0xff]
        %v473 = vld [vmem:[%s1 + $0x3f8] sm:$0xff]
        %v474 = vld [vmem:[%s1 + $0x400] sm:$0xff]
        %v475 = vld [vmem:[%s1 + $0x408] sm:$0xff]
        %v476 = vld [vmem:[%s1 + $0x410] sm:$0xff]
        %v477 = vld [vmem:[%s1 + $0x418] sm:$0xff]
        %v478 = vld [vmem:[%s1 + $0x420] sm:$0xff]
        %v479 = vld [vmem:[%s1 + $0x428] sm:$0xff]
        %v480 = vld [vmem:[%s1 + $0x430] sm:$0xff]
        %v481 = vld [vmem:[%s1 + $0x438] sm:$0xff]
        %v482 = vld [vmem:[%s1 + $0x440] sm:$0xff]
        %v483 = vld [vmem:[%s1 + $0x448] sm:$0xff]
        %v484 = vld [vmem:[%s1 + $0x450] sm:$0xff]
        %v485 = vld [vmem:[%s1 + $0x458] sm:$0xff]
        %v486 = vld [vmem:[%s1 + $0x460] sm:$0xff]
        %v487 = vld [vmem:[%s1 + $0x468] sm:$0xff]
        %v488 = vld [vmem:[%s1 + $0x470] sm:$0xff]
        %v489 = vld [vmem:[%s1 + $0x478] sm:$0xff]
        %v490 = vld [vmem:[%s2] sm:$0x1]
        %v491 = vld [vmem:[%s345] sm:$0xff]
        %v492 = vld [vmem:[%s345 + $0x8] sm:$0xff]
        %v493 = vld [vmem:[%s345 + $0x18] sm:$0xff]
        %v494 = vld [vmem:[%s345 + $0x20] sm:$0xff]
        %v495 = vld [vmem:[%s345 + $0x30] sm:$0xff]
        %v496 = vld [vmem:[%s345 + $0x38] sm:$0xff]
        %v497 = vld [vmem:[%s345 + $0x48] sm:$0xff]
        %v498 = vld [vmem:[%s345 + $0x50] sm:$0xff]
        %v499 = vld [vmem:[%s345 + $0x60] sm:$0xff]
        %v500 = vld [vmem:[%s345 + $0x68] sm:$0xff]
        %v501 = vld [vmem:[%s345 + $0x78] sm:$0xff]
        %v502 = vld [vmem:[%s345 + $0x80] sm:$0xff]
        %v503 = vld [vmem:[%s345 + $0x90] sm:$0xff]
        %v504 = vld [vmem:[%s345 + $0x98] sm:$0xff]
        %v505 = vld [vmem:[%s345 + $0xa8] sm:$0xff]
        %v506 = vld [vmem:[%s345 + $0xb0] sm:$0xff]
        %v507 = vld [vmem:[%s345 + $0xc0] sm:$0xff]
        %v508 = vld [vmem:[%s345 + $0xc8] sm:$0xff]
        %v509 = vld [vmem:[%s345 + $0xd8] sm:$0xff]
        %v510 = vld [vmem:[%s345 + $0xe0] sm:$0xff]
        %v511 = vld [vmem:[%s345 + $0xf0] sm:$0xff]
        %v512 = vld [vmem:[%s345 + $0xf8] sm:$0xff]
        %v513 = vld [vmem:[%s345 + $0x108] sm:$0xff]
        %v514 = vld [vmem:[%s345 + $0x110] sm:$0xff]
        %v515 = vld [vmem:[%s345 + $0x120] sm:$0xff]
        %v516 = vld [vmem:[%s345 + $0x128] sm:$0xff]
        %v517 = vld [vmem:[%s345 + $0x138] sm:$0xff]
        %v518 = vld [vmem:[%s345 + $0x140] sm:$0xff]
        %v519 = vld [vmem:[%s345 + $0x150] sm:$0xff]
        %v520 = vld [vmem:[%s345 + $0x158] sm:$0xff]
        %v521 = vld [vmem:[%s345 + $0x168] sm:$0xff]
        %v522 = vld [vmem:[%s345 + $0x170] sm:$0xff]
        %v523 = vld [vmem:[%s345 + $0x1] sm:$0xff]
        %v524 = vld [vmem:[%s345 + $0x9] sm:$0xff]
        %v525 = vld [vmem:[%s345 + $0x19] sm:$0xff]
        %v526 = vld [vmem:[%s345 + $0x21] sm:$0xff]
        %v527 = vld [vmem:[%s345 + $0x31] sm:$0xff]
        %v528 = vld [vmem:[%s345 + $0x39] sm:$0xff]
        %v529 = vld [vmem:[%s345 + $0x49] sm:$0xff]
        %v530 = vld [vmem:[%s345 + $0x51] sm:$0xff]
        %v531 = vld [vmem:[%s345 + $0x61] sm:$0xff]
        %v532 = vld [vmem:[%s345 + $0x69] sm:$0xff]
        %v533 = vld [vmem:[%s345 + $0x79] sm:$0xff]
        %v534 = vld [vmem:[%s345 + $0x81] sm:$0xff]
        %v535 = vld [vmem:[%s345 + $0x91] sm:$0xff]
        %v536 = vld [vmem:[%s345 + $0x99] sm:$0xff]
        %v537 = vld [vmem:[%s345 + $0xa9] sm:$0xff]
        %v538 = vld [vmem:[%s345 + $0xb1] sm:$0xff]
        %v539 = vld [vmem:[%s345 + $0xc1] sm:$0xff]
        %v540 = vld [vmem:[%s345 + $0xc9] sm:$0xff]
        %v541 = vld [vmem:[%s345 + $0xd9] sm:$0xff]
        %v542 = vld [vmem:[%s345 + $0xe1] sm:$0xff]
        %v543 = vld [vmem:[%s345 + $0xf1] sm:$0xff]
        %v544 = vld [vmem:[%s345 + $0xf9] sm:$0xff]
        %v545 = vld [vmem:[%s345 + $0x109] sm:$0xff]
        %v546 = vld [vmem:[%s345 + $0x111] sm:$0xff]
        %v547 = vld [vmem:[%s345 + $0x121] sm:$0xff]
        %v548 = vld [vmem:[%s345 + $0x129] sm:$0xff]
        %v549 = vld [vmem:[%s345 + $0x139] sm:$0xff]
        %v550 = vld [vmem:[%s345 + $0x141] sm:$0xff]
        %v551 = vld [vmem:[%s345 + $0x151] sm:$0xff]
        %v552 = vld [vmem:[%s345 + $0x159] sm:$0xff]
        %v553 = vld [vmem:[%s345 + $0x169] sm:$0xff]
        %v554 = vld [vmem:[%s345 + $0x171] sm:$0xff]
        %v555 = vld [vmem:[%s345 + $0x2] sm:$0xff]
        %v556 = vld [vmem:[%s345 + $0xa] sm:$0xff]
        %v557 = vld [vmem:[%s345 + $0x1a] sm:$0xff]
        %v558 = vld [vmem:[%s345 + $0x22] sm:$0xff]
        %v559 = vld [vmem:[%s345 + $0x32] sm:$0xff]
        %v560 = vld [vmem:[%s345 + $0x3a] sm:$0xff]
        %v561 = vld [vmem:[%s345 + $0x4a] sm:$0xff]
        %v562 = vld [vmem:[%s345 + $0x52] sm:$0xff]
        %v563 = vld [vmem:[%s345 + $0x62] sm:$0xff]
        %v564 = vld [vmem:[%s345 + $0x6a] sm:$0xff]
        %v565 = vld [vmem:[%s345 + $0x7a] sm:$0xff]
        %v566 = vld [vmem:[%s345 + $0x82] sm:$0xff]
        %v567 = vld [vmem:[%s345 + $0x92] sm:$0xff]
        %v568 = vld [vmem:[%s345 + $0x9a] sm:$0xff]
        %v569 = vld [vmem:[%s345 + $0xaa] sm:$0xff]
        %v570 = vld [vmem:[%s345 + $0xb2] sm:$0xff]
        %v571 = vld [vmem:[%s345 + $0xc2] sm:$0xff]
        %v572 = vld [vmem:[%s345 + $0xca] sm:$0xff]
        %v573 = vld [vmem:[%s345 + $0xda] sm:$0xff]
        %v574 = vld [vmem:[%s345 + $0xe2] sm:$0xff]
        %v575 = vld [vmem:[%s345 + $0xf2] sm:$0xff]
        %v576 = vld [vmem:[%s345 + $0xfa] sm:$0xff]
        %v577 = vld [vmem:[%s345 + $0x10a] sm:$0xff]
        %v578 = vld [vmem:[%s345 + $0x112] sm:$0xff]
        %v579 = vld [vmem:[%s345 + $0x122] sm:$0xff]
        %v580 = vld [vmem:[%s345 + $0x12a] sm:$0xff]
        %v581 = vld [vmem:[%s345 + $0x13a] sm:$0xff]
        %v582 = vld [vmem:[%s345 + $0x142] sm:$0xff]
        %v583 = vld [vmem:[%s345 + $0x152] sm:$0xff]
        %v584 = vld [vmem:[%s345 + $0x15a] sm:$0xff]
        %v585 = vld [vmem:[%s345 + $0x16a] sm:$0xff]
        %v586 = vld [vmem:[%s345 + $0x172] sm:$0xff]
        %s587 = scalar_lea.vmem %s345, 24
        %v588 = vld [vmem:[%s587] sm:$0xff]
        %v589 = vld [vmem:[%s587 + $0x8] sm:$0xff]
        %v590 = vld [vmem:[%s587 + $0x18] sm:$0xff]
        %v591 = vld [vmem:[%s587 + $0x20] sm:$0xff]
        %v592 = vld [vmem:[%s587 + $0x30] sm:$0xff]
        %v593 = vld [vmem:[%s587 + $0x38] sm:$0xff]
        %v594 = vld [vmem:[%s587 + $0x48] sm:$0xff]
        %v595 = vld [vmem:[%s587 + $0x50] sm:$0xff]
        %v596 = vld [vmem:[%s587 + $0x60] sm:$0xff]
        %v597 = vld [vmem:[%s587 + $0x68] sm:$0xff]
        %v598 = vld [vmem:[%s587 + $0x78] sm:$0xff]
        %v599 = vld [vmem:[%s587 + $0x80] sm:$0xff]
        %v600 = vld [vmem:[%s587 + $0x90] sm:$0xff]
        %v601 = vld [vmem:[%s587 + $0x98] sm:$0xff]
        %v602 = vld [vmem:[%s587 + $0xa8] sm:$0xff]
        %v603 = vld [vmem:[%s587 + $0xb0] sm:$0xff]
        %v604 = vld [vmem:[%s587 + $0xc0] sm:$0xff]
        %v605 = vld [vmem:[%s587 + $0xc8] sm:$0xff]
        %v606 = vld [vmem:[%s587 + $0xd8] sm:$0xff]
        %v607 = vld [vmem:[%s587 + $0xe0] sm:$0xff]
        %v608 = vld [vmem:[%s587 + $0xf0] sm:$0xff]
        %v609 = vld [vmem:[%s587 + $0xf8] sm:$0xff]
        %v610 = vld [vmem:[%s587 + $0x108] sm:$0xff]
        %v611 = vld [vmem:[%s587 + $0x110] sm:$0xff]
        %v612 = vld [vmem:[%s587 + $0x120] sm:$0xff]
        %v613 = vld [vmem:[%s587 + $0x128] sm:$0xff]
        %v614 = vld [vmem:[%s587 + $0x138] sm:$0xff]
        %v615 = vld [vmem:[%s587 + $0x140] sm:$0xff]
        %v616 = vld [vmem:[%s587 + $0x150] sm:$0xff]
        %v617 = vld [vmem:[%s587 + $0x158] sm:$0xff]
        %v618 = vld [vmem:[%s587 + $0x168] sm:$0xff]
        %v619 = vld [vmem:[%s587 + $0x170] sm:$0xff]
        %v620 = vld [vmem:[%s587 + $0x1] sm:$0xff]
        %v621 = vld [vmem:[%s587 + $0x9] sm:$0xff]
        %v622 = vld [vmem:[%s587 + $0x19] sm:$0xff]
        %v623 = vld [vmem:[%s587 + $0x21] sm:$0xff]
        %v624 = vld [vmem:[%s587 + $0x31] sm:$0xff]
        %v625 = vld [vmem:[%s587 + $0x39] sm:$0xff]
        %v626 = vld [vmem:[%s587 + $0x49] sm:$0xff]
        %v627 = vld [vmem:[%s587 + $0x51] sm:$0xff]
        %v628 = vld [vmem:[%s587 + $0x61] sm:$0xff]
        %v629 = vld [vmem:[%s587 + $0x69] sm:$0xff]
        %v630 = vld [vmem:[%s587 + $0x79] sm:$0xff]
        %v631 = vld [vmem:[%s587 + $0x81] sm:$0xff]
        %v632 = vld [vmem:[%s587 + $0x91] sm:$0xff]
        %v633 = vld [vmem:[%s587 + $0x99] sm:$0xff]
        %v634 = vld [vmem:[%s587 + $0xa9] sm:$0xff]
        %v635 = vld [vmem:[%s587 + $0xb1] sm:$0xff]
        %v636 = vld [vmem:[%s587 + $0xc1] sm:$0xff]
        %v637 = vld [vmem:[%s587 + $0xc9] sm:$0xff]
        %v638 = vld [vmem:[%s587 + $0xd9] sm:$0xff]
        %v639 = vld [vmem:[%s587 + $0xe1] sm:$0xff]
        %v640 = vld [vmem:[%s587 + $0xf1] sm:$0xff]
        %v641 = vld [vmem:[%s587 + $0xf9] sm:$0xff]
        %v642 = vld [vmem:[%s587 + $0x109] sm:$0xff]
        %v643 = vld [vmem:[%s587 + $0x111] sm:$0xff]
        %v644 = vld [vmem:[%s587 + $0x121] sm:$0xff]
        %v645 = vld [vmem:[%s587 + $0x129] sm:$0xff]
        %v646 = vld [vmem:[%s587 + $0x139] sm:$0xff]
        %v647 = vld [vmem:[%s587 + $0x141] sm:$0xff]
        %v648 = vld [vmem:[%s587 + $0x151] sm:$0xff]
        %v649 = vld [vmem:[%s587 + $0x159] sm:$0xff]
        %v650 = vld [vmem:[%s587 + $0x169] sm:$0xff]
        %v651 = vld [vmem:[%s587 + $0x171] sm:$0xff]
        %v652 = vld [vmem:[%s587 + $0x2] sm:$0xff]
        %v653 = vld [vmem:[%s587 + $0xa] sm:$0xff]
        %v654 = vld [vmem:[%s587 + $0x1a] sm:$0xff]
        %v655 = vld [vmem:[%s587 + $0x22] sm:$0xff]
        %v656 = vld [vmem:[%s587 + $0x32] sm:$0xff]
        %v657 = vld [vmem:[%s587 + $0x3a] sm:$0xff]
        %v658 = vld [vmem:[%s587 + $0x4a] sm:$0xff]
        %v659 = vld [vmem:[%s587 + $0x52] sm:$0xff]
        %v660 = vld [vmem:[%s587 + $0x62] sm:$0xff]
        %v661 = vld [vmem:[%s587 + $0x6a] sm:$0xff]
        %v662 = vld [vmem:[%s587 + $0x7a] sm:$0xff]
        %v663 = vld [vmem:[%s587 + $0x82] sm:$0xff]
        %v664 = vld [vmem:[%s587 + $0x92] sm:$0xff]
        %v665 = vld [vmem:[%s587 + $0x9a] sm:$0xff]
        %v666 = vld [vmem:[%s587 + $0xaa] sm:$0xff]
        %v667 = vld [vmem:[%s587 + $0xb2] sm:$0xff]
        %v668 = vld [vmem:[%s587 + $0xc2] sm:$0xff]
        %v669 = vld [vmem:[%s587 + $0xca] sm:$0xff]
        %v670 = vld [vmem:[%s587 + $0xda] sm:$0xff]
        %v671 = vld [vmem:[%s587 + $0xe2] sm:$0xff]
        %v672 = vld [vmem:[%s587 + $0xf2] sm:$0xff]
        %v673 = vld [vmem:[%s587 + $0xfa] sm:$0xff]
        %v674 = vld [vmem:[%s587 + $0x10a] sm:$0xff]
        %v675 = vld [vmem:[%s587 + $0x112] sm:$0xff]
        %v676 = vld [vmem:[%s587 + $0x122] sm:$0xff]
        %v677 = vld [vmem:[%s587 + $0x12a] sm:$0xff]
        %v678 = vld [vmem:[%s587 + $0x13a] sm:$0xff]
        %v679 = vld [vmem:[%s587 + $0x142] sm:$0xff]
        %v680 = vld [vmem:[%s587 + $0x152] sm:$0xff]
        %v681 = vld [vmem:[%s587 + $0x15a] sm:$0xff]
        %v682 = vld [vmem:[%s587 + $0x16a] sm:$0xff]
        %v683 = vld [vmem:[%s587 + $0x172] sm:$0xff]
        %s684 = scalar_lea.vmem %s345, 48
        %v685 = vld [vmem:[%s684] sm:$0xff]
        %v686 = vld [vmem:[%s684 + $0x8] sm:$0xff]
        %v687 = vld [vmem:[%s684 + $0x18] sm:$0xff]
        %v688 = vld [vmem:[%s684 + $0x20] sm:$0xff]
        %v689 = vld [vmem:[%s684 + $0x30] sm:$0xff]
        %v690 = vld [vmem:[%s684 + $0x38] sm:$0xff]
        %v691 = vld [vmem:[%s684 + $0x48] sm:$0xff]
        %v692 = vld [vmem:[%s684 + $0x50] sm:$0xff]
        %v693 = vld [vmem:[%s684 + $0x60] sm:$0xff]
        %v694 = vld [vmem:[%s684 + $0x68] sm:$0xff]
        %v695 = vld [vmem:[%s684 + $0x78] sm:$0xff]
        %v696 = vld [vmem:[%s684 + $0x80] sm:$0xff]
        %v697 = vld [vmem:[%s684 + $0x90] sm:$0xff]
        %v698 = vld [vmem:[%s684 + $0x98] sm:$0xff]
        %v699 = vld [vmem:[%s684 + $0xa8] sm:$0xff]
        %v700 = vld [vmem:[%s684 + $0xb0] sm:$0xff]
        %v701 = vld [vmem:[%s684 + $0xc0] sm:$0xff]
        %v702 = vld [vmem:[%s684 + $0xc8] sm:$0xff]
        %v703 = vld [vmem:[%s684 + $0xd8] sm:$0xff]
        %v704 = vld [vmem:[%s684 + $0xe0] sm:$0xff]
        %v705 = vld [vmem:[%s684 + $0xf0] sm:$0xff]
        %v706 = vld [vmem:[%s684 + $0xf8] sm:$0xff]
        %v707 = vld [vmem:[%s684 + $0x108] sm:$0xff]
        %v708 = vld [vmem:[%s684 + $0x110] sm:$0xff]
        %v709 = vld [vmem:[%s684 + $0x120] sm:$0xff]
        %v710 = vld [vmem:[%s684 + $0x128] sm:$0xff]
        %v711 = vld [vmem:[%s684 + $0x138] sm:$0xff]
        %v712 = vld [vmem:[%s684 + $0x140] sm:$0xff]
        %v713 = vld [vmem:[%s684 + $0x150] sm:$0xff]
        %v714 = vld [vmem:[%s684 + $0x158] sm:$0xff]
        %v715 = vld [vmem:[%s684 + $0x168] sm:$0xff]
        %v716 = vld [vmem:[%s684 + $0x170] sm:$0xff]
        %v717 = vld [vmem:[%s684 + $0x1] sm:$0xff]
        %v718 = vld [vmem:[%s684 + $0x9] sm:$0xff]
        %v719 = vld [vmem:[%s684 + $0x19] sm:$0xff]
        %v720 = vld [vmem:[%s684 + $0x21] sm:$0xff]
        %v721 = vld [vmem:[%s684 + $0x31] sm:$0xff]
        %v722 = vld [vmem:[%s684 + $0x39] sm:$0xff]
        %v723 = vld [vmem:[%s684 + $0x49] sm:$0xff]
        %v724 = vld [vmem:[%s684 + $0x51] sm:$0xff]
        %v725 = vld [vmem:[%s684 + $0x61] sm:$0xff]
        %v726 = vld [vmem:[%s684 + $0x69] sm:$0xff]
        %v727 = vld [vmem:[%s684 + $0x79] sm:$0xff]
        %v728 = vld [vmem:[%s684 + $0x81] sm:$0xff]
        %v729 = vld [vmem:[%s684 + $0x91] sm:$0xff]
        %v730 = vld [vmem:[%s684 + $0x99] sm:$0xff]
        %v731 = vld [vmem:[%s684 + $0xa9] sm:$0xff]
        %v732 = vld [vmem:[%s684 + $0xb1] sm:$0xff]
        %v733 = vld [vmem:[%s684 + $0xc1] sm:$0xff]
        %v734 = vld [vmem:[%s684 + $0xc9] sm:$0xff]
        %v735 = vld [vmem:[%s684 + $0xd9] sm:$0xff]
        %v736 = vld [vmem:[%s684 + $0xe1] sm:$0xff]
        %v737 = vld [vmem:[%s684 + $0xf1] sm:$0xff]
        %v738 = vld [vmem:[%s684 + $0xf9] sm:$0xff]
        %v739 = vld [vmem:[%s684 + $0x109] sm:$0xff]
        %v740 = vld [vmem:[%s684 + $0x111] sm:$0xff]
        %v741 = vld [vmem:[%s684 + $0x121] sm:$0xff]
        %v742 = vld [vmem:[%s684 + $0x129] sm:$0xff]
        %v743 = vld [vmem:[%s684 + $0x139] sm:$0xff]
        %v744 = vld [vmem:[%s684 + $0x141] sm:$0xff]
        %v745 = vld [vmem:[%s684 + $0x151] sm:$0xff]
        %v746 = vld [vmem:[%s684 + $0x159] sm:$0xff]
        %v747 = vld [vmem:[%s684 + $0x169] sm:$0xff]
        %v748 = vld [vmem:[%s684 + $0x171] sm:$0xff]
        %v749 = vld [vmem:[%s684 + $0x2] sm:$0xff]
        %v750 = vld [vmem:[%s684 + $0xa] sm:$0xff]
        %v751 = vld [vmem:[%s684 + $0x1a] sm:$0xff]
        %v752 = vld [vmem:[%s684 + $0x22] sm:$0xff]
        %v753 = vld [vmem:[%s684 + $0x32] sm:$0xff]
        %v754 = vld [vmem:[%s684 + $0x3a] sm:$0xff]
        %v755 = vld [vmem:[%s684 + $0x4a] sm:$0xff]
        %v756 = vld [vmem:[%s684 + $0x52] sm:$0xff]
        %v757 = vld [vmem:[%s684 + $0x62] sm:$0xff]
        %v758 = vld [vmem:[%s684 + $0x6a] sm:$0xff]
        %v759 = vld [vmem:[%s684 + $0x7a] sm:$0xff]
        %v760 = vld [vmem:[%s684 + $0x82] sm:$0xff]
        %v761 = vld [vmem:[%s684 + $0x92] sm:$0xff]
        %v762 = vld [vmem:[%s684 + $0x9a] sm:$0xff]
        %v763 = vld [vmem:[%s684 + $0xaa] sm:$0xff]
        %v764 = vld [vmem:[%s684 + $0xb2] sm:$0xff]
        %v765 = vld [vmem:[%s684 + $0xc2] sm:$0xff]
        %v766 = vld [vmem:[%s684 + $0xca] sm:$0xff]
        %v767 = vld [vmem:[%s684 + $0xda] sm:$0xff]
        %v768 = vld [vmem:[%s684 + $0xe2] sm:$0xff]
        %v769 = vld [vmem:[%s684 + $0xf2] sm:$0xff]
        %v770 = vld [vmem:[%s684 + $0xfa] sm:$0xff]
        %v771 = vld [vmem:[%s684 + $0x10a] sm:$0xff]
        %v772 = vld [vmem:[%s684 + $0x112] sm:$0xff]
        %v773 = vld [vmem:[%s684 + $0x122] sm:$0xff]
        %v774 = vld [vmem:[%s684 + $0x12a] sm:$0xff]
        %v775 = vld [vmem:[%s684 + $0x13a] sm:$0xff]
        %v776 = vld [vmem:[%s684 + $0x142] sm:$0xff]
        %v777 = vld [vmem:[%s684 + $0x152] sm:$0xff]
        %v778 = vld [vmem:[%s684 + $0x15a] sm:$0xff]
        %v779 = vld [vmem:[%s684 + $0x16a] sm:$0xff]
        %v780 = vld [vmem:[%s684 + $0x172] sm:$0xff]
        %v782 = vlaneseq
        %v783 = vshrl.u32 %v782, 7
        %v784 = vsub.s32 0, %v783
        %v785 = vrot.slane %v490, %v784
        %787 = vmatprep.subr.mxu0 0.0
        %788 = vmatpush1.msra.mxu0 %v361
        %789 = vmatprep.subr.mxu0 0.0
        %790 = vmatpush1.msra.mxu0 %v360
        %791 = vmatprep.subr.mxu0 0.0
        %792 = vmatpush1.msra.mxu0 %v359
        %793 = vmatprep.subr.mxu0 0.0
        %794 = vmatpush1.msra.mxu0 %v358
        %795 = vmatprep.subr.mxu0 0.0
        %796 = vmatpush1.msra.mxu0 %v357
        %797 = vmatprep.subr.mxu0 0.0
        %798 = vmatpush1.msra.mxu0 %v356
        %799 = vmatprep.subr.mxu0 0.0
        %800 = vmatpush1.msra.mxu0 %v355
        %801 = vmatprep.subr.mxu0 0.0
        %802 = vmatpush1.msra.mxu0 %v354
        %803 = vmatprep.subr.mxu0 0.0
        %804 = vmatpush1.msra.mxu0 %v353
        %805 = vmatprep.subr.mxu0 0.0
        %806 = vmatpush1.msra.mxu0 %v352
        %807 = vmatprep.subr.mxu0 0.0
        %808 = vmatpush1.msra.mxu0 %v351
        %809 = vmatprep.subr.mxu0 0.0
        %810 = vmatpush1.msra.mxu0 %v350
        %811 = vmatprep.subr.mxu0 0.0
        %812 = vmatpush1.msra.mxu0 %v349
        %813 = vmatprep.subr.mxu0 0.0
        %814 = vmatpush1.msra.mxu0 %v348
        %815 = vmatprep.subr.mxu0 0.0
        %816 = vmatpush1.msra.mxu0 %v347
        %817 = vmatprep.subr.mxu0 0.0
        %818 = vmatpush1.msra.mxu0 %v346
        %819 = vmatprep.subr.mxu0 0.0
        %820 = vmatpush2.msra.mxu0 %v377
        %821 = vmatprep.subr.mxu0 0.0
        %822 = vmatpush2.msra.mxu0 %v376
        %823 = vmatprep.subr.mxu0 0.0
        %824 = vmatpush2.msra.mxu0 %v375
        %825 = vmatprep.subr.mxu0 0.0
        %826 = vmatpush2.msra.mxu0 %v374
        %827 = vmatprep.subr.mxu0 0.0
        %828 = vmatpush2.msra.mxu0 %v373
        %829 = vmatprep.subr.mxu0 0.0
        %830 = vmatpush2.msra.mxu0 %v372
        %831 = vmatprep.subr.mxu0 0.0
        %832 = vmatpush2.msra.mxu0 %v371
        %833 = vmatprep.subr.mxu0 0.0
        %834 = vmatpush2.msra.mxu0 %v370
        %835 = vmatprep.subr.mxu0 0.0
        %836 = vmatpush2.msra.mxu0 %v369
        %837 = vmatprep.subr.mxu0 0.0
        %838 = vmatpush2.msra.mxu0 %v368
        %839 = vmatprep.subr.mxu0 0.0
        %840 = vmatpush2.msra.mxu0 %v367
        %841 = vmatprep.subr.mxu0 0.0
        %842 = vmatpush2.msra.mxu0 %v366
        %843 = vmatprep.subr.mxu0 0.0
        %844 = vmatpush2.msra.mxu0 %v365
        %845 = vmatprep.subr.mxu0 0.0
        %846 = vmatpush2.msra.mxu0 %v364
        %847 = vmatprep.subr.mxu0 0.0
        %848 = vmatpush2.msra.mxu0 %v363
        %849 = vmatprep.subr.mxu0 0.0
        %850 = vmatpush2.msra.mxu0 %v362
        %851 = vmatprep.mubr.f32.mxu0 %v523
        %852 = vmatmul.mubr.f32.gmra.mxu0 %v491
        %v853 = vpop.f32.mrf.mxu0
        %v854 = vadd.f32 %v785, %v853
        %v855 = vpop.f32.mrf.mxu0
        %856 = vmatprep.mubr.f32.mxu0 %v524
        %857 = vmatmul.mubr.f32.gmra.mxu0 %v492
        %v858 = vpop.f32.mrf.mxu0
        %v859 = vadd.f32 %v785, %v858
        %v860 = vpop.f32.mrf.mxu0
        %861 = vmatprep.mubr.f32.mxu0 %v525
        %862 = vmatmul.mubr.f32.gmra.mxu0 %v493
        %v863 = vpop.f32.mrf.mxu0
        %v864 = vadd.f32 %v785, %v863
        %v865 = vpop.f32.mrf.mxu0
        %866 = vmatprep.mubr.f32.mxu0 %v526
        %867 = vmatmul.mubr.f32.gmra.mxu0 %v494
        %v868 = vpop.f32.mrf.mxu0
        %v869 = vadd.f32 %v785, %v868
        %v870 = vpop.f32.mrf.mxu0
        %871 = vmatprep.mubr.f32.mxu0 %v527
        %872 = vmatmul.mubr.f32.gmra.mxu0 %v495
        %v873 = vpop.f32.mrf.mxu0
        %v874 = vadd.f32 %v785, %v873
        %v875 = vpop.f32.mrf.mxu0
        %876 = vmatprep.mubr.f32.mxu0 %v528
        %877 = vmatmul.mubr.f32.gmra.mxu0 %v496
        %v878 = vpop.f32.mrf.mxu0
        %v879 = vadd.f32 %v785, %v878
        %v880 = vpop.f32.mrf.mxu0
        %881 = vmatprep.mubr.f32.mxu0 %v529
        %882 = vmatmul.mubr.f32.gmra.mxu0 %v497
        %v883 = vpop.f32.mrf.mxu0
        %v884 = vadd.f32 %v785, %v883
        %v885 = vpop.f32.mrf.mxu0
        %886 = vmatprep.mubr.f32.mxu0 %v530
        %887 = vmatmul.mubr.f32.gmra.mxu0 %v498
        %v888 = vpop.f32.mrf.mxu0
        %v889 = vadd.f32 %v785, %v888
        %v890 = vpop.f32.mrf.mxu0
        %891 = vmatprep.mubr.f32.mxu0 %v531
        %892 = vmatmul.mubr.f32.gmra.mxu0 %v499
        %v893 = vpop.f32.mrf.mxu0
        %v894 = vadd.f32 %v785, %v893
        %v895 = vpop.f32.mrf.mxu0
        %896 = vmatprep.mubr.f32.mxu0 %v532
        %897 = vmatmul.mubr.f32.gmra.mxu0 %v500
        %v898 = vpop.f32.mrf.mxu0
        %v899 = vadd.f32 %v785, %v898
        %v900 = vpop.f32.mrf.mxu0
        %901 = vmatprep.mubr.f32.mxu0 %v533
        %902 = vmatmul.mubr.f32.gmra.mxu0 %v501
        %v903 = vpop.f32.mrf.mxu0
        %v904 = vadd.f32 %v785, %v903
        %v905 = vpop.f32.mrf.mxu0
        %906 = vmatprep.mubr.f32.mxu0 %v534
        %907 = vmatmul.mubr.f32.gmra.mxu0 %v502
        %v908 = vpop.f32.mrf.mxu0
        %v909 = vadd.f32 %v785, %v908
        %v910 = vpop.f32.mrf.mxu0
        %911 = vmatprep.mubr.f32.mxu0 %v535
        %912 = vmatmul.mubr.f32.gmra.mxu0 %v503
        %v913 = vpop.f32.mrf.mxu0
        %v914 = vadd.f32 %v785, %v913
        %v915 = vpop.f32.mrf.mxu0
        %916 = vmatprep.mubr.f32.mxu0 %v536
        %917 = vmatmul.mubr.f32.gmra.mxu0 %v504
        %v918 = vpop.f32.mrf.mxu0
        %v919 = vadd.f32 %v785, %v918
        %v920 = vpop.f32.mrf.mxu0
        %921 = vmatprep.mubr.f32.mxu0 %v537
        %922 = vmatmul.mubr.f32.gmra.mxu0 %v505
        %v923 = vpop.f32.mrf.mxu0
        %v924 = vadd.f32 %v785, %v923
        %v925 = vpop.f32.mrf.mxu0
        %926 = vmatprep.mubr.f32.mxu0 %v538
        %927 = vmatmul.mubr.f32.gmra.mxu0 %v506
        %v928 = vpop.f32.mrf.mxu0
        %v929 = vadd.f32 %v785, %v928
        %v930 = vpop.f32.mrf.mxu0
        %931 = vmatprep.mubr.f32.mxu0 %v539
        %932 = vmatmul.mubr.f32.gmra.mxu0 %v507
        %v933 = vpop.f32.mrf.mxu0
        %v934 = vadd.f32 %v785, %v933
        %v935 = vpop.f32.mrf.mxu0
        %936 = vmatprep.mubr.f32.mxu0 %v540
        %937 = vmatmul.mubr.f32.gmra.mxu0 %v508
        %v938 = vpop.f32.mrf.mxu0
        %v939 = vadd.f32 %v785, %v938
        %v940 = vpop.f32.mrf.mxu0
        %941 = vmatprep.mubr.f32.mxu0 %v541
        %942 = vmatmul.mubr.f32.gmra.mxu0 %v509
        %v943 = vpop.f32.mrf.mxu0
        %v944 = vadd.f32 %v785, %v943
        %v945 = vpop.f32.mrf.mxu0
        %946 = vmatprep.mubr.f32.mxu0 %v542
        %947 = vmatmul.mubr.f32.gmra.mxu0 %v510
        %v948 = vpop.f32.mrf.mxu0
        %v949 = vadd.f32 %v785, %v948
        %v950 = vpop.f32.mrf.mxu0
        %951 = vmatprep.mubr.f32.mxu0 %v543
        %952 = vmatmul.mubr.f32.gmra.mxu0 %v511
        %v953 = vpop.f32.mrf.mxu0
        %v954 = vadd.f32 %v785, %v953
        %v955 = vpop.f32.mrf.mxu0
        %956 = vmatprep.mubr.f32.mxu0 %v544
        %957 = vmatmul.mubr.f32.gmra.mxu0 %v512
        %v958 = vpop.f32.mrf.mxu0
        %v959 = vadd.f32 %v785, %v958
        %v960 = vpop.f32.mrf.mxu0
        %961 = vmatprep.mubr.f32.mxu0 %v545
        %962 = vmatmul.mubr.f32.gmra.mxu0 %v513
        %v963 = vpop.f32.mrf.mxu0
        %v964 = vadd.f32 %v785, %v963
        %v965 = vpop.f32.mrf.mxu0
        %966 = vmatprep.mubr.f32.mxu0 %v546
        %967 = vmatmul.mubr.f32.gmra.mxu0 %v514
        %v968 = vpop.f32.mrf.mxu0
        %v969 = vadd.f32 %v785, %v968
        %v970 = vpop.f32.mrf.mxu0
        %971 = vmatprep.mubr.f32.mxu0 %v547
        %972 = vmatmul.mubr.f32.gmra.mxu0 %v515
        %v973 = vpop.f32.mrf.mxu0
        %v974 = vadd.f32 %v785, %v973
        %v975 = vpop.f32.mrf.mxu0
        %976 = vmatprep.mubr.f32.mxu0 %v548
        %977 = vmatmul.mubr.f32.gmra.mxu0 %v516
        %v978 = vpop.f32.mrf.mxu0
        %v979 = vadd.f32 %v785, %v978
        %v980 = vpop.f32.mrf.mxu0
        %981 = vmatprep.mubr.f32.mxu0 %v549
        %982 = vmatmul.mubr.f32.gmra.mxu0 %v517
        %v983 = vpop.f32.mrf.mxu0
        %v984 = vadd.f32 %v785, %v983
        %v985 = vpop.f32.mrf.mxu0
        %986 = vmatprep.mubr.f32.mxu0 %v550
        %987 = vmatmul.mubr.f32.gmra.mxu0 %v518
        %v988 = vpop.f32.mrf.mxu0
        %v989 = vadd.f32 %v785, %v988
        %v990 = vpop.f32.mrf.mxu0
        %991 = vmatprep.mubr.f32.mxu0 %v551
        %992 = vmatmul.mubr.f32.gmra.mxu0 %v519
        %v993 = vpop.f32.mrf.mxu0
        %v994 = vadd.f32 %v785, %v993
        %v995 = vpop.f32.mrf.mxu0
        %996 = vmatprep.mubr.f32.mxu0 %v552
        %997 = vmatmul.mubr.f32.gmra.mxu0 %v520
        %v998 = vpop.f32.mrf.mxu0
        %v999 = vadd.f32 %v785, %v998
        %v1000 = vpop.f32.mrf.mxu0
        %1001 = vmatprep.mubr.f32.mxu0 %v553
        %1002 = vmatmul.mubr.f32.gmra.mxu0 %v521
        %v1003 = vpop.f32.mrf.mxu0
        %v1004 = vadd.f32 %v785, %v1003
        %v1005 = vpop.f32.mrf.mxu0
        %1006 = vmatprep.mubr.f32.mxu0 %v554
        %1007 = vmatmul.mubr.f32.gmra.mxu0 %v522
        %v1008 = vpop.f32.mrf.mxu0
        %v1009 = vadd.f32 %v785, %v1008
        %v1010 = vpop.f32.mrf.mxu0
        %1011 = vdwg.mxu0
        %1012 = vmatprep.subr.mxu0 0.0
        %1013 = vmatpush1.msra.mxu0 %v393
        %1014 = vmatprep.subr.mxu0 0.0
        %1015 = vmatpush1.msra.mxu0 %v392
        %1016 = vmatprep.subr.mxu0 0.0
        %1017 = vmatpush1.msra.mxu0 %v391
        %1018 = vmatprep.subr.mxu0 0.0
        %1019 = vmatpush1.msra.mxu0 %v390
        %1020 = vmatprep.subr.mxu0 0.0
        %1021 = vmatpush1.msra.mxu0 %v389
        %1022 = vmatprep.subr.mxu0 0.0
        %1023 = vmatpush1.msra.mxu0 %v388
        %1024 = vmatprep.subr.mxu0 0.0
        %1025 = vmatpush1.msra.mxu0 %v387
        %1026 = vmatprep.subr.mxu0 0.0
        %1027 = vmatpush1.msra.mxu0 %v386
        %1028 = vmatprep.subr.mxu0 0.0
        %1029 = vmatpush1.msra.mxu0 %v385
        %1030 = vmatprep.subr.mxu0 0.0
        %1031 = vmatpush1.msra.mxu0 %v384
        %1032 = vmatprep.subr.mxu0 0.0
        %1033 = vmatpush1.msra.mxu0 %v383
        %1034 = vmatprep.subr.mxu0 0.0
        %1035 = vmatpush1.msra.mxu0 %v382
        %1036 = vmatprep.subr.mxu0 0.0
        %1037 = vmatpush1.msra.mxu0 %v381
        %1038 = vmatprep.subr.mxu0 0.0
        %1039 = vmatpush1.msra.mxu0 %v380
        %1040 = vmatprep.subr.mxu0 0.0
        %1041 = vmatpush1.msra.mxu0 %v379
        %1042 = vmatprep.subr.mxu0 0.0
        %1043 = vmatpush1.msra.mxu0 %v378
        %1044 = vmatprep.subr.mxu0 0.0
        %1045 = vmatpush2.msra.mxu0 %v409
        %1046 = vmatprep.subr.mxu0 0.0
        %1047 = vmatpush2.msra.mxu0 %v408
        %1048 = vmatprep.subr.mxu0 0.0
        %1049 = vmatpush2.msra.mxu0 %v407
        %1050 = vmatprep.subr.mxu0 0.0
        %1051 = vmatpush2.msra.mxu0 %v406
        %1052 = vmatprep.subr.mxu0 0.0
        %1053 = vmatpush2.msra.mxu0 %v405
        %1054 = vmatprep.subr.mxu0 0.0
        %1055 = vmatpush2.msra.mxu0 %v404
        %1056 = vmatprep.subr.mxu0 0.0
        %1057 = vmatpush2.msra.mxu0 %v403
        %1058 = vmatprep.subr.mxu0 0.0
        %1059 = vmatpush2.msra.mxu0 %v402
        %1060 = vmatprep.subr.mxu0 0.0
        %1061 = vmatpush2.msra.mxu0 %v401
        %1062 = vmatprep.subr.mxu0 0.0
        %1063 = vmatpush2.msra.mxu0 %v400
        %1064 = vmatprep.subr.mxu0 0.0
        %1065 = vmatpush2.msra.mxu0 %v399
        %1066 = vmatprep.subr.mxu0 0.0
        %1067 = vmatpush2.msra.mxu0 %v398
        %1068 = vmatprep.subr.mxu0 0.0
        %1069 = vmatpush2.msra.mxu0 %v397
        %1070 = vmatprep.subr.mxu0 0.0
        %1071 = vmatpush2.msra.mxu0 %v396
        %1072 = vmatprep.subr.mxu0 0.0
        %1073 = vmatpush2.msra.mxu0 %v395
        %1074 = vmatprep.subr.mxu0 0.0
        %1075 = vmatpush2.msra.mxu0 %v394
        %1076 = vmatprep.mubr.f32.mxu0 %v588
        %1077 = vmatmul.mubr.f32.gmra.mxu0 %v555
        %v1078 = vpop.f32.mrf.mxu0
        %v1079 = vadd.f32 %v854, %v1078
        %v1080 = vpop.f32.mrf.mxu0
        %1081 = vmatprep.mubr.f32.mxu0 %v589
        %1082 = vmatmul.mubr.f32.gmra.mxu0 %v556
        %v1083 = vpop.f32.mrf.mxu0
        %v1084 = vadd.f32 %v859, %v1083
        %v1085 = vpop.f32.mrf.mxu0
        %1086 = vmatprep.mubr.f32.mxu0 %v590
        %1087 = vmatmul.mubr.f32.gmra.mxu0 %v557
        %v1088 = vpop.f32.mrf.mxu0
        %v1089 = vadd.f32 %v864, %v1088
        %v1090 = vpop.f32.mrf.mxu0
        %1091 = vmatprep.mubr.f32.mxu0 %v591
        %1092 = vmatmul.mubr.f32.gmra.mxu0 %v558
        %v1093 = vpop.f32.mrf.mxu0
        %v1094 = vadd.f32 %v869, %v1093
        %v1095 = vpop.f32.mrf.mxu0
        %1096 = vmatprep.mubr.f32.mxu0 %v592
        %1097 = vmatmul.mubr.f32.gmra.mxu0 %v559
        %v1098 = vpop.f32.mrf.mxu0
        %v1099 = vadd.f32 %v874, %v1098
        %v1100 = vpop.f32.mrf.mxu0
        %1101 = vmatprep.mubr.f32.mxu0 %v593
        %1102 = vmatmul.mubr.f32.gmra.mxu0 %v560
        %v1103 = vpop.f32.mrf.mxu0
        %v1104 = vadd.f32 %v879, %v1103
        %v1105 = vpop.f32.mrf.mxu0
        %1106 = vmatprep.mubr.f32.mxu0 %v594
        %1107 = vmatmul.mubr.f32.gmra.mxu0 %v561
        %v1108 = vpop.f32.mrf.mxu0
        %v1109 = vadd.f32 %v884, %v1108
        %v1110 = vpop.f32.mrf.mxu0
        %1111 = vmatprep.mubr.f32.mxu0 %v595
        %1112 = vmatmul.mubr.f32.gmra.mxu0 %v562
        %v1113 = vpop.f32.mrf.mxu0
        %v1114 = vadd.f32 %v889, %v1113
        %v1115 = vpop.f32.mrf.mxu0
        %1116 = vmatprep.mubr.f32.mxu0 %v596
        %1117 = vmatmul.mubr.f32.gmra.mxu0 %v563
        %v1118 = vpop.f32.mrf.mxu0
        %v1119 = vadd.f32 %v894, %v1118
        %v1120 = vpop.f32.mrf.mxu0
        %1121 = vmatprep.mubr.f32.mxu0 %v597
        %1122 = vmatmul.mubr.f32.gmra.mxu0 %v564
        %v1123 = vpop.f32.mrf.mxu0
        %v1124 = vadd.f32 %v899, %v1123
        %v1125 = vpop.f32.mrf.mxu0
        %1126 = vmatprep.mubr.f32.mxu0 %v598
        %1127 = vmatmul.mubr.f32.gmra.mxu0 %v565
        %v1128 = vpop.f32.mrf.mxu0
        %v1129 = vadd.f32 %v904, %v1128
        %v1130 = vpop.f32.mrf.mxu0
        %1131 = vmatprep.mubr.f32.mxu0 %v599
        %1132 = vmatmul.mubr.f32.gmra.mxu0 %v566
        %v1133 = vpop.f32.mrf.mxu0
        %v1134 = vadd.f32 %v909, %v1133
        %v1135 = vpop.f32.mrf.mxu0
        %1136 = vmatprep.mubr.f32.mxu0 %v600
        %1137 = vmatmul.mubr.f32.gmra.mxu0 %v567
        %v1138 = vpop.f32.mrf.mxu0
        %v1139 = vadd.f32 %v914, %v1138
        %v1140 = vpop.f32.mrf.mxu0
        %1141 = vmatprep.mubr.f32.mxu0 %v601
        %1142 = vmatmul.mubr.f32.gmra.mxu0 %v568
        %v1143 = vpop.f32.mrf.mxu0
        %v1144 = vadd.f32 %v919, %v1143
        %v1145 = vpop.f32.mrf.mxu0
        %1146 = vmatprep.mubr.f32.mxu0 %v602
        %1147 = vmatmul.mubr.f32.gmra.mxu0 %v569
        %v1148 = vpop.f32.mrf.mxu0
        %v1149 = vadd.f32 %v924, %v1148
        %v1150 = vpop.f32.mrf.mxu0
        %1151 = vmatprep.mubr.f32.mxu0 %v603
        %1152 = vmatmul.mubr.f32.gmra.mxu0 %v570
        %v1153 = vpop.f32.mrf.mxu0
        %v1154 = vadd.f32 %v929, %v1153
        %v1155 = vpop.f32.mrf.mxu0
        %1156 = vmatprep.mubr.f32.mxu0 %v604
        %1157 = vmatmul.mubr.f32.gmra.mxu0 %v571
        %v1158 = vpop.f32.mrf.mxu0
        %v1159 = vadd.f32 %v934, %v1158
        %v1160 = vpop.f32.mrf.mxu0
        %1161 = vmatprep.mubr.f32.mxu0 %v605
        %1162 = vmatmul.mubr.f32.gmra.mxu0 %v572
        %v1163 = vpop.f32.mrf.mxu0
        %v1164 = vadd.f32 %v939, %v1163
        %v1165 = vpop.f32.mrf.mxu0
        %1166 = vmatprep.mubr.f32.mxu0 %v606
        %1167 = vmatmul.mubr.f32.gmra.mxu0 %v573
        %v1168 = vpop.f32.mrf.mxu0
        %v1169 = vadd.f32 %v944, %v1168
        %v1170 = vpop.f32.mrf.mxu0
        %1171 = vmatprep.mubr.f32.mxu0 %v607
        %1172 = vmatmul.mubr.f32.gmra.mxu0 %v574
        %v1173 = vpop.f32.mrf.mxu0
        %v1174 = vadd.f32 %v949, %v1173
        %v1175 = vpop.f32.mrf.mxu0
        %1176 = vmatprep.mubr.f32.mxu0 %v608
        %1177 = vmatmul.mubr.f32.gmra.mxu0 %v575
        %v1178 = vpop.f32.mrf.mxu0
        %v1179 = vadd.f32 %v954, %v1178
        %v1180 = vpop.f32.mrf.mxu0
        %1181 = vmatprep.mubr.f32.mxu0 %v609
        %1182 = vmatmul.mubr.f32.gmra.mxu0 %v576
        %v1183 = vpop.f32.mrf.mxu0
        %v1184 = vadd.f32 %v959, %v1183
        %v1185 = vpop.f32.mrf.mxu0
        %1186 = vmatprep.mubr.f32.mxu0 %v610
        %1187 = vmatmul.mubr.f32.gmra.mxu0 %v577
        %v1188 = vpop.f32.mrf.mxu0
        %v1189 = vadd.f32 %v964, %v1188
        %v1190 = vpop.f32.mrf.mxu0
        %1191 = vmatprep.mubr.f32.mxu0 %v611
        %1192 = vmatmul.mubr.f32.gmra.mxu0 %v578
        %v1193 = vpop.f32.mrf.mxu0
        %v1194 = vadd.f32 %v969, %v1193
        %v1195 = vpop.f32.mrf.mxu0
        %1196 = vmatprep.mubr.f32.mxu0 %v612
        %1197 = vmatmul.mubr.f32.gmra.mxu0 %v579
        %v1198 = vpop.f32.mrf.mxu0
        %v1199 = vadd.f32 %v974, %v1198
        %v1200 = vpop.f32.mrf.mxu0
        %1201 = vmatprep.mubr.f32.mxu0 %v613
        %1202 = vmatmul.mubr.f32.gmra.mxu0 %v580
        %v1203 = vpop.f32.mrf.mxu0
        %v1204 = vadd.f32 %v979, %v1203
        %v1205 = vpop.f32.mrf.mxu0
        %1206 = vmatprep.mubr.f32.mxu0 %v614
        %1207 = vmatmul.mubr.f32.gmra.mxu0 %v581
        %v1208 = vpop.f32.mrf.mxu0
        %v1209 = vadd.f32 %v984, %v1208
        %v1210 = vpop.f32.mrf.mxu0
        %1211 = vmatprep.mubr.f32.mxu0 %v615
        %1212 = vmatmul.mubr.f32.gmra.mxu0 %v582
        %v1213 = vpop.f32.mrf.mxu0
        %v1214 = vadd.f32 %v989, %v1213
        %v1215 = vpop.f32.mrf.mxu0
        %1216 = vmatprep.mubr.f32.mxu0 %v616
        %1217 = vmatmul.mubr.f32.gmra.mxu0 %v583
        %v1218 = vpop.f32.mrf.mxu0
        %v1219 = vadd.f32 %v994, %v1218
        %v1220 = vpop.f32.mrf.mxu0
        %1221 = vmatprep.mubr.f32.mxu0 %v617
        %1222 = vmatmul.mubr.f32.gmra.mxu0 %v584
        %v1223 = vpop.f32.mrf.mxu0
        %v1224 = vadd.f32 %v999, %v1223
        %v1225 = vpop.f32.mrf.mxu0
        %1226 = vmatprep.mubr.f32.mxu0 %v618
        %1227 = vmatmul.mubr.f32.gmra.mxu0 %v585
        %v1228 = vpop.f32.mrf.mxu0
        %v1229 = vadd.f32 %v1004, %v1228
        %v1230 = vpop.f32.mrf.mxu0
        %1231 = vmatprep.mubr.f32.mxu0 %v619
        %1232 = vmatmul.mubr.f32.gmra.mxu0 %v586
        %v1233 = vpop.f32.mrf.mxu0
        %v1234 = vadd.f32 %v1009, %v1233
        %v1235 = vpop.f32.mrf.mxu0
        %1236 = vdwg.mxu0
        %1237 = vmatprep.subr.mxu0 0.0
        %1238 = vmatpush1.msra.mxu0 %v425
        %1239 = vmatprep.subr.mxu0 0.0
        %1240 = vmatpush1.msra.mxu0 %v424
        %1241 = vmatprep.subr.mxu0 0.0
        %1242 = vmatpush1.msra.mxu0 %v423
        %1243 = vmatprep.subr.mxu0 0.0
        %1244 = vmatpush1.msra.mxu0 %v422
        %1245 = vmatprep.subr.mxu0 0.0
        %1246 = vmatpush1.msra.mxu0 %v421
        %1247 = vmatprep.subr.mxu0 0.0
        %1248 = vmatpush1.msra.mxu0 %v420
        %1249 = vmatprep.subr.mxu0 0.0
        %1250 = vmatpush1.msra.mxu0 %v419
        %1251 = vmatprep.subr.mxu0 0.0
        %1252 = vmatpush1.msra.mxu0 %v418
        %1253 = vmatprep.subr.mxu0 0.0
        %1254 = vmatpush1.msra.mxu0 %v417
        %1255 = vmatprep.subr.mxu0 0.0
        %1256 = vmatpush1.msra.mxu0 %v416
        %1257 = vmatprep.subr.mxu0 0.0
        %1258 = vmatpush1.msra.mxu0 %v415
        %1259 = vmatprep.subr.mxu0 0.0
        %1260 = vmatpush1.msra.mxu0 %v414
        %1261 = vmatprep.subr.mxu0 0.0
        %1262 = vmatpush1.msra.mxu0 %v413
        %1263 = vmatprep.subr.mxu0 0.0
        %1264 = vmatpush1.msra.mxu0 %v412
        %1265 = vmatprep.subr.mxu0 0.0
        %1266 = vmatpush1.msra.mxu0 %v411
        %1267 = vmatprep.subr.mxu0 0.0
        %1268 = vmatpush1.msra.mxu0 %v410
        %1269 = vmatprep.subr.mxu0 0.0
        %1270 = vmatpush2.msra.mxu0 %v441
        %1271 = vmatprep.subr.mxu0 0.0
        %1272 = vmatpush2.msra.mxu0 %v440
        %1273 = vmatprep.subr.mxu0 0.0
        %1274 = vmatpush2.msra.mxu0 %v439
        %1275 = vmatprep.subr.mxu0 0.0
        %1276 = vmatpush2.msra.mxu0 %v438
        %1277 = vmatprep.subr.mxu0 0.0
        %1278 = vmatpush2.msra.mxu0 %v437
        %1279 = vmatprep.subr.mxu0 0.0
        %1280 = vmatpush2.msra.mxu0 %v436
        %1281 = vmatprep.subr.mxu0 0.0
        %1282 = vmatpush2.msra.mxu0 %v435
        %1283 = vmatprep.subr.mxu0 0.0
        %1284 = vmatpush2.msra.mxu0 %v434
        %1285 = vmatprep.subr.mxu0 0.0
        %1286 = vmatpush2.msra.mxu0 %v433
        %1287 = vmatprep.subr.mxu0 0.0
        %1288 = vmatpush2.msra.mxu0 %v432
        %1289 = vmatprep.subr.mxu0 0.0
        %1290 = vmatpush2.msra.mxu0 %v431
        %1291 = vmatprep.subr.mxu0 0.0
        %1292 = vmatpush2.msra.mxu0 %v430
        %1293 = vmatprep.subr.mxu0 0.0
        %1294 = vmatpush2.msra.mxu0 %v429
        %1295 = vmatprep.subr.mxu0 0.0
        %1296 = vmatpush2.msra.mxu0 %v428
        %1297 = vmatprep.subr.mxu0 0.0
        %1298 = vmatpush2.msra.mxu0 %v427
        %1299 = vmatprep.subr.mxu0 0.0
        %1300 = vmatpush2.msra.mxu0 %v426
        %1301 = vmatprep.mubr.f32.mxu0 %v652
        %1302 = vmatmul.mubr.f32.gmra.mxu0 %v620
        %v1303 = vpop.f32.mrf.mxu0
        %v1304 = vadd.f32 %v1079, %v1303
        %v1305 = vpop.f32.mrf.mxu0
        %1306 = vmatprep.mubr.f32.mxu0 %v653
        %1307 = vmatmul.mubr.f32.gmra.mxu0 %v621
        %v1308 = vpop.f32.mrf.mxu0
        %v1309 = vadd.f32 %v1084, %v1308
        %v1310 = vpop.f32.mrf.mxu0
        %1311 = vmatprep.mubr.f32.mxu0 %v654
        %1312 = vmatmul.mubr.f32.gmra.mxu0 %v622
        %v1313 = vpop.f32.mrf.mxu0
        %v1314 = vadd.f32 %v1089, %v1313
        %v1315 = vpop.f32.mrf.mxu0
        %1316 = vmatprep.mubr.f32.mxu0 %v655
        %1317 = vmatmul.mubr.f32.gmra.mxu0 %v623
        %v1318 = vpop.f32.mrf.mxu0
        %v1319 = vadd.f32 %v1094, %v1318
        %v1320 = vpop.f32.mrf.mxu0
        %1321 = vmatprep.mubr.f32.mxu0 %v656
        %1322 = vmatmul.mubr.f32.gmra.mxu0 %v624
        %v1323 = vpop.f32.mrf.mxu0
        %v1324 = vadd.f32 %v1099, %v1323
        %v1325 = vpop.f32.mrf.mxu0
        %1326 = vmatprep.mubr.f32.mxu0 %v657
        %1327 = vmatmul.mubr.f32.gmra.mxu0 %v625
        %v1328 = vpop.f32.mrf.mxu0
        %v1329 = vadd.f32 %v1104, %v1328
        %v1330 = vpop.f32.mrf.mxu0
        %1331 = vmatprep.mubr.f32.mxu0 %v658
        %1332 = vmatmul.mubr.f32.gmra.mxu0 %v626
        %v1333 = vpop.f32.mrf.mxu0
        %v1334 = vadd.f32 %v1109, %v1333
        %v1335 = vpop.f32.mrf.mxu0
        %1336 = vmatprep.mubr.f32.mxu0 %v659
        %1337 = vmatmul.mubr.f32.gmra.mxu0 %v627
        %v1338 = vpop.f32.mrf.mxu0
        %v1339 = vadd.f32 %v1114, %v1338
        %v1340 = vpop.f32.mrf.mxu0
        %1341 = vmatprep.mubr.f32.mxu0 %v660
        %1342 = vmatmul.mubr.f32.gmra.mxu0 %v628
        %v1343 = vpop.f32.mrf.mxu0
        %v1344 = vadd.f32 %v1119, %v1343
        %v1345 = vpop.f32.mrf.mxu0
        %1346 = vmatprep.mubr.f32.mxu0 %v661
        %1347 = vmatmul.mubr.f32.gmra.mxu0 %v629
        %v1348 = vpop.f32.mrf.mxu0
        %v1349 = vadd.f32 %v1124, %v1348
        %v1350 = vpop.f32.mrf.mxu0
        %1351 = vmatprep.mubr.f32.mxu0 %v662
        %1352 = vmatmul.mubr.f32.gmra.mxu0 %v630
        %v1353 = vpop.f32.mrf.mxu0
        %v1354 = vadd.f32 %v1129, %v1353
        %v1355 = vpop.f32.mrf.mxu0
        %1356 = vmatprep.mubr.f32.mxu0 %v663
        %1357 = vmatmul.mubr.f32.gmra.mxu0 %v631
        %v1358 = vpop.f32.mrf.mxu0
        %v1359 = vadd.f32 %v1134, %v1358
        %v1360 = vpop.f32.mrf.mxu0
        %1361 = vmatprep.mubr.f32.mxu0 %v664
        %1362 = vmatmul.mubr.f32.gmra.mxu0 %v632
        %v1363 = vpop.f32.mrf.mxu0
        %v1364 = vadd.f32 %v1139, %v1363
        %v1365 = vpop.f32.mrf.mxu0
        %1366 = vmatprep.mubr.f32.mxu0 %v665
        %1367 = vmatmul.mubr.f32.gmra.mxu0 %v633
        %v1368 = vpop.f32.mrf.mxu0
        %v1369 = vadd.f32 %v1144, %v1368
        %v1370 = vpop.f32.mrf.mxu0
        %1371 = vmatprep.mubr.f32.mxu0 %v666
        %1372 = vmatmul.mubr.f32.gmra.mxu0 %v634
        %v1373 = vpop.f32.mrf.mxu0
        %v1374 = vadd.f32 %v1149, %v1373
        %v1375 = vpop.f32.mrf.mxu0
        %1376 = vmatprep.mubr.f32.mxu0 %v667
        %1377 = vmatmul.mubr.f32.gmra.mxu0 %v635
        %v1378 = vpop.f32.mrf.mxu0
        %v1379 = vadd.f32 %v1154, %v1378
        %v1380 = vpop.f32.mrf.mxu0
        %1381 = vmatprep.mubr.f32.mxu0 %v668
        %1382 = vmatmul.mubr.f32.gmra.mxu0 %v636
        %v1383 = vpop.f32.mrf.mxu0
        %v1384 = vadd.f32 %v1159, %v1383
        %v1385 = vpop.f32.mrf.mxu0
        %1386 = vmatprep.mubr.f32.mxu0 %v669
        %1387 = vmatmul.mubr.f32.gmra.mxu0 %v637
        %v1388 = vpop.f32.mrf.mxu0
        %v1389 = vadd.f32 %v1164, %v1388
        %v1390 = vpop.f32.mrf.mxu0
        %1391 = vmatprep.mubr.f32.mxu0 %v670
        %1392 = vmatmul.mubr.f32.gmra.mxu0 %v638
        %v1393 = vpop.f32.mrf.mxu0
        %v1394 = vadd.f32 %v1169, %v1393
        %v1395 = vpop.f32.mrf.mxu0
        %1396 = vmatprep.mubr.f32.mxu0 %v671
        %1397 = vmatmul.mubr.f32.gmra.mxu0 %v639
        %v1398 = vpop.f32.mrf.mxu0
        %v1399 = vadd.f32 %v1174, %v1398
        %v1400 = vpop.f32.mrf.mxu0
        %1401 = vmatprep.mubr.f32.mxu0 %v672
        %1402 = vmatmul.mubr.f32.gmra.mxu0 %v640
        %v1403 = vpop.f32.mrf.mxu0
        %v1404 = vadd.f32 %v1179, %v1403
        %v1405 = vpop.f32.mrf.mxu0
        %1406 = vmatprep.mubr.f32.mxu0 %v673
        %1407 = vmatmul.mubr.f32.gmra.mxu0 %v641
        %v1408 = vpop.f32.mrf.mxu0
        %v1409 = vadd.f32 %v1184, %v1408
        %v1410 = vpop.f32.mrf.mxu0
        %1411 = vmatprep.mubr.f32.mxu0 %v674
        %1412 = vmatmul.mubr.f32.gmra.mxu0 %v642
        %v1413 = vpop.f32.mrf.mxu0
        %v1414 = vadd.f32 %v1189, %v1413
        %v1415 = vpop.f32.mrf.mxu0
        %1416 = vmatprep.mubr.f32.mxu0 %v675
        %1417 = vmatmul.mubr.f32.gmra.mxu0 %v643
        %v1418 = vpop.f32.mrf.mxu0
        %v1419 = vadd.f32 %v1194, %v1418
        %v1420 = vpop.f32.mrf.mxu0
        %1421 = vmatprep.mubr.f32.mxu0 %v676
        %1422 = vmatmul.mubr.f32.gmra.mxu0 %v644
        %v1423 = vpop.f32.mrf.mxu0
        %v1424 = vadd.f32 %v1199, %v1423
        %v1425 = vpop.f32.mrf.mxu0
        %1426 = vmatprep.mubr.f32.mxu0 %v677
        %1427 = vmatmul.mubr.f32.gmra.mxu0 %v645
        %v1428 = vpop.f32.mrf.mxu0
        %v1429 = vadd.f32 %v1204, %v1428
        %v1430 = vpop.f32.mrf.mxu0
        %1431 = vmatprep.mubr.f32.mxu0 %v678
        %1432 = vmatmul.mubr.f32.gmra.mxu0 %v646
        %v1433 = vpop.f32.mrf.mxu0
        %v1434 = vadd.f32 %v1209, %v1433
        %v1435 = vpop.f32.mrf.mxu0
        %1436 = vmatprep.mubr.f32.mxu0 %v679
        %1437 = vmatmul.mubr.f32.gmra.mxu0 %v647
        %v1438 = vpop.f32.mrf.mxu0
        %v1439 = vadd.f32 %v1214, %v1438
        %v1440 = vpop.f32.mrf.mxu0
        %1441 = vmatprep.mubr.f32.mxu0 %v680
        %1442 = vmatmul.mubr.f32.gmra.mxu0 %v648
        %v1443 = vpop.f32.mrf.mxu0
        %v1444 = vadd.f32 %v1219, %v1443
        %v1445 = vpop.f32.mrf.mxu0
        %1446 = vmatprep.mubr.f32.mxu0 %v681
        %1447 = vmatmul.mubr.f32.gmra.mxu0 %v649
        %v1448 = vpop.f32.mrf.mxu0
        %v1449 = vadd.f32 %v1224, %v1448
        %v1450 = vpop.f32.mrf.mxu0
        %1451 = vmatprep.mubr.f32.mxu0 %v682
        %1452 = vmatmul.mubr.f32.gmra.mxu0 %v650
        %v1453 = vpop.f32.mrf.mxu0
        %v1454 = vadd.f32 %v1229, %v1453
        %v1455 = vpop.f32.mrf.mxu0
        %1456 = vmatprep.mubr.f32.mxu0 %v683
        %1457 = vmatmul.mubr.f32.gmra.mxu0 %v651
        %v1458 = vpop.f32.mrf.mxu0
        %v1459 = vadd.f32 %v1234, %v1458
        %v1460 = vpop.f32.mrf.mxu0
        %1461 = vdwg.mxu0
        %1462 = vmatprep.subr.mxu0 0.0
        %1463 = vmatpush1.msra.mxu0 %v457
        %1464 = vmatprep.subr.mxu0 0.0
        %1465 = vmatpush1.msra.mxu0 %v456
        %1466 = vmatprep.subr.mxu0 0.0
        %1467 = vmatpush1.msra.mxu0 %v455
        %1468 = vmatprep.subr.mxu0 0.0
        %1469 = vmatpush1.msra.mxu0 %v454
        %1470 = vmatprep.subr.mxu0 0.0
        %1471 = vmatpush1.msra.mxu0 %v453
        %1472 = vmatprep.subr.mxu0 0.0
        %1473 = vmatpush1.msra.mxu0 %v452
        %1474 = vmatprep.subr.mxu0 0.0
        %1475 = vmatpush1.msra.mxu0 %v451
        %1476 = vmatprep.subr.mxu0 0.0
        %1477 = vmatpush1.msra.mxu0 %v450
        %1478 = vmatprep.subr.mxu0 0.0
        %1479 = vmatpush1.msra.mxu0 %v449
        %1480 = vmatprep.subr.mxu0 0.0
        %1481 = vmatpush1.msra.mxu0 %v448
        %1482 = vmatprep.subr.mxu0 0.0
        %1483 = vmatpush1.msra.mxu0 %v447
        %1484 = vmatprep.subr.mxu0 0.0
        %1485 = vmatpush1.msra.mxu0 %v446
        %1486 = vmatprep.subr.mxu0 0.0
        %1487 = vmatpush1.msra.mxu0 %v445
        %1488 = vmatprep.subr.mxu0 0.0
        %1489 = vmatpush1.msra.mxu0 %v444
        %1490 = vmatprep.subr.mxu0 0.0
        %1491 = vmatpush1.msra.mxu0 %v443
        %1492 = vmatprep.subr.mxu0 0.0
        %1493 = vmatpush1.msra.mxu0 %v442
        %1494 = vmatprep.subr.mxu0 0.0
        %1495 = vmatpush2.msra.mxu0 %v473
        %1496 = vmatprep.subr.mxu0 0.0
        %1497 = vmatpush2.msra.mxu0 %v472
        %1498 = vmatprep.subr.mxu0 0.0
        %1499 = vmatpush2.msra.mxu0 %v471
        %1500 = vmatprep.subr.mxu0 0.0
        %1501 = vmatpush2.msra.mxu0 %v470
        %1502 = vmatprep.subr.mxu0 0.0
        %1503 = vmatpush2.msra.mxu0 %v469
        %1504 = vmatprep.subr.mxu0 0.0
        %1505 = vmatpush2.msra.mxu0 %v468
        %1506 = vmatprep.subr.mxu0 0.0
        %1507 = vmatpush2.msra.mxu0 %v467
        %1508 = vmatprep.subr.mxu0 0.0
        %1509 = vmatpush2.msra.mxu0 %v466
        %1510 = vmatprep.subr.mxu0 0.0
        %1511 = vmatpush2.msra.mxu0 %v465
        %1512 = vmatprep.subr.mxu0 0.0
        %1513 = vmatpush2.msra.mxu0 %v464
        %1514 = vmatprep.subr.mxu0 0.0
        %1515 = vmatpush2.msra.mxu0 %v463
        %1516 = vmatprep.subr.mxu0 0.0
        %1517 = vmatpush2.msra.mxu0 %v462
        %1518 = vmatprep.subr.mxu0 0.0
        %1519 = vmatpush2.msra.mxu0 %v461
        %1520 = vmatprep.subr.mxu0 0.0
        %1521 = vmatpush2.msra.mxu0 %v460
        %1522 = vmatprep.subr.mxu0 0.0
        %1523 = vmatpush2.msra.mxu0 %v459
        %1524 = vmatprep.subr.mxu0 0.0
        %1525 = vmatpush2.msra.mxu0 %v458
        %1526 = vmatprep.mubr.f32.mxu0 %v717
        %1527 = vmatmul.mubr.f32.gmra.mxu0 %v685
        %v1528 = vpop.f32.mrf.mxu0
        %v1529 = vadd.f32 %v1304, %v1528
        %v1530 = vpop.f32.mrf.mxu0
        %1531 = vmatprep.mubr.f32.mxu0 %v718
        %1532 = vmatmul.mubr.f32.gmra.mxu0 %v686
        %v1533 = vpop.f32.mrf.mxu0
        %v1534 = vadd.f32 %v1309, %v1533
        %v1535 = vpop.f32.mrf.mxu0
        %1536 = vmatprep.mubr.f32.mxu0 %v719
        %1537 = vmatmul.mubr.f32.gmra.mxu0 %v687
        %v1538 = vpop.f32.mrf.mxu0
        %v1539 = vadd.f32 %v1314, %v1538
        %v1540 = vpop.f32.mrf.mxu0
        %1541 = vmatprep.mubr.f32.mxu0 %v720
        %1542 = vmatmul.mubr.f32.gmra.mxu0 %v688
        %v1543 = vpop.f32.mrf.mxu0
        %v1544 = vadd.f32 %v1319, %v1543
        %v1545 = vpop.f32.mrf.mxu0
        %1546 = vmatprep.mubr.f32.mxu0 %v721
        %1547 = vmatmul.mubr.f32.gmra.mxu0 %v689
        %v1548 = vpop.f32.mrf.mxu0
        %v1549 = vadd.f32 %v1324, %v1548
        %v1550 = vpop.f32.mrf.mxu0
        %1551 = vmatprep.mubr.f32.mxu0 %v722
        %1552 = vmatmul.mubr.f32.gmra.mxu0 %v690
        %v1553 = vpop.f32.mrf.mxu0
        %v1554 = vadd.f32 %v1329, %v1553
        %v1555 = vpop.f32.mrf.mxu0
        %1556 = vmatprep.mubr.f32.mxu0 %v723
        %1557 = vmatmul.mubr.f32.gmra.mxu0 %v691
        %v1558 = vpop.f32.mrf.mxu0
        %v1559 = vadd.f32 %v1334, %v1558
        %v1560 = vpop.f32.mrf.mxu0
        %1561 = vmatprep.mubr.f32.mxu0 %v724
        %1562 = vmatmul.mubr.f32.gmra.mxu0 %v692
        %v1563 = vpop.f32.mrf.mxu0
        %v1564 = vadd.f32 %v1339, %v1563
        %v1565 = vpop.f32.mrf.mxu0
        %1566 = vmatprep.mubr.f32.mxu0 %v725
        %1567 = vmatmul.mubr.f32.gmra.mxu0 %v693
        %v1568 = vpop.f32.mrf.mxu0
        %v1569 = vadd.f32 %v1344, %v1568
        %v1570 = vpop.f32.mrf.mxu0
        %1571 = vmatprep.mubr.f32.mxu0 %v726
        %1572 = vmatmul.mubr.f32.gmra.mxu0 %v694
        %v1573 = vpop.f32.mrf.mxu0
        %v1574 = vadd.f32 %v1349, %v1573
        %v1575 = vpop.f32.mrf.mxu0
        %1576 = vmatprep.mubr.f32.mxu0 %v727
        %1577 = vmatmul.mubr.f32.gmra.mxu0 %v695
        %v1578 = vpop.f32.mrf.mxu0
        %v1579 = vadd.f32 %v1354, %v1578
        %v1580 = vpop.f32.mrf.mxu0
        %1581 = vmatprep.mubr.f32.mxu0 %v728
        %1582 = vmatmul.mubr.f32.gmra.mxu0 %v696
        %v1583 = vpop.f32.mrf.mxu0
        %v1584 = vadd.f32 %v1359, %v1583
        %v1585 = vpop.f32.mrf.mxu0
        %1586 = vmatprep.mubr.f32.mxu0 %v729
        %1587 = vmatmul.mubr.f32.gmra.mxu0 %v697
        %v1588 = vpop.f32.mrf.mxu0
        %v1589 = vadd.f32 %v1364, %v1588
        %v1590 = vpop.f32.mrf.mxu0
        %1591 = vmatprep.mubr.f32.mxu0 %v730
        %1592 = vmatmul.mubr.f32.gmra.mxu0 %v698
        %v1593 = vpop.f32.mrf.mxu0
        %v1594 = vadd.f32 %v1369, %v1593
        %v1595 = vpop.f32.mrf.mxu0
        %1596 = vmatprep.mubr.f32.mxu0 %v731
        %1597 = vmatmul.mubr.f32.gmra.mxu0 %v699
        %v1598 = vpop.f32.mrf.mxu0
        %v1599 = vadd.f32 %v1374, %v1598
        %v1600 = vpop.f32.mrf.mxu0
        %1601 = vmatprep.mubr.f32.mxu0 %v732
        %1602 = vmatmul.mubr.f32.gmra.mxu0 %v700
        %v1603 = vpop.f32.mrf.mxu0
        %v1604 = vadd.f32 %v1379, %v1603
        %v1605 = vpop.f32.mrf.mxu0
        %1606 = vmatprep.mubr.f32.mxu0 %v733
        %1607 = vmatmul.mubr.f32.gmra.mxu0 %v701
        %v1608 = vpop.f32.mrf.mxu0
        %v1609 = vadd.f32 %v1384, %v1608
        %v1610 = vpop.f32.mrf.mxu0
        %1611 = vmatprep.mubr.f32.mxu0 %v734
        %1612 = vmatmul.mubr.f32.gmra.mxu0 %v702
        %v1613 = vpop.f32.mrf.mxu0
        %v1614 = vadd.f32 %v1389, %v1613
        %v1615 = vpop.f32.mrf.mxu0
        %1616 = vmatprep.mubr.f32.mxu0 %v735
        %1617 = vmatmul.mubr.f32.gmra.mxu0 %v703
        %v1618 = vpop.f32.mrf.mxu0
        %v1619 = vadd.f32 %v1394, %v1618
        %v1620 = vpop.f32.mrf.mxu0
        %1621 = vmatprep.mubr.f32.mxu0 %v736
        %1622 = vmatmul.mubr.f32.gmra.mxu0 %v704
        %v1623 = vpop.f32.mrf.mxu0
        %v1624 = vadd.f32 %v1399, %v1623
        %v1625 = vpop.f32.mrf.mxu0
        %1626 = vmatprep.mubr.f32.mxu0 %v737
        %1627 = vmatmul.mubr.f32.gmra.mxu0 %v705
        %v1628 = vpop.f32.mrf.mxu0
        %v1629 = vadd.f32 %v1404, %v1628
        %v1630 = vpop.f32.mrf.mxu0
        %1631 = vmatprep.mubr.f32.mxu0 %v738
        %1632 = vmatmul.mubr.f32.gmra.mxu0 %v706
        %v1633 = vpop.f32.mrf.mxu0
        %v1634 = vadd.f32 %v1409, %v1633
        %v1635 = vpop.f32.mrf.mxu0
        %1636 = vmatprep.mubr.f32.mxu0 %v739
        %1637 = vmatmul.mubr.f32.gmra.mxu0 %v707
        %v1638 = vpop.f32.mrf.mxu0
        %v1639 = vadd.f32 %v1414, %v1638
        %v1640 = vpop.f32.mrf.mxu0
        %1641 = vmatprep.mubr.f32.mxu0 %v740
        %1642 = vmatmul.mubr.f32.gmra.mxu0 %v708
        %v1643 = vpop.f32.mrf.mxu0
        %v1644 = vadd.f32 %v1419, %v1643
        %v1645 = vpop.f32.mrf.mxu0
        %1646 = vmatprep.mubr.f32.mxu0 %v741
        %1647 = vmatmul.mubr.f32.gmra.mxu0 %v709
        %v1648 = vpop.f32.mrf.mxu0
        %v1649 = vadd.f32 %v1424, %v1648
        %v1650 = vpop.f32.mrf.mxu0
        %1651 = vmatprep.mubr.f32.mxu0 %v742
        %1652 = vmatmul.mubr.f32.gmra.mxu0 %v710
        %v1653 = vpop.f32.mrf.mxu0
        %v1654 = vadd.f32 %v1429, %v1653
        %v1655 = vpop.f32.mrf.mxu0
        %1656 = vmatprep.mubr.f32.mxu0 %v743
        %1657 = vmatmul.mubr.f32.gmra.mxu0 %v711
        %v1658 = vpop.f32.mrf.mxu0
        %v1659 = vadd.f32 %v1434, %v1658
        %v1660 = vpop.f32.mrf.mxu0
        %1661 = vmatprep.mubr.f32.mxu0 %v744
        %1662 = vmatmul.mubr.f32.gmra.mxu0 %v712
        %v1663 = vpop.f32.mrf.mxu0
        %v1664 = vadd.f32 %v1439, %v1663
        %v1665 = vpop.f32.mrf.mxu0
        %1666 = vmatprep.mubr.f32.mxu0 %v745
        %1667 = vmatmul.mubr.f32.gmra.mxu0 %v713
        %v1668 = vpop.f32.mrf.mxu0
        %v1669 = vadd.f32 %v1444, %v1668
        %v1670 = vpop.f32.mrf.mxu0
        %1671 = vmatprep.mubr.f32.mxu0 %v746
        %1672 = vmatmul.mubr.f32.gmra.mxu0 %v714
        %v1673 = vpop.f32.mrf.mxu0
        %v1674 = vadd.f32 %v1449, %v1673
        %v1675 = vpop.f32.mrf.mxu0
        %1676 = vmatprep.mubr.f32.mxu0 %v747
        %1677 = vmatmul.mubr.f32.gmra.mxu0 %v715
        %v1678 = vpop.f32.mrf.mxu0
        %v1679 = vadd.f32 %v1454, %v1678
        %v1680 = vpop.f32.mrf.mxu0
        %1681 = vmatprep.mubr.f32.mxu0 %v748
        %1682 = vmatmul.mubr.f32.gmra.mxu0 %v716
        %v1683 = vpop.f32.mrf.mxu0
        %v1684 = vadd.f32 %v1459, %v1683
        %v1685 = vpop.f32.mrf.mxu0
        %1686 = vdwg.mxu0
        %1687 = vmatprep.subr.mxu0 0.0
        %1688 = vmatpush1.msra.mxu0 %v489
        %1689 = vmatprep.subr.mxu0 0.0
        %1690 = vmatpush1.msra.mxu0 %v488
        %1691 = vmatprep.subr.mxu0 0.0
        %1692 = vmatpush1.msra.mxu0 %v487
        %1693 = vmatprep.subr.mxu0 0.0
        %1694 = vmatpush1.msra.mxu0 %v486
        %1695 = vmatprep.subr.mxu0 0.0
        %1696 = vmatpush1.msra.mxu0 %v485
        %1697 = vmatprep.subr.mxu0 0.0
        %1698 = vmatpush1.msra.mxu0 %v484
        %1699 = vmatprep.subr.mxu0 0.0
        %1700 = vmatpush1.msra.mxu0 %v483
        %1701 = vmatprep.subr.mxu0 0.0
        %1702 = vmatpush1.msra.mxu0 %v482
        %1703 = vmatprep.subr.mxu0 0.0
        %1704 = vmatpush1.msra.mxu0 %v481
        %1705 = vmatprep.subr.mxu0 0.0
        %1706 = vmatpush1.msra.mxu0 %v480
        %1707 = vmatprep.subr.mxu0 0.0
        %1708 = vmatpush1.msra.mxu0 %v479
        %1709 = vmatprep.subr.mxu0 0.0
        %1710 = vmatpush1.msra.mxu0 %v478
        %1711 = vmatprep.subr.mxu0 0.0
        %1712 = vmatpush1.msra.mxu0 %v477
        %1713 = vmatprep.subr.mxu0 0.0
        %1714 = vmatpush1.msra.mxu0 %v476
        %1715 = vmatprep.subr.mxu0 0.0
        %1716 = vmatpush1.msra.mxu0 %v475
        %1717 = vmatprep.subr.mxu0 0.0
        %1718 = vmatpush1.msra.mxu0 %v474
        %1719 = vmatprep.subr.mxu0 0.0
        %1720 = vmatpush2.msra.mxu0 0.0
        %1721 = vmatprep.subr.mxu0 0.0
        %1722 = vmatpush2.msra.mxu0 0.0
        %1723 = vmatprep.subr.mxu0 0.0
        %1724 = vmatpush2.msra.mxu0 0.0
        %1725 = vmatprep.subr.mxu0 0.0
        %1726 = vmatpush2.msra.mxu0 0.0
        %1727 = vmatprep.subr.mxu0 0.0
        %1728 = vmatpush2.msra.mxu0 0.0
        %1729 = vmatprep.subr.mxu0 0.0
        %1730 = vmatpush2.msra.mxu0 0.0
        %1731 = vmatprep.subr.mxu0 0.0
        %1732 = vmatpush2.msra.mxu0 0.0
        %1733 = vmatprep.subr.mxu0 0.0
        %1734 = vmatpush2.msra.mxu0 0.0
        %1735 = vmatprep.subr.mxu0 0.0
        %1736 = vmatpush2.msra.mxu0 0.0
        %1737 = vmatprep.subr.mxu0 0.0
        %1738 = vmatpush2.msra.mxu0 0.0
        %1739 = vmatprep.subr.mxu0 0.0
        %1740 = vmatpush2.msra.mxu0 0.0
        %1741 = vmatprep.subr.mxu0 0.0
        %1742 = vmatpush2.msra.mxu0 0.0
        %1743 = vmatprep.subr.mxu0 0.0
        %1744 = vmatpush2.msra.mxu0 0.0
        %1745 = vmatprep.subr.mxu0 0.0
        %1746 = vmatpush2.msra.mxu0 0.0
        %1747 = vmatprep.subr.mxu0 0.0
        %1748 = vmatpush2.msra.mxu0 0.0
        %1749 = vmatprep.subr.mxu0 0.0
        %1750 = vmatpush2.msra.mxu0 0.0
        %1751 = vmatprep.mubr.f32.mxu0 0.0
        %1752 = vmatmul.mubr.f32.gmra.mxu0 %v749
        %v1753 = vpop.f32.mrf.mxu0
        %v1754 = vadd.f32 %v1529, %v1753
        %v1755 = vpop.f32.mrf.mxu0
        %1756 = vmatprep.mubr.f32.mxu0 0.0
        %1757 = vmatmul.mubr.f32.gmra.mxu0 %v750
        %v1758 = vpop.f32.mrf.mxu0
        %v1759 = vadd.f32 %v1534, %v1758
        %v1760 = vpop.f32.mrf.mxu0
        %1761 = vmatprep.mubr.f32.mxu0 0.0
        %1762 = vmatmul.mubr.f32.gmra.mxu0 %v751
        %v1763 = vpop.f32.mrf.mxu0
        %v1764 = vadd.f32 %v1539, %v1763
        %v1765 = vpop.f32.mrf.mxu0
        %1766 = vmatprep.mubr.f32.mxu0 0.0
        %1767 = vmatmul.mubr.f32.gmra.mxu0 %v752
        %v1768 = vpop.f32.mrf.mxu0
        %v1769 = vadd.f32 %v1544, %v1768
        %v1770 = vpop.f32.mrf.mxu0
        %1771 = vmatprep.mubr.f32.mxu0 0.0
        %1772 = vmatmul.mubr.f32.gmra.mxu0 %v753
        %v1773 = vpop.f32.mrf.mxu0
        %v1774 = vadd.f32 %v1549, %v1773
        %v1775 = vpop.f32.mrf.mxu0
        %1776 = vmatprep.mubr.f32.mxu0 0.0
        %1777 = vmatmul.mubr.f32.gmra.mxu0 %v754
        %v1778 = vpop.f32.mrf.mxu0
        %v1779 = vadd.f32 %v1554, %v1778
        %v1780 = vpop.f32.mrf.mxu0
        %1781 = vmatprep.mubr.f32.mxu0 0.0
        %1782 = vmatmul.mubr.f32.gmra.mxu0 %v755
        %v1783 = vpop.f32.mrf.mxu0
        %v1784 = vadd.f32 %v1559, %v1783
        %v1785 = vpop.f32.mrf.mxu0
        %1786 = vmatprep.mubr.f32.mxu0 0.0
        %1787 = vmatmul.mubr.f32.gmra.mxu0 %v756
        %v1788 = vpop.f32.mrf.mxu0
        %v1789 = vadd.f32 %v1564, %v1788
        %v1790 = vpop.f32.mrf.mxu0
        %1791 = vmatprep.mubr.f32.mxu0 0.0
        %1792 = vmatmul.mubr.f32.gmra.mxu0 %v757
        %v1793 = vpop.f32.mrf.mxu0
        %v1794 = vadd.f32 %v1569, %v1793
        %v1795 = vpop.f32.mrf.mxu0
        %1796 = vmatprep.mubr.f32.mxu0 0.0
        %1797 = vmatmul.mubr.f32.gmra.mxu0 %v758
        %v1798 = vpop.f32.mrf.mxu0
        %v1799 = vadd.f32 %v1574, %v1798
        %v1800 = vpop.f32.mrf.mxu0
        %1801 = vmatprep.mubr.f32.mxu0 0.0
        %1802 = vmatmul.mubr.f32.gmra.mxu0 %v759
        %v1803 = vpop.f32.mrf.mxu0
        %v1804 = vadd.f32 %v1579, %v1803
        %v1805 = vpop.f32.mrf.mxu0
        %1806 = vmatprep.mubr.f32.mxu0 0.0
        %1807 = vmatmul.mubr.f32.gmra.mxu0 %v760
        %v1808 = vpop.f32.mrf.mxu0
        %v1809 = vadd.f32 %v1584, %v1808
        %v1810 = vpop.f32.mrf.mxu0
        %1811 = vmatprep.mubr.f32.mxu0 0.0
        %1812 = vmatmul.mubr.f32.gmra.mxu0 %v761
        %v1813 = vpop.f32.mrf.mxu0
        %v1814 = vadd.f32 %v1589, %v1813
        %v1815 = vpop.f32.mrf.mxu0
        %1816 = vmatprep.mubr.f32.mxu0 0.0
        %1817 = vmatmul.mubr.f32.gmra.mxu0 %v762
        %v1818 = vpop.f32.mrf.mxu0
        %v1819 = vadd.f32 %v1594, %v1818
        %v1820 = vpop.f32.mrf.mxu0
        %1821 = vmatprep.mubr.f32.mxu0 0.0
        %1822 = vmatmul.mubr.f32.gmra.mxu0 %v763
        %v1823 = vpop.f32.mrf.mxu0
        %v1824 = vadd.f32 %v1599, %v1823
        %v1825 = vpop.f32.mrf.mxu0
        %1826 = vmatprep.mubr.f32.mxu0 0.0
        %1827 = vmatmul.mubr.f32.gmra.mxu0 %v764
        %v1828 = vpop.f32.mrf.mxu0
        %v1829 = vadd.f32 %v1604, %v1828
        %v1830 = vpop.f32.mrf.mxu0
        %1831 = vmatprep.mubr.f32.mxu0 0.0
        %1832 = vmatmul.mubr.f32.gmra.mxu0 %v765
        %v1833 = vpop.f32.mrf.mxu0
        %v1834 = vadd.f32 %v1609, %v1833
        %v1835 = vpop.f32.mrf.mxu0
        %1836 = vmatprep.mubr.f32.mxu0 0.0
        %1837 = vmatmul.mubr.f32.gmra.mxu0 %v766
        %v1838 = vpop.f32.mrf.mxu0
        %v1839 = vadd.f32 %v1614, %v1838
        %v1840 = vpop.f32.mrf.mxu0
        %1841 = vmatprep.mubr.f32.mxu0 0.0
        %1842 = vmatmul.mubr.f32.gmra.mxu0 %v767
        %v1843 = vpop.f32.mrf.mxu0
        %v1844 = vadd.f32 %v1619, %v1843
        %v1845 = vpop.f32.mrf.mxu0
        %1846 = vmatprep.mubr.f32.mxu0 0.0
        %1847 = vmatmul.mubr.f32.gmra.mxu0 %v768
        %v1848 = vpop.f32.mrf.mxu0
        %v1849 = vadd.f32 %v1624, %v1848
        %v1850 = vpop.f32.mrf.mxu0
        %1851 = vmatprep.mubr.f32.mxu0 0.0
        %1852 = vmatmul.mubr.f32.gmra.mxu0 %v769
        %v1853 = vpop.f32.mrf.mxu0
        %v1854 = vadd.f32 %v1629, %v1853
        %v1855 = vpop.f32.mrf.mxu0
        %1856 = vmatprep.mubr.f32.mxu0 0.0
        %1857 = vmatmul.mubr.f32.gmra.mxu0 %v770
        %v1858 = vpop.f32.mrf.mxu0
        %v1859 = vadd.f32 %v1634, %v1858
        %v1860 = vpop.f32.mrf.mxu0
        %1861 = vmatprep.mubr.f32.mxu0 0.0
        %1862 = vmatmul.mubr.f32.gmra.mxu0 %v771
        %v1863 = vpop.f32.mrf.mxu0
        %v1864 = vadd.f32 %v1639, %v1863
        %v1865 = vpop.f32.mrf.mxu0
        %1866 = vmatprep.mubr.f32.mxu0 0.0
        %1867 = vmatmul.mubr.f32.gmra.mxu0 %v772
        %v1868 = vpop.f32.mrf.mxu0
        %v1869 = vadd.f32 %v1644, %v1868
        %v1870 = vpop.f32.mrf.mxu0
        %1871 = vmatprep.mubr.f32.mxu0 0.0
        %1872 = vmatmul.mubr.f32.gmra.mxu0 %v773
        %v1873 = vpop.f32.mrf.mxu0
        %v1874 = vadd.f32 %v1649, %v1873
        %v1875 = vpop.f32.mrf.mxu0
        %1876 = vmatprep.mubr.f32.mxu0 0.0
        %1877 = vmatmul.mubr.f32.gmra.mxu0 %v774
        %v1878 = vpop.f32.mrf.mxu0
        %v1879 = vadd.f32 %v1654, %v1878
        %v1880 = vpop.f32.mrf.mxu0
        %1881 = vmatprep.mubr.f32.mxu0 0.0
        %1882 = vmatmul.mubr.f32.gmra.mxu0 %v775
        %v1883 = vpop.f32.mrf.mxu0
        %v1884 = vadd.f32 %v1659, %v1883
        %v1885 = vpop.f32.mrf.mxu0
        %1886 = vmatprep.mubr.f32.mxu0 0.0
        %1887 = vmatmul.mubr.f32.gmra.mxu0 %v776
        %v1888 = vpop.f32.mrf.mxu0
        %v1889 = vadd.f32 %v1664, %v1888
        %v1890 = vpop.f32.mrf.mxu0
        %1891 = vmatprep.mubr.f32.mxu0 0.0
        %1892 = vmatmul.mubr.f32.gmra.mxu0 %v777
        %v1893 = vpop.f32.mrf.mxu0
        %v1894 = vadd.f32 %v1669, %v1893
        %v1895 = vpop.f32.mrf.mxu0
        %1896 = vmatprep.mubr.f32.mxu0 0.0
        %1897 = vmatmul.mubr.f32.gmra.mxu0 %v778
        %v1898 = vpop.f32.mrf.mxu0
        %v1899 = vadd.f32 %v1674, %v1898
        %v1900 = vpop.f32.mrf.mxu0
        %1901 = vmatprep.mubr.f32.mxu0 0.0
        %1902 = vmatmul.mubr.f32.gmra.mxu0 %v779
        %v1903 = vpop.f32.mrf.mxu0
        %v1904 = vadd.f32 %v1679, %v1903
        %v1905 = vpop.f32.mrf.mxu0
        %1906 = vmatprep.mubr.f32.mxu0 0.0
        %1907 = vmatmul.mubr.f32.gmra.mxu0 %v780
        %v1908 = vpop.f32.mrf.mxu0
        %v1909 = vadd.f32 %v1684, %v1908
        %v1910 = vpop.f32.mrf.mxu0
        %1911 = vdwg.mxu0
        %v1912 = vmax.f32 %v1754, 0.0
        %v1913 = vmax.f32 %v1759, 0.0
        %v1914 = vmax.f32 %v1764, 0.0
        %v1915 = vmax.f32 %v1769, 0.0
        %v1916 = vmax.f32 %v1774, 0.0
        %v1917 = vmax.f32 %v1779, 0.0
        %v1918 = vmax.f32 %v1784, 0.0
        %v1919 = vmax.f32 %v1789, 0.0
        %v1920 = vmax.f32 %v1794, 0.0
        %v1921 = vmax.f32 %v1799, 0.0
        %v1922 = vmax.f32 %v1804, 0.0
        %v1923 = vmax.f32 %v1809, 0.0
        %v1924 = vmax.f32 %v1814, 0.0
        %v1925 = vmax.f32 %v1819, 0.0
        %v1926 = vmax.f32 %v1824, 0.0
        %v1927 = vmax.f32 %v1829, 0.0
        %v1928 = vmax.f32 %v1834, 0.0
        %v1929 = vmax.f32 %v1839, 0.0
        %v1930 = vmax.f32 %v1844, 0.0
        %v1931 = vmax.f32 %v1849, 0.0
        %v1932 = vmax.f32 %v1854, 0.0
        %v1933 = vmax.f32 %v1859, 0.0
        %v1934 = vmax.f32 %v1864, 0.0
        %v1935 = vmax.f32 %v1869, 0.0
        %v1936 = vmax.f32 %v1874, 0.0
        %v1937 = vmax.f32 %v1879, 0.0
        %v1938 = vmax.f32 %v1884, 0.0
        %v1939 = vmax.f32 %v1889, 0.0
        %v1940 = vmax.f32 %v1894, 0.0
        %v1941 = vmax.f32 %v1899, 0.0
        %v1942 = vmax.f32 %v1904, 0.0
        %v1943 = vmax.f32 %v1909, 0.0
        %1944 = vst [vmem:[#allocation2] sm:$0xff] 0.0
        %1945 = vst [vmem:[#allocation2 + $0x8] sm:$0xff] 0.0
        %1946 = vst [vmem:[#allocation2 + $0x10] sm:$0x3] 0.0
        %1947 = vst [vmem:[#allocation2 + $0x18] sm:$0xff] 0.0
        %1948 = vst [vmem:[#allocation2 + $0x20] sm:$0xff] 0.0
        %1949 = vst [vmem:[#allocation2 + $0x28] sm:$0x3] 0.0
        %1950 = vst [vmem:[#allocation2 + $0x30] sm:$0xff] 0.0
        %1951 = vst [vmem:[#allocation2 + $0x38] sm:$0xff] 0.0
        %1952 = vst [vmem:[#allocation2 + $0x40] sm:$0x3] 0.0
        %1953 = vst [vmem:[#allocation2 + $0x48] sm:$0xff] 0.0
        %1954 = vst [vmem:[#allocation2 + $0x50] sm:$0xff] 0.0
        %1955 = vst [vmem:[#allocation2 + $0x58] sm:$0x3] 0.0
        %1956 = vst [vmem:[#allocation2 + $0x60] sm:$0xff] 0.0
        %1957 = vst [vmem:[#allocation2 + $0x68] sm:$0xff] 0.0
        %1958 = vst [vmem:[#allocation2 + $0x70] sm:$0x3] 0.0
        %1959 = vst [vmem:[#allocation2 + $0x78] sm:$0xff] 0.0
        %1960 = vst [vmem:[#allocation2 + $0x80] sm:$0xff] 0.0
        %1961 = vst [vmem:[#allocation2 + $0x88] sm:$0x3] 0.0
        %1962 = vst [vmem:[#allocation2 + $0x90] sm:$0xff] 0.0
        %1963 = vst [vmem:[#allocation2 + $0x98] sm:$0xff] 0.0
        %1964 = vst [vmem:[#allocation2 + $0xa0] sm:$0x3] 0.0
        %1965 = vst [vmem:[#allocation2 + $0xa8] sm:$0xff] 0.0
        %1966 = vst [vmem:[#allocation2 + $0xb0] sm:$0xff] 0.0
        %1967 = vst [vmem:[#allocation2 + $0xb8] sm:$0x3] 0.0
        %1968 = vst [vmem:[#allocation2 + $0xc0] sm:$0xff] 0.0
        %1969 = vst [vmem:[#allocation2 + $0xc8] sm:$0xff] 0.0
        %1970 = vst [vmem:[#allocation2 + $0xd0] sm:$0x3] 0.0
        %1971 = vst [vmem:[#allocation2 + $0xd8] sm:$0xff] 0.0
        %1972 = vst [vmem:[#allocation2 + $0xe0] sm:$0xff] 0.0
        %1973 = vst [vmem:[#allocation2 + $0xe8] sm:$0x3] 0.0
        %1974 = vst [vmem:[#allocation2 + $0xf0] sm:$0xff] 0.0
        %1975 = vst [vmem:[#allocation2 + $0xf8] sm:$0xff] 0.0
        %1976 = vst [vmem:[#allocation2 + $0x100] sm:$0x3] 0.0
        %1977 = vst [vmem:[#allocation2 + $0x108] sm:$0xff] 0.0
        %1978 = vst [vmem:[#allocation2 + $0x110] sm:$0xff] 0.0
        %1979 = vst [vmem:[#allocation2 + $0x118] sm:$0x3] 0.0
        %1980 = vst [vmem:[#allocation2 + $0x120] sm:$0xff] 0.0
        %1981 = vst [vmem:[#allocation2 + $0x128] sm:$0xff] 0.0
        %1982 = vst [vmem:[#allocation2 + $0x130] sm:$0x3] 0.0
        %1983 = vst [vmem:[#allocation2 + $0x138] sm:$0xff] 0.0
        %1984 = vst [vmem:[#allocation2 + $0x140] sm:$0xff] 0.0
        %1985 = vst [vmem:[#allocation2 + $0x148] sm:$0x3] 0.0
        %1986 = vst [vmem:[#allocation2 + $0x150] sm:$0xff] 0.0
        %1987 = vst [vmem:[#allocation2 + $0x158] sm:$0xff] 0.0
        %1988 = vst [vmem:[#allocation2 + $0x160] sm:$0x3] 0.0
        %1989 = vst [vmem:[#allocation2 + $0x168] sm:$0xff] 0.0
        %1990 = vst [vmem:[#allocation2 + $0x170] sm:$0xff] 0.0
        %1991 = vst [vmem:[#allocation2 + $0x178] sm:$0x3] 0.0
        %1992 = vst [vmem:[#allocation2 + $0x180] sm:$0xff] 0.0
        %1993 = vst [vmem:[#allocation2 + $0x188] sm:$0xff] 0.0
        %1994 = vst [vmem:[#allocation2 + $0x190] sm:$0x3] 0.0
        %1995 = vst [vmem:[#allocation2 + $0x198] sm:$0xff] 0.0
        %1996 = vst [vmem:[#allocation2 + $0x1a0] sm:$0xff] 0.0
        %1997 = vst [vmem:[#allocation2 + $0x1a8] sm:$0x3] 0.0
        %s1998 = scalar_lea.vmem [#allocation2], 24
        %1999 = vst [vmem:[%s1998 + $0x1] sm:$0xff] %v1912
        %2000 = vst [vmem:[%s1998 + $0x9] sm:$0xff] %v1913
        %2001 = vst [vmem:[%s1998 + $0x19] sm:$0xff] %v1914
        %2002 = vst [vmem:[%s1998 + $0x21] sm:$0xff] %v1915
        %2003 = vst [vmem:[%s1998 + $0x31] sm:$0xff] %v1916
        %2004 = vst [vmem:[%s1998 + $0x39] sm:$0xff] %v1917
        %2005 = vst [vmem:[%s1998 + $0x49] sm:$0xff] %v1918
        %2006 = vst [vmem:[%s1998 + $0x51] sm:$0xff] %v1919
        %2007 = vst [vmem:[%s1998 + $0x61] sm:$0xff] %v1920
        %2008 = vst [vmem:[%s1998 + $0x69] sm:$0xff] %v1921
        %2009 = vst [vmem:[%s1998 + $0x79] sm:$0xff] %v1922
        %2010 = vst [vmem:[%s1998 + $0x81] sm:$0xff] %v1923
        %2011 = vst [vmem:[%s1998 + $0x91] sm:$0xff] %v1924
        %2012 = vst [vmem:[%s1998 + $0x99] sm:$0xff] %v1925
        %2013 = vst [vmem:[%s1998 + $0xa9] sm:$0xff] %v1926
        %2014 = vst [vmem:[%s1998 + $0xb1] sm:$0xff] %v1927
        %2015 = vst [vmem:[%s1998 + $0xc1] sm:$0xff] %v1928
        %2016 = vst [vmem:[%s1998 + $0xc9] sm:$0xff] %v1929
        %2017 = vst [vmem:[%s1998 + $0xd9] sm:$0xff] %v1930
        %2018 = vst [vmem:[%s1998 + $0xe1] sm:$0xff] %v1931
        %2019 = vst [vmem:[%s1998 + $0xf1] sm:$0xff] %v1932
        %2020 = vst [vmem:[%s1998 + $0xf9] sm:$0xff] %v1933
        %2021 = vst [vmem:[%s1998 + $0x109] sm:$0xff] %v1934
        %2022 = vst [vmem:[%s1998 + $0x111] sm:$0xff] %v1935
        %2023 = vst [vmem:[%s1998 + $0x121] sm:$0xff] %v1936
        %2024 = vst [vmem:[%s1998 + $0x129] sm:$0xff] %v1937
        %2025 = vst [vmem:[%s1998 + $0x139] sm:$0xff] %v1938
        %2026 = vst [vmem:[%s1998 + $0x141] sm:$0xff] %v1939
        %2027 = vst [vmem:[%s1998 + $0x151] sm:$0xff] %v1940
        %2028 = vst [vmem:[%s1998 + $0x159] sm:$0xff] %v1941
        %2029 = vst [vmem:[%s1998 + $0x169] sm:$0xff] %v1942
        %2030 = vst [vmem:[%s1998 + $0x171] sm:$0xff] %v1943
        %v2031 = vld [vmem:[#allocation3] sm:$0xff]
        %v2032 = vld [vmem:[#allocation3 + $0x8] sm:$0xff]
        %v2033 = vld [vmem:[#allocation3 + $0x10] sm:$0xff]
        %v2034 = vld [vmem:[#allocation3 + $0x18] sm:$0xff]
        %v2035 = vld [vmem:[#allocation3 + $0x20] sm:$0xff]
        %v2036 = vld [vmem:[#allocation3 + $0x28] sm:$0xff]
        %v2037 = vld [vmem:[#allocation3 + $0x30] sm:$0xff]
        %v2038 = vld [vmem:[#allocation3 + $0x38] sm:$0xff]
        %v2039 = vld [vmem:[#allocation3 + $0x40] sm:$0xff]
        %v2040 = vld [vmem:[#allocation3 + $0x48] sm:$0xff]
        %v2041 = vld [vmem:[#allocation3 + $0x50] sm:$0xff]
        %v2042 = vld [vmem:[#allocation3 + $0x58] sm:$0xff]
        %v2043 = vld [vmem:[#allocation3 + $0x60] sm:$0xff]
        %v2044 = vld [vmem:[#allocation3 + $0x68] sm:$0xff]
        %v2045 = vld [vmem:[#allocation3 + $0x70] sm:$0xff]
        %v2046 = vld [vmem:[#allocation3 + $0x78] sm:$0xff]
        %v2047 = vld [vmem:[#allocation3 + $0x80] sm:$0xff]
        %v2048 = vld [vmem:[#allocation3 + $0x88] sm:$0xff]
        %v2049 = vld [vmem:[#allocation3 + $0x90] sm:$0xff]
        %v2050 = vld [vmem:[#allocation3 + $0x98] sm:$0xff]
        %v2051 = vld [vmem:[#allocation3 + $0xa0] sm:$0xff]
        %v2052 = vld [vmem:[#allocation3 + $0xa8] sm:$0xff]
        %v2053 = vld [vmem:[#allocation3 + $0xb0] sm:$0xff]
        %v2054 = vld [vmem:[#allocation3 + $0xb8] sm:$0xff]
        %v2055 = vld [vmem:[#allocation3 + $0xc0] sm:$0xff]
        %v2056 = vld [vmem:[#allocation3 + $0xc8] sm:$0xff]
        %v2057 = vld [vmem:[#allocation3 + $0xd0] sm:$0xff]
        %v2058 = vld [vmem:[#allocation3 + $0xd8] sm:$0xff]
        %v2059 = vld [vmem:[#allocation3 + $0xe0] sm:$0xff]
        %v2060 = vld [vmem:[#allocation3 + $0xe8] sm:$0xff]
        %v2061 = vld [vmem:[#allocation3 + $0xf0] sm:$0xff]
        %v2062 = vld [vmem:[#allocation3 + $0xf8] sm:$0xff]
        %v2063 = vld [vmem:[#allocation3 + $0x100] sm:$0xff]
        %v2064 = vld [vmem:[#allocation3 + $0x108] sm:$0xff]
        %v2065 = vld [vmem:[#allocation3 + $0x110] sm:$0xff]
        %v2066 = vld [vmem:[#allocation3 + $0x118] sm:$0xff]
        %v2067 = vld [vmem:[#allocation3 + $0x120] sm:$0xff]
        %v2068 = vld [vmem:[#allocation3 + $0x128] sm:$0xff]
        %v2069 = vld [vmem:[#allocation3 + $0x130] sm:$0xff]
        %v2070 = vld [vmem:[#allocation3 + $0x138] sm:$0xff]
        %v2071 = vld [vmem:[#allocation3 + $0x140] sm:$0xff]
        %v2072 = vld [vmem:[#allocation3 + $0x148] sm:$0xff]
        %v2073 = vld [vmem:[#allocation3 + $0x150] sm:$0xff]
        %v2074 = vld [vmem:[#allocation3 + $0x158] sm:$0xff]
        %v2075 = vld [vmem:[#allocation3 + $0x160] sm:$0xff]
        %v2076 = vld [vmem:[#allocation3 + $0x168] sm:$0xff]
        %v2077 = vld [vmem:[#allocation3 + $0x170] sm:$0xff]
        %v2078 = vld [vmem:[#allocation3 + $0x178] sm:$0xff]
        %v2079 = vld [vmem:[#allocation3 + $0x180] sm:$0xff]
        %v2080 = vld [vmem:[#allocation3 + $0x188] sm:$0xff]
        %v2081 = vld [vmem:[#allocation3 + $0x190] sm:$0xff]
        %v2082 = vld [vmem:[#allocation3 + $0x198] sm:$0xff]
        %v2083 = vld [vmem:[#allocation3 + $0x1a0] sm:$0xff]
        %v2084 = vld [vmem:[#allocation3 + $0x1a8] sm:$0xff]
        %v2085 = vld [vmem:[#allocation3 + $0x1b0] sm:$0xff]
        %v2086 = vld [vmem:[#allocation3 + $0x1b8] sm:$0xff]
        %v2087 = vld [vmem:[#allocation3 + $0x1c0] sm:$0xff]
        %v2088 = vld [vmem:[#allocation3 + $0x1c8] sm:$0xff]
        %v2089 = vld [vmem:[#allocation3 + $0x1d0] sm:$0xff]
        %v2090 = vld [vmem:[#allocation3 + $0x1d8] sm:$0xff]
        %v2091 = vld [vmem:[#allocation3 + $0x1e0] sm:$0xff]
        %v2092 = vld [vmem:[#allocation3 + $0x1e8] sm:$0xff]
        %v2093 = vld [vmem:[#allocation3 + $0x1f0] sm:$0xff]
        %v2094 = vld [vmem:[#allocation3 + $0x1f8] sm:$0xff]
        %v2095 = vld [vmem:[#allocation3 + $0x200] sm:$0xff]
        %v2096 = vld [vmem:[#allocation3 + $0x208] sm:$0xff]
        %v2097 = vld [vmem:[#allocation3 + $0x210] sm:$0xff]
        %v2098 = vld [vmem:[#allocation3 + $0x218] sm:$0xff]
        %v2099 = vld [vmem:[#allocation3 + $0x220] sm:$0xff]
        %v2100 = vld [vmem:[#allocation3 + $0x228] sm:$0xff]
        %v2101 = vld [vmem:[#allocation3 + $0x230] sm:$0xff]
        %v2102 = vld [vmem:[#allocation3 + $0x238] sm:$0xff]
        %v2103 = vld [vmem:[#allocation3 + $0x240] sm:$0xff]
        %v2104 = vld [vmem:[#allocation3 + $0x248] sm:$0xff]
        %v2105 = vld [vmem:[#allocation3 + $0x250] sm:$0xff]
        %v2106 = vld [vmem:[#allocation3 + $0x258] sm:$0xff]
        %v2107 = vld [vmem:[#allocation3 + $0x260] sm:$0xff]
        %v2108 = vld [vmem:[#allocation3 + $0x268] sm:$0xff]
        %v2109 = vld [vmem:[#allocation3 + $0x270] sm:$0xff]
        %v2110 = vld [vmem:[#allocation3 + $0x278] sm:$0xff]
        %v2111 = vld [vmem:[#allocation3 + $0x280] sm:$0xff]
        %v2112 = vld [vmem:[#allocation3 + $0x288] sm:$0xff]
        %v2113 = vld [vmem:[#allocation3 + $0x290] sm:$0xff]
        %v2114 = vld [vmem:[#allocation3 + $0x298] sm:$0xff]
        %v2115 = vld [vmem:[#allocation3 + $0x2a0] sm:$0xff]
        %v2116 = vld [vmem:[#allocation3 + $0x2a8] sm:$0xff]
        %v2117 = vld [vmem:[#allocation3 + $0x2b0] sm:$0xff]
        %v2118 = vld [vmem:[#allocation3 + $0x2b8] sm:$0xff]
        %v2119 = vld [vmem:[#allocation3 + $0x2c0] sm:$0xff]
        %v2120 = vld [vmem:[#allocation3 + $0x2c8] sm:$0xff]
        %v2121 = vld [vmem:[#allocation3 + $0x2d0] sm:$0xff]
        %v2122 = vld [vmem:[#allocation3 + $0x2d8] sm:$0xff]
        %v2123 = vld [vmem:[#allocation3 + $0x2e0] sm:$0xff]
        %v2124 = vld [vmem:[#allocation3 + $0x2e8] sm:$0xff]
        %v2125 = vld [vmem:[#allocation3 + $0x2f0] sm:$0xff]
        %v2126 = vld [vmem:[#allocation3 + $0x2f8] sm:$0xff]
        %v2127 = vld [vmem:[#allocation3 + $0x300] sm:$0xff]
        %v2128 = vld [vmem:[#allocation3 + $0x308] sm:$0xff]
        %v2129 = vld [vmem:[#allocation3 + $0x310] sm:$0xff]
        %v2130 = vld [vmem:[#allocation3 + $0x318] sm:$0xff]
        %v2131 = vld [vmem:[#allocation3 + $0x320] sm:$0xff]
        %v2132 = vld [vmem:[#allocation3 + $0x328] sm:$0xff]
        %v2133 = vld [vmem:[#allocation3 + $0x330] sm:$0xff]
        %v2134 = vld [vmem:[#allocation3 + $0x338] sm:$0xff]
        %v2135 = vld [vmem:[#allocation3 + $0x340] sm:$0xff]
        %v2136 = vld [vmem:[#allocation3 + $0x348] sm:$0xff]
        %v2137 = vld [vmem:[#allocation3 + $0x350] sm:$0xff]
        %v2138 = vld [vmem:[#allocation3 + $0x358] sm:$0xff]
        %v2139 = vld [vmem:[#allocation3 + $0x360] sm:$0xff]
        %v2140 = vld [vmem:[#allocation3 + $0x368] sm:$0xff]
        %v2141 = vld [vmem:[#allocation3 + $0x370] sm:$0xff]
        %v2142 = vld [vmem:[#allocation3 + $0x378] sm:$0xff]
        %v2143 = vld [vmem:[#allocation3 + $0x380] sm:$0xff]
        %v2144 = vld [vmem:[#allocation3 + $0x388] sm:$0xff]
        %v2145 = vld [vmem:[#allocation3 + $0x390] sm:$0xff]
        %v2146 = vld [vmem:[#allocation3 + $0x398] sm:$0xff]
        %v2147 = vld [vmem:[#allocation3 + $0x3a0] sm:$0xff]
        %v2148 = vld [vmem:[#allocation3 + $0x3a8] sm:$0xff]
        %v2149 = vld [vmem:[#allocation3 + $0x3b0] sm:$0xff]
        %v2150 = vld [vmem:[#allocation3 + $0x3b8] sm:$0xff]
        %v2151 = vld [vmem:[#allocation3 + $0x3c0] sm:$0xff]
        %v2152 = vld [vmem:[#allocation3 + $0x3c8] sm:$0xff]
        %v2153 = vld [vmem:[#allocation3 + $0x3d0] sm:$0xff]
        %v2154 = vld [vmem:[#allocation3 + $0x3d8] sm:$0xff]
        %v2155 = vld [vmem:[#allocation3 + $0x3e0] sm:$0xff]
        %v2156 = vld [vmem:[#allocation3 + $0x3e8] sm:$0xff]
        %v2157 = vld [vmem:[#allocation3 + $0x3f0] sm:$0xff]
        %v2158 = vld [vmem:[#allocation3 + $0x3f8] sm:$0xff]
        %v2159 = vld [vmem:[#allocation3 + $0x400] sm:$0xff]
        %v2160 = vld [vmem:[#allocation3 + $0x408] sm:$0xff]
        %v2161 = vld [vmem:[#allocation3 + $0x410] sm:$0xff]
        %v2162 = vld [vmem:[#allocation3 + $0x418] sm:$0xff]
        %v2163 = vld [vmem:[#allocation3 + $0x420] sm:$0xff]
        %v2164 = vld [vmem:[#allocation3 + $0x428] sm:$0xff]
        %v2165 = vld [vmem:[#allocation3 + $0x430] sm:$0xff]
        %v2166 = vld [vmem:[#allocation3 + $0x438] sm:$0xff]
        %v2167 = vld [vmem:[#allocation3 + $0x440] sm:$0xff]
        %v2168 = vld [vmem:[#allocation3 + $0x448] sm:$0xff]
        %v2169 = vld [vmem:[#allocation3 + $0x450] sm:$0xff]
        %v2170 = vld [vmem:[#allocation3 + $0x458] sm:$0xff]
        %v2171 = vld [vmem:[#allocation3 + $0x460] sm:$0xff]
        %v2172 = vld [vmem:[#allocation3 + $0x468] sm:$0xff]
        %v2173 = vld [vmem:[#allocation3 + $0x470] sm:$0xff]
        %v2174 = vld [vmem:[#allocation3 + $0x478] sm:$0xff]
        %v2175 = vld [vmem:[%s4] sm:$0x1]
        %v2176 = vld [vmem:[#allocation2] sm:$0xff]
        %v2177 = vld [vmem:[#allocation2 + $0x8] sm:$0xff]
        %v2178 = vld [vmem:[#allocation2 + $0x18] sm:$0xff]
        %v2179 = vld [vmem:[#allocation2 + $0x20] sm:$0xff]
        %v2180 = vld [vmem:[#allocation2 + $0x30] sm:$0xff]
        %v2181 = vld [vmem:[#allocation2 + $0x38] sm:$0xff]
        %v2182 = vld [vmem:[#allocation2 + $0x48] sm:$0xff]
        %v2183 = vld [vmem:[#allocation2 + $0x50] sm:$0xff]
        %v2184 = vld [vmem:[#allocation2 + $0x60] sm:$0xff]
        %v2185 = vld [vmem:[#allocation2 + $0x68] sm:$0xff]
        %v2186 = vld [vmem:[#allocation2 + $0x78] sm:$0xff]
        %v2187 = vld [vmem:[#allocation2 + $0x80] sm:$0xff]
        %v2188 = vld [vmem:[#allocation2 + $0x90] sm:$0xff]
        %v2189 = vld [vmem:[#allocation2 + $0x98] sm:$0xff]
        %v2190 = vld [vmem:[#allocation2 + $0xa8] sm:$0xff]
        %v2191 = vld [vmem:[#allocation2 + $0xb0] sm:$0xff]
        %v2192 = vld [vmem:[#allocation2 + $0xc0] sm:$0xff]
        %v2193 = vld [vmem:[#allocation2 + $0xc8] sm:$0xff]
        %v2194 = vld [vmem:[#allocation2 + $0xd8] sm:$0xff]
        %v2195 = vld [vmem:[#allocation2 + $0xe0] sm:$0xff]
        %v2196 = vld [vmem:[#allocation2 + $0xf0] sm:$0xff]
        %v2197 = vld [vmem:[#allocation2 + $0xf8] sm:$0xff]
        %v2198 = vld [vmem:[#allocation2 + $0x108] sm:$0xff]
        %v2199 = vld [vmem:[#allocation2 + $0x110] sm:$0xff]
        %v2200 = vld [vmem:[#allocation2 + $0x120] sm:$0xff]
        %v2201 = vld [vmem:[#allocation2 + $0x128] sm:$0xff]
        %v2202 = vld [vmem:[#allocation2 + $0x138] sm:$0xff]
        %v2203 = vld [vmem:[#allocation2 + $0x140] sm:$0xff]
        %v2204 = vld [vmem:[#allocation2 + $0x150] sm:$0xff]
        %v2205 = vld [vmem:[#allocation2 + $0x158] sm:$0xff]
        %v2206 = vld [vmem:[#allocation2 + $0x168] sm:$0xff]
        %v2207 = vld [vmem:[#allocation2 + $0x170] sm:$0xff]
        %v2208 = vld [vmem:[#allocation2 + $0x1] sm:$0xff]
        %v2209 = vld [vmem:[#allocation2 + $0x9] sm:$0xff]
        %v2210 = vld [vmem:[#allocation2 + $0x19] sm:$0xff]
        %v2211 = vld [vmem:[#allocation2 + $0x21] sm:$0xff]
        %v2212 = vld [vmem:[#allocation2 + $0x31] sm:$0xff]
        %v2213 = vld [vmem:[#allocation2 + $0x39] sm:$0xff]
        %v2214 = vld [vmem:[#allocation2 + $0x49] sm:$0xff]
        %v2215 = vld [vmem:[#allocation2 + $0x51] sm:$0xff]
        %v2216 = vld [vmem:[#allocation2 + $0x61] sm:$0xff]
        %v2217 = vld [vmem:[#allocation2 + $0x69] sm:$0xff]
        %v2218 = vld [vmem:[#allocation2 + $0x79] sm:$0xff]
        %v2219 = vld [vmem:[#allocation2 + $0x81] sm:$0xff]
        %v2220 = vld [vmem:[#allocation2 + $0x91] sm:$0xff]
        %v2221 = vld [vmem:[#allocation2 + $0x99] sm:$0xff]
        %v2222 = vld [vmem:[#allocation2 + $0xa9] sm:$0xff]
        %v2223 = vld [vmem:[#allocation2 + $0xb1] sm:$0xff]
        %v2224 = vld [vmem:[#allocation2 + $0xc1] sm:$0xff]
        %v2225 = vld [vmem:[#allocation2 + $0xc9] sm:$0xff]
        %v2226 = vld [vmem:[#allocation2 + $0xd9] sm:$0xff]
        %v2227 = vld [vmem:[#allocation2 + $0xe1] sm:$0xff]
        %v2228 = vld [vmem:[#allocation2 + $0xf1] sm:$0xff]
        %v2229 = vld [vmem:[#allocation2 + $0xf9] sm:$0xff]
        %v2230 = vld [vmem:[#allocation2 + $0x109] sm:$0xff]
        %v2231 = vld [vmem:[#allocation2 + $0x111] sm:$0xff]
        %v2232 = vld [vmem:[#allocation2 + $0x121] sm:$0xff]
        %v2233 = vld [vmem:[#allocation2 + $0x129] sm:$0xff]
        %v2234 = vld [vmem:[#allocation2 + $0x139] sm:$0xff]
        %v2235 = vld [vmem:[#allocation2 + $0x141] sm:$0xff]
        %v2236 = vld [vmem:[#allocation2 + $0x151] sm:$0xff]
        %v2237 = vld [vmem:[#allocation2 + $0x159] sm:$0xff]
        %v2238 = vld [vmem:[#allocation2 + $0x169] sm:$0xff]
        %v2239 = vld [vmem:[#allocation2 + $0x171] sm:$0xff]
        %v2240 = vld [vmem:[#allocation2 + $0x2] sm:$0xff]
        %v2241 = vld [vmem:[#allocation2 + $0xa] sm:$0xff]
        %v2242 = vld [vmem:[#allocation2 + $0x1a] sm:$0xff]
        %v2243 = vld [vmem:[#allocation2 + $0x22] sm:$0xff]
        %v2244 = vld [vmem:[#allocation2 + $0x32] sm:$0xff]
        %v2245 = vld [vmem:[#allocation2 + $0x3a] sm:$0xff]
        %v2246 = vld [vmem:[#allocation2 + $0x4a] sm:$0xff]
        %v2247 = vld [vmem:[#allocation2 + $0x52] sm:$0xff]
        %v2248 = vld [vmem:[#allocation2 + $0x62] sm:$0xff]
        %v2249 = vld [vmem:[#allocation2 + $0x6a] sm:$0xff]
        %v2250 = vld [vmem:[#allocation2 + $0x7a] sm:$0xff]
        %v2251 = vld [vmem:[#allocation2 + $0x82] sm:$0xff]
        %v2252 = vld [vmem:[#allocation2 + $0x92] sm:$0xff]
        %v2253 = vld [vmem:[#allocation2 + $0x9a] sm:$0xff]
        %v2254 = vld [vmem:[#allocation2 + $0xaa] sm:$0xff]
        %v2255 = vld [vmem:[#allocation2 + $0xb2] sm:$0xff]
        %v2256 = vld [vmem:[#allocation2 + $0xc2] sm:$0xff]
        %v2257 = vld [vmem:[#allocation2 + $0xca] sm:$0xff]
        %v2258 = vld [vmem:[#allocation2 + $0xda] sm:$0xff]
        %v2259 = vld [vmem:[#allocation2 + $0xe2] sm:$0xff]
        %v2260 = vld [vmem:[#allocation2 + $0xf2] sm:$0xff]
        %v2261 = vld [vmem:[#allocation2 + $0xfa] sm:$0xff]
        %v2262 = vld [vmem:[#allocation2 + $0x10a] sm:$0xff]
        %v2263 = vld [vmem:[#allocation2 + $0x112] sm:$0xff]
        %v2264 = vld [vmem:[#allocation2 + $0x122] sm:$0xff]
        %v2265 = vld [vmem:[#allocation2 + $0x12a] sm:$0xff]
        %v2266 = vld [vmem:[#allocation2 + $0x13a] sm:$0xff]
        %v2267 = vld [vmem:[#allocation2 + $0x142] sm:$0xff]
        %v2268 = vld [vmem:[#allocation2 + $0x152] sm:$0xff]
        %v2269 = vld [vmem:[#allocation2 + $0x15a] sm:$0xff]
        %v2270 = vld [vmem:[#allocation2 + $0x16a] sm:$0xff]
        %v2271 = vld [vmem:[#allocation2 + $0x172] sm:$0xff]
        %v2272 = vld [vmem:[%s1998] sm:$0xff]
        %v2273 = vld [vmem:[%s1998 + $0x8] sm:$0xff]
        %v2274 = vld [vmem:[%s1998 + $0x18] sm:$0xff]
        %v2275 = vld [vmem:[%s1998 + $0x20] sm:$0xff]
        %v2276 = vld [vmem:[%s1998 + $0x30] sm:$0xff]
        %v2277 = vld [vmem:[%s1998 + $0x38] sm:$0xff]
        %v2278 = vld [vmem:[%s1998 + $0x48] sm:$0xff]
        %v2279 = vld [vmem:[%s1998 + $0x50] sm:$0xff]
        %v2280 = vld [vmem:[%s1998 + $0x60] sm:$0xff]
        %v2281 = vld [vmem:[%s1998 + $0x68] sm:$0xff]
        %v2282 = vld [vmem:[%s1998 + $0x78] sm:$0xff]
        %v2283 = vld [vmem:[%s1998 + $0x80] sm:$0xff]
        %v2284 = vld [vmem:[%s1998 + $0x90] sm:$0xff]
        %v2285 = vld [vmem:[%s1998 + $0x98] sm:$0xff]
        %v2286 = vld [vmem:[%s1998 + $0xa8] sm:$0xff]
        %v2287 = vld [vmem:[%s1998 + $0xb0] sm:$0xff]
        %v2288 = vld [vmem:[%s1998 + $0xc0] sm:$0xff]
        %v2289 = vld [vmem:[%s1998 + $0xc8] sm:$0xff]
        %v2290 = vld [vmem:[%s1998 + $0xd8] sm:$0xff]
        %v2291 = vld [vmem:[%s1998 + $0xe0] sm:$0xff]
        %v2292 = vld [vmem:[%s1998 + $0xf0] sm:$0xff]
        %v2293 = vld [vmem:[%s1998 + $0xf8] sm:$0xff]
        %v2294 = vld [vmem:[%s1998 + $0x108] sm:$0xff]
        %v2295 = vld [vmem:[%s1998 + $0x110] sm:$0xff]
        %v2296 = vld [vmem:[%s1998 + $0x120] sm:$0xff]
        %v2297 = vld [vmem:[%s1998 + $0x128] sm:$0xff]
        %v2298 = vld [vmem:[%s1998 + $0x138] sm:$0xff]
        %v2299 = vld [vmem:[%s1998 + $0x140] sm:$0xff]
        %v2300 = vld [vmem:[%s1998 + $0x150] sm:$0xff]
        %v2301 = vld [vmem:[%s1998 + $0x158] sm:$0xff]
        %v2302 = vld [vmem:[%s1998 + $0x168] sm:$0xff]
        %v2303 = vld [vmem:[%s1998 + $0x170] sm:$0xff]
        %v2304 = vld [vmem:[%s1998 + $0x1] sm:$0xff]
        %v2305 = vld [vmem:[%s1998 + $0x9] sm:$0xff]
        %v2306 = vld [vmem:[%s1998 + $0x19] sm:$0xff]
        %v2307 = vld [vmem:[%s1998 + $0x21] sm:$0xff]
        %v2308 = vld [vmem:[%s1998 + $0x31] sm:$0xff]
        %v2309 = vld [vmem:[%s1998 + $0x39] sm:$0xff]
        %v2310 = vld [vmem:[%s1998 + $0x49] sm:$0xff]
        %v2311 = vld [vmem:[%s1998 + $0x51] sm:$0xff]
        %v2312 = vld [vmem:[%s1998 + $0x61] sm:$0xff]
        %v2313 = vld [vmem:[%s1998 + $0x69] sm:$0xff]
        %v2314 = vld [vmem:[%s1998 + $0x79] sm:$0xff]
        %v2315 = vld [vmem:[%s1998 + $0x81] sm:$0xff]
        %v2316 = vld [vmem:[%s1998 + $0x91] sm:$0xff]
        %v2317 = vld [vmem:[%s1998 + $0x99] sm:$0xff]
        %v2318 = vld [vmem:[%s1998 + $0xa9] sm:$0xff]
        %v2319 = vld [vmem:[%s1998 + $0xb1] sm:$0xff]
        %v2320 = vld [vmem:[%s1998 + $0xc1] sm:$0xff]
        %v2321 = vld [vmem:[%s1998 + $0xc9] sm:$0xff]
        %v2322 = vld [vmem:[%s1998 + $0xd9] sm:$0xff]
        %v2323 = vld [vmem:[%s1998 + $0xe1] sm:$0xff]
        %v2324 = vld [vmem:[%s1998 + $0xf1] sm:$0xff]
        %v2325 = vld [vmem:[%s1998 + $0xf9] sm:$0xff]
        %v2326 = vld [vmem:[%s1998 + $0x109] sm:$0xff]
        %v2327 = vld [vmem:[%s1998 + $0x111] sm:$0xff]
        %v2328 = vld [vmem:[%s1998 + $0x121] sm:$0xff]
        %v2329 = vld [vmem:[%s1998 + $0x129] sm:$0xff]
        %v2330 = vld [vmem:[%s1998 + $0x139] sm:$0xff]
        %v2331 = vld [vmem:[%s1998 + $0x141] sm:$0xff]
        %v2332 = vld [vmem:[%s1998 + $0x151] sm:$0xff]
        %v2333 = vld [vmem:[%s1998 + $0x159] sm:$0xff]
        %v2334 = vld [vmem:[%s1998 + $0x169] sm:$0xff]
        %v2335 = vld [vmem:[%s1998 + $0x171] sm:$0xff]
        %v2336 = vld [vmem:[%s1998 + $0x2] sm:$0xff]
        %v2337 = vld [vmem:[%s1998 + $0xa] sm:$0xff]
        %v2338 = vld [vmem:[%s1998 + $0x1a] sm:$0xff]
        %v2339 = vld [vmem:[%s1998 + $0x22] sm:$0xff]
        %v2340 = vld [vmem:[%s1998 + $0x32] sm:$0xff]
        %v2341 = vld [vmem:[%s1998 + $0x3a] sm:$0xff]
        %v2342 = vld [vmem:[%s1998 + $0x4a] sm:$0xff]
        %v2343 = vld [vmem:[%s1998 + $0x52] sm:$0xff]
        %v2344 = vld [vmem:[%s1998 + $0x62] sm:$0xff]
        %v2345 = vld [vmem:[%s1998 + $0x6a] sm:$0xff]
        %v2346 = vld [vmem:[%s1998 + $0x7a] sm:$0xff]
        %v2347 = vld [vmem:[%s1998 + $0x82] sm:$0xff]
        %v2348 = vld [vmem:[%s1998 + $0x92] sm:$0xff]
        %v2349 = vld [vmem:[%s1998 + $0x9a] sm:$0xff]
        %v2350 = vld [vmem:[%s1998 + $0xaa] sm:$0xff]
        %v2351 = vld [vmem:[%s1998 + $0xb2] sm:$0xff]
        %v2352 = vld [vmem:[%s1998 + $0xc2] sm:$0xff]
        %v2353 = vld [vmem:[%s1998 + $0xca] sm:$0xff]
        %v2354 = vld [vmem:[%s1998 + $0xda] sm:$0xff]
        %v2355 = vld [vmem:[%s1998 + $0xe2] sm:$0xff]
        %v2356 = vld [vmem:[%s1998 + $0xf2] sm:$0xff]
        %v2357 = vld [vmem:[%s1998 + $0xfa] sm:$0xff]
        %v2358 = vld [vmem:[%s1998 + $0x10a] sm:$0xff]
        %v2359 = vld [vmem:[%s1998 + $0x112] sm:$0xff]
        %v2360 = vld [vmem:[%s1998 + $0x122] sm:$0xff]
        %v2361 = vld [vmem:[%s1998 + $0x12a] sm:$0xff]
        %v2362 = vld [vmem:[%s1998 + $0x13a] sm:$0xff]
        %v2363 = vld [vmem:[%s1998 + $0x142] sm:$0xff]
        %v2364 = vld [vmem:[%s1998 + $0x152] sm:$0xff]
        %v2365 = vld [vmem:[%s1998 + $0x15a] sm:$0xff]
        %v2366 = vld [vmem:[%s1998 + $0x16a] sm:$0xff]
        %v2367 = vld [vmem:[%s1998 + $0x172] sm:$0xff]
        %s2368 = scalar_lea.vmem [#allocation2], 48
        %v2369 = vld [vmem:[%s2368] sm:$0xff]
        %v2370 = vld [vmem:[%s2368 + $0x8] sm:$0xff]
        %v2371 = vld [vmem:[%s2368 + $0x18] sm:$0xff]
        %v2372 = vld [vmem:[%s2368 + $0x20] sm:$0xff]
        %v2373 = vld [vmem:[%s2368 + $0x30] sm:$0xff]
        %v2374 = vld [vmem:[%s2368 + $0x38] sm:$0xff]
        %v2375 = vld [vmem:[%s2368 + $0x48] sm:$0xff]
        %v2376 = vld [vmem:[%s2368 + $0x50] sm:$0xff]
        %v2377 = vld [vmem:[%s2368 + $0x60] sm:$0xff]
        %v2378 = vld [vmem:[%s2368 + $0x68] sm:$0xff]
        %v2379 = vld [vmem:[%s2368 + $0x78] sm:$0xff]
        %v2380 = vld [vmem:[%s2368 + $0x80] sm:$0xff]
        %v2381 = vld [vmem:[%s2368 + $0x90] sm:$0xff]
        %v2382 = vld [vmem:[%s2368 + $0x98] sm:$0xff]
        %v2383 = vld [vmem:[%s2368 + $0xa8] sm:$0xff]
        %v2384 = vld [vmem:[%s2368 + $0xb0] sm:$0xff]
        %v2385 = vld [vmem:[%s2368 + $0xc0] sm:$0xff]
        %v2386 = vld [vmem:[%s2368 + $0xc8] sm:$0xff]
        %v2387 = vld [vmem:[%s2368 + $0xd8] sm:$0xff]
        %v2388 = vld [vmem:[%s2368 + $0xe0] sm:$0xff]
        %v2389 = vld [vmem:[%s2368 + $0xf0] sm:$0xff]
        %v2390 = vld [vmem:[%s2368 + $0xf8] sm:$0xff]
        %v2391 = vld [vmem:[%s2368 + $0x108] sm:$0xff]
        %v2392 = vld [vmem:[%s2368 + $0x110] sm:$0xff]
        %v2393 = vld [vmem:[%s2368 + $0x120] sm:$0xff]
        %v2394 = vld [vmem:[%s2368 + $0x128] sm:$0xff]
        %v2395 = vld [vmem:[%s2368 + $0x138] sm:$0xff]
        %v2396 = vld [vmem:[%s2368 + $0x140] sm:$0xff]
        %v2397 = vld [vmem:[%s2368 + $0x150] sm:$0xff]
        %v2398 = vld [vmem:[%s2368 + $0x158] sm:$0xff]
        %v2399 = vld [vmem:[%s2368 + $0x168] sm:$0xff]
        %v2400 = vld [vmem:[%s2368 + $0x170] sm:$0xff]
        %v2401 = vld [vmem:[%s2368 + $0x1] sm:$0xff]
        %v2402 = vld [vmem:[%s2368 + $0x9] sm:$0xff]
        %v2403 = vld [vmem:[%s2368 + $0x19] sm:$0xff]
        %v2404 = vld [vmem:[%s2368 + $0x21] sm:$0xff]
        %v2405 = vld [vmem:[%s2368 + $0x31] sm:$0xff]
        %v2406 = vld [vmem:[%s2368 + $0x39] sm:$0xff]
        %v2407 = vld [vmem:[%s2368 + $0x49] sm:$0xff]
        %v2408 = vld [vmem:[%s2368 + $0x51] sm:$0xff]
        %v2409 = vld [vmem:[%s2368 + $0x61] sm:$0xff]
        %v2410 = vld [vmem:[%s2368 + $0x69] sm:$0xff]
        %v2411 = vld [vmem:[%s2368 + $0x79] sm:$0xff]
        %v2412 = vld [vmem:[%s2368 + $0x81] sm:$0xff]
        %v2413 = vld [vmem:[%s2368 + $0x91] sm:$0xff]
        %v2414 = vld [vmem:[%s2368 + $0x99] sm:$0xff]
        %v2415 = vld [vmem:[%s2368 + $0xa9] sm:$0xff]
        %v2416 = vld [vmem:[%s2368 + $0xb1] sm:$0xff]
        %v2417 = vld [vmem:[%s2368 + $0xc1] sm:$0xff]
        %v2418 = vld [vmem:[%s2368 + $0xc9] sm:$0xff]
        %v2419 = vld [vmem:[%s2368 + $0xd9] sm:$0xff]
        %v2420 = vld [vmem:[%s2368 + $0xe1] sm:$0xff]
        %v2421 = vld [vmem:[%s2368 + $0xf1] sm:$0xff]
        %v2422 = vld [vmem:[%s2368 + $0xf9] sm:$0xff]
        %v2423 = vld [vmem:[%s2368 + $0x109] sm:$0xff]
        %v2424 = vld [vmem:[%s2368 + $0x111] sm:$0xff]
        %v2425 = vld [vmem:[%s2368 + $0x121] sm:$0xff]
        %v2426 = vld [vmem:[%s2368 + $0x129] sm:$0xff]
        %v2427 = vld [vmem:[%s2368 + $0x139] sm:$0xff]
        %v2428 = vld [vmem:[%s2368 + $0x141] sm:$0xff]
        %v2429 = vld [vmem:[%s2368 + $0x151] sm:$0xff]
        %v2430 = vld [vmem:[%s2368 + $0x159] sm:$0xff]
        %v2431 = vld [vmem:[%s2368 + $0x169] sm:$0xff]
        %v2432 = vld [vmem:[%s2368 + $0x171] sm:$0xff]
        %v2433 = vld [vmem:[%s2368 + $0x2] sm:$0xff]
        %v2434 = vld [vmem:[%s2368 + $0xa] sm:$0xff]
        %v2435 = vld [vmem:[%s2368 + $0x1a] sm:$0xff]
        %v2436 = vld [vmem:[%s2368 + $0x22] sm:$0xff]
        %v2437 = vld [vmem:[%s2368 + $0x32] sm:$0xff]
        %v2438 = vld [vmem:[%s2368 + $0x3a] sm:$0xff]
        %v2439 = vld [vmem:[%s2368 + $0x4a] sm:$0xff]
        %v2440 = vld [vmem:[%s2368 + $0x52] sm:$0xff]
        %v2441 = vld [vmem:[%s2368 + $0x62] sm:$0xff]
        %v2442 = vld [vmem:[%s2368 + $0x6a] sm:$0xff]
        %v2443 = vld [vmem:[%s2368 + $0x7a] sm:$0xff]
        %v2444 = vld [vmem:[%s2368 + $0x82] sm:$0xff]
        %v2445 = vld [vmem:[%s2368 + $0x92] sm:$0xff]
        %v2446 = vld [vmem:[%s2368 + $0x9a] sm:$0xff]
        %v2447 = vld [vmem:[%s2368 + $0xaa] sm:$0xff]
        %v2448 = vld [vmem:[%s2368 + $0xb2] sm:$0xff]
        %v2449 = vld [vmem:[%s2368 + $0xc2] sm:$0xff]
        %v2450 = vld [vmem:[%s2368 + $0xca] sm:$0xff]
        %v2451 = vld [vmem:[%s2368 + $0xda] sm:$0xff]
        %v2452 = vld [vmem:[%s2368 + $0xe2] sm:$0xff]
        %v2453 = vld [vmem:[%s2368 + $0xf2] sm:$0xff]
        %v2454 = vld [vmem:[%s2368 + $0xfa] sm:$0xff]
        %v2455 = vld [vmem:[%s2368 + $0x10a] sm:$0xff]
        %v2456 = vld [vmem:[%s2368 + $0x112] sm:$0xff]
        %v2457 = vld [vmem:[%s2368 + $0x122] sm:$0xff]
        %v2458 = vld [vmem:[%s2368 + $0x12a] sm:$0xff]
        %v2459 = vld [vmem:[%s2368 + $0x13a] sm:$0xff]
        %v2460 = vld [vmem:[%s2368 + $0x142] sm:$0xff]
        %v2461 = vld [vmem:[%s2368 + $0x152] sm:$0xff]
        %v2462 = vld [vmem:[%s2368 + $0x15a] sm:$0xff]
        %v2463 = vld [vmem:[%s2368 + $0x16a] sm:$0xff]
        %v2464 = vld [vmem:[%s2368 + $0x172] sm:$0xff]
        %v2466 = vlaneseq
        %v2467 = vshrl.u32 %v2466, 7
        %v2468 = vsub.s32 0, %v2467
        %v2469 = vrot.slane %v2175, %v2468
        %2471 = vmatprep.subr.mxu0 0.0
        %2472 = vmatpush1.msra.mxu0 %v2046
        %2473 = vmatprep.subr.mxu0 0.0
        %2474 = vmatpush1.msra.mxu0 %v2045
        %2475 = vmatprep.subr.mxu0 0.0
        %2476 = vmatpush1.msra.mxu0 %v2044
        %2477 = vmatprep.subr.mxu0 0.0
        %2478 = vmatpush1.msra.mxu0 %v2043
        %2479 = vmatprep.subr.mxu0 0.0
        %2480 = vmatpush1.msra.mxu0 %v2042
        %2481 = vmatprep.subr.mxu0 0.0
        %2482 = vmatpush1.msra.mxu0 %v2041
        %2483 = vmatprep.subr.mxu0 0.0
        %2484 = vmatpush1.msra.mxu0 %v2040
        %2485 = vmatprep.subr.mxu0 0.0
        %2486 = vmatpush1.msra.mxu0 %v2039
        %2487 = vmatprep.subr.mxu0 0.0
        %2488 = vmatpush1.msra.mxu0 %v2038
        %2489 = vmatprep.subr.mxu0 0.0
        %2490 = vmatpush1.msra.mxu0 %v2037
        %2491 = vmatprep.subr.mxu0 0.0
        %2492 = vmatpush1.msra.mxu0 %v2036
        %2493 = vmatprep.subr.mxu0 0.0
        %2494 = vmatpush1.msra.mxu0 %v2035
        %2495 = vmatprep.subr.mxu0 0.0
        %2496 = vmatpush1.msra.mxu0 %v2034
        %2497 = vmatprep.subr.mxu0 0.0
        %2498 = vmatpush1.msra.mxu0 %v2033
        %2499 = vmatprep.subr.mxu0 0.0
        %2500 = vmatpush1.msra.mxu0 %v2032
        %2501 = vmatprep.subr.mxu0 0.0
        %2502 = vmatpush1.msra.mxu0 %v2031
        %2503 = vmatprep.subr.mxu0 0.0
        %2504 = vmatpush2.msra.mxu0 %v2062
        %2505 = vmatprep.subr.mxu0 0.0
        %2506 = vmatpush2.msra.mxu0 %v2061
        %2507 = vmatprep.subr.mxu0 0.0
        %2508 = vmatpush2.msra.mxu0 %v2060
        %2509 = vmatprep.subr.mxu0 0.0
        %2510 = vmatpush2.msra.mxu0 %v2059
        %2511 = vmatprep.subr.mxu0 0.0
        %2512 = vmatpush2.msra.mxu0 %v2058
        %2513 = vmatprep.subr.mxu0 0.0
        %2514 = vmatpush2.msra.mxu0 %v2057
        %2515 = vmatprep.subr.mxu0 0.0
        %2516 = vmatpush2.msra.mxu0 %v2056
        %2517 = vmatprep.subr.mxu0 0.0
        %2518 = vmatpush2.msra.mxu0 %v2055
        %2519 = vmatprep.subr.mxu0 0.0
        %2520 = vmatpush2.msra.mxu0 %v2054
        %2521 = vmatprep.subr.mxu0 0.0
        %2522 = vmatpush2.msra.mxu0 %v2053
        %2523 = vmatprep.subr.mxu0 0.0
        %2524 = vmatpush2.msra.mxu0 %v2052
        %2525 = vmatprep.subr.mxu0 0.0
        %2526 = vmatpush2.msra.mxu0 %v2051
        %2527 = vmatprep.subr.mxu0 0.0
        %2528 = vmatpush2.msra.mxu0 %v2050
        %2529 = vmatprep.subr.mxu0 0.0
        %2530 = vmatpush2.msra.mxu0 %v2049
        %2531 = vmatprep.subr.mxu0 0.0
        %2532 = vmatpush2.msra.mxu0 %v2048
        %2533 = vmatprep.subr.mxu0 0.0
        %2534 = vmatpush2.msra.mxu0 %v2047
        %2535 = vmatprep.mubr.f32.mxu0 %v2208
        %2536 = vmatmul.mubr.f32.gmra.mxu0 %v2176
        %v2537 = vpop.f32.mrf.mxu0
        %v2538 = vadd.f32 %v2469, %v2537
        %v2539 = vpop.f32.mrf.mxu0
        %2540 = vmatprep.mubr.f32.mxu0 %v2209
        %2541 = vmatmul.mubr.f32.gmra.mxu0 %v2177
        %v2542 = vpop.f32.mrf.mxu0
        %v2543 = vadd.f32 %v2469, %v2542
        %v2544 = vpop.f32.mrf.mxu0
        %2545 = vmatprep.mubr.f32.mxu0 %v2210
        %2546 = vmatmul.mubr.f32.gmra.mxu0 %v2178
        %v2547 = vpop.f32.mrf.mxu0
        %v2548 = vadd.f32 %v2469, %v2547
        %v2549 = vpop.f32.mrf.mxu0
        %2550 = vmatprep.mubr.f32.mxu0 %v2211
        %2551 = vmatmul.mubr.f32.gmra.mxu0 %v2179
        %v2552 = vpop.f32.mrf.mxu0
        %v2553 = vadd.f32 %v2469, %v2552
        %v2554 = vpop.f32.mrf.mxu0
        %2555 = vmatprep.mubr.f32.mxu0 %v2212
        %2556 = vmatmul.mubr.f32.gmra.mxu0 %v2180
        %v2557 = vpop.f32.mrf.mxu0
        %v2558 = vadd.f32 %v2469, %v2557
        %v2559 = vpop.f32.mrf.mxu0
        %2560 = vmatprep.mubr.f32.mxu0 %v2213
        %2561 = vmatmul.mubr.f32.gmra.mxu0 %v2181
        %v2562 = vpop.f32.mrf.mxu0
        %v2563 = vadd.f32 %v2469, %v2562
        %v2564 = vpop.f32.mrf.mxu0
        %2565 = vmatprep.mubr.f32.mxu0 %v2214
        %2566 = vmatmul.mubr.f32.gmra.mxu0 %v2182
        %v2567 = vpop.f32.mrf.mxu0
        %v2568 = vadd.f32 %v2469, %v2567
        %v2569 = vpop.f32.mrf.mxu0
        %2570 = vmatprep.mubr.f32.mxu0 %v2215
        %2571 = vmatmul.mubr.f32.gmra.mxu0 %v2183
        %v2572 = vpop.f32.mrf.mxu0
        %v2573 = vadd.f32 %v2469, %v2572
        %v2574 = vpop.f32.mrf.mxu0
        %2575 = vmatprep.mubr.f32.mxu0 %v2216
        %2576 = vmatmul.mubr.f32.gmra.mxu0 %v2184
        %v2577 = vpop.f32.mrf.mxu0
        %v2578 = vadd.f32 %v2469, %v2577
        %v2579 = vpop.f32.mrf.mxu0
        %2580 = vmatprep.mubr.f32.mxu0 %v2217
        %2581 = vmatmul.mubr.f32.gmra.mxu0 %v2185
        %v2582 = vpop.f32.mrf.mxu0
        %v2583 = vadd.f32 %v2469, %v2582
        %v2584 = vpop.f32.mrf.mxu0
        %2585 = vmatprep.mubr.f32.mxu0 %v2218
        %2586 = vmatmul.mubr.f32.gmra.mxu0 %v2186
        %v2587 = vpop.f32.mrf.mxu0
        %v2588 = vadd.f32 %v2469, %v2587
        %v2589 = vpop.f32.mrf.mxu0
        %2590 = vmatprep.mubr.f32.mxu0 %v2219
        %2591 = vmatmul.mubr.f32.gmra.mxu0 %v2187
        %v2592 = vpop.f32.mrf.mxu0
        %v2593 = vadd.f32 %v2469, %v2592
        %v2594 = vpop.f32.mrf.mxu0
        %2595 = vmatprep.mubr.f32.mxu0 %v2220
        %2596 = vmatmul.mubr.f32.gmra.mxu0 %v2188
        %v2597 = vpop.f32.mrf.mxu0
        %v2598 = vadd.f32 %v2469, %v2597
        %v2599 = vpop.f32.mrf.mxu0
        %2600 = vmatprep.mubr.f32.mxu0 %v2221
        %2601 = vmatmul.mubr.f32.gmra.mxu0 %v2189
        %v2602 = vpop.f32.mrf.mxu0
        %v2603 = vadd.f32 %v2469, %v2602
        %v2604 = vpop.f32.mrf.mxu0
        %2605 = vmatprep.mubr.f32.mxu0 %v2222
        %2606 = vmatmul.mubr.f32.gmra.mxu0 %v2190
        %v2607 = vpop.f32.mrf.mxu0
        %v2608 = vadd.f32 %v2469, %v2607
        %v2609 = vpop.f32.mrf.mxu0
        %2610 = vmatprep.mubr.f32.mxu0 %v2223
        %2611 = vmatmul.mubr.f32.gmra.mxu0 %v2191
        %v2612 = vpop.f32.mrf.mxu0
        %v2613 = vadd.f32 %v2469, %v2612
        %v2614 = vpop.f32.mrf.mxu0
        %2615 = vmatprep.mubr.f32.mxu0 %v2224
        %2616 = vmatmul.mubr.f32.gmra.mxu0 %v2192
        %v2617 = vpop.f32.mrf.mxu0
        %v2618 = vadd.f32 %v2469, %v2617
        %v2619 = vpop.f32.mrf.mxu0
        %2620 = vmatprep.mubr.f32.mxu0 %v2225
        %2621 = vmatmul.mubr.f32.gmra.mxu0 %v2193
        %v2622 = vpop.f32.mrf.mxu0
        %v2623 = vadd.f32 %v2469, %v2622
        %v2624 = vpop.f32.mrf.mxu0
        %2625 = vmatprep.mubr.f32.mxu0 %v2226
        %2626 = vmatmul.mubr.f32.gmra.mxu0 %v2194
        %v2627 = vpop.f32.mrf.mxu0
        %v2628 = vadd.f32 %v2469, %v2627
        %v2629 = vpop.f32.mrf.mxu0
        %2630 = vmatprep.mubr.f32.mxu0 %v2227
        %2631 = vmatmul.mubr.f32.gmra.mxu0 %v2195
        %v2632 = vpop.f32.mrf.mxu0
        %v2633 = vadd.f32 %v2469, %v2632
        %v2634 = vpop.f32.mrf.mxu0
        %2635 = vmatprep.mubr.f32.mxu0 %v2228
        %2636 = vmatmul.mubr.f32.gmra.mxu0 %v2196
        %v2637 = vpop.f32.mrf.mxu0
        %v2638 = vadd.f32 %v2469, %v2637
        %v2639 = vpop.f32.mrf.mxu0
        %2640 = vmatprep.mubr.f32.mxu0 %v2229
        %2641 = vmatmul.mubr.f32.gmra.mxu0 %v2197
        %v2642 = vpop.f32.mrf.mxu0
        %v2643 = vadd.f32 %v2469, %v2642
        %v2644 = vpop.f32.mrf.mxu0
        %2645 = vmatprep.mubr.f32.mxu0 %v2230
        %2646 = vmatmul.mubr.f32.gmra.mxu0 %v2198
        %v2647 = vpop.f32.mrf.mxu0
        %v2648 = vadd.f32 %v2469, %v2647
        %v2649 = vpop.f32.mrf.mxu0
        %2650 = vmatprep.mubr.f32.mxu0 %v2231
        %2651 = vmatmul.mubr.f32.gmra.mxu0 %v2199
        %v2652 = vpop.f32.mrf.mxu0
        %v2653 = vadd.f32 %v2469, %v2652
        %v2654 = vpop.f32.mrf.mxu0
        %2655 = vmatprep.mubr.f32.mxu0 %v2232
        %2656 = vmatmul.mubr.f32.gmra.mxu0 %v2200
        %v2657 = vpop.f32.mrf.mxu0
        %v2658 = vadd.f32 %v2469, %v2657
        %v2659 = vpop.f32.mrf.mxu0
        %2660 = vmatprep.mubr.f32.mxu0 %v2233
        %2661 = vmatmul.mubr.f32.gmra.mxu0 %v2201
        %v2662 = vpop.f32.mrf.mxu0
        %v2663 = vadd.f32 %v2469, %v2662
        %v2664 = vpop.f32.mrf.mxu0
        %2665 = vmatprep.mubr.f32.mxu0 %v2234
        %2666 = vmatmul.mubr.f32.gmra.mxu0 %v2202
        %v2667 = vpop.f32.mrf.mxu0
        %v2668 = vadd.f32 %v2469, %v2667
        %v2669 = vpop.f32.mrf.mxu0
        %2670 = vmatprep.mubr.f32.mxu0 %v2235
        %2671 = vmatmul.mubr.f32.gmra.mxu0 %v2203
        %v2672 = vpop.f32.mrf.mxu0
        %v2673 = vadd.f32 %v2469, %v2672
        %v2674 = vpop.f32.mrf.mxu0
        %2675 = vmatprep.mubr.f32.mxu0 %v2236
        %2676 = vmatmul.mubr.f32.gmra.mxu0 %v2204
        %v2677 = vpop.f32.mrf.mxu0
        %v2678 = vadd.f32 %v2469, %v2677
        %v2679 = vpop.f32.mrf.mxu0
        %2680 = vmatprep.mubr.f32.mxu0 %v2237
        %2681 = vmatmul.mubr.f32.gmra.mxu0 %v2205
        %v2682 = vpop.f32.mrf.mxu0
        %v2683 = vadd.f32 %v2469, %v2682
        %v2684 = vpop.f32.mrf.mxu0
        %2685 = vmatprep.mubr.f32.mxu0 %v2238
        %2686 = vmatmul.mubr.f32.gmra.mxu0 %v2206
        %v2687 = vpop.f32.mrf.mxu0
        %v2688 = vadd.f32 %v2469, %v2687
        %v2689 = vpop.f32.mrf.mxu0
        %2690 = vmatprep.mubr.f32.mxu0 %v2239
        %2691 = vmatmul.mubr.f32.gmra.mxu0 %v2207
        %v2692 = vpop.f32.mrf.mxu0
        %v2693 = vadd.f32 %v2469, %v2692
        %v2694 = vpop.f32.mrf.mxu0
        %2695 = vdwg.mxu0
        %2696 = vmatprep.subr.mxu0 0.0
        %2697 = vmatpush1.msra.mxu0 %v2078
        %2698 = vmatprep.subr.mxu0 0.0
        %2699 = vmatpush1.msra.mxu0 %v2077
        %2700 = vmatprep.subr.mxu0 0.0
        %2701 = vmatpush1.msra.mxu0 %v2076
        %2702 = vmatprep.subr.mxu0 0.0
        %2703 = vmatpush1.msra.mxu0 %v2075
        %2704 = vmatprep.subr.mxu0 0.0
        %2705 = vmatpush1.msra.mxu0 %v2074
        %2706 = vmatprep.subr.mxu0 0.0
        %2707 = vmatpush1.msra.mxu0 %v2073
        %2708 = vmatprep.subr.mxu0 0.0
        %2709 = vmatpush1.msra.mxu0 %v2072
        %2710 = vmatprep.subr.mxu0 0.0
        %2711 = vmatpush1.msra.mxu0 %v2071
        %2712 = vmatprep.subr.mxu0 0.0
        %2713 = vmatpush1.msra.mxu0 %v2070
        %2714 = vmatprep.subr.mxu0 0.0
        %2715 = vmatpush1.msra.mxu0 %v2069
        %2716 = vmatprep.subr.mxu0 0.0
        %2717 = vmatpush1.msra.mxu0 %v2068
        %2718 = vmatprep.subr.mxu0 0.0
        %2719 = vmatpush1.msra.mxu0 %v2067
        %2720 = vmatprep.subr.mxu0 0.0
        %2721 = vmatpush1.msra.mxu0 %v2066
        %2722 = vmatprep.subr.mxu0 0.0
        %2723 = vmatpush1.msra.mxu0 %v2065
        %2724 = vmatprep.subr.mxu0 0.0
        %2725 = vmatpush1.msra.mxu0 %v2064
        %2726 = vmatprep.subr.mxu0 0.0
        %2727 = vmatpush1.msra.mxu0 %v2063
        %2728 = vmatprep.subr.mxu0 0.0
        %2729 = vmatpush2.msra.mxu0 %v2094
        %2730 = vmatprep.subr.mxu0 0.0
        %2731 = vmatpush2.msra.mxu0 %v2093
        %2732 = vmatprep.subr.mxu0 0.0
        %2733 = vmatpush2.msra.mxu0 %v2092
        %2734 = vmatprep.subr.mxu0 0.0
        %2735 = vmatpush2.msra.mxu0 %v2091
        %2736 = vmatprep.subr.mxu0 0.0
        %2737 = vmatpush2.msra.mxu0 %v2090
        %2738 = vmatprep.subr.mxu0 0.0
        %2739 = vmatpush2.msra.mxu0 %v2089
        %2740 = vmatprep.subr.mxu0 0.0
        %2741 = vmatpush2.msra.mxu0 %v2088
        %2742 = vmatprep.subr.mxu0 0.0
        %2743 = vmatpush2.msra.mxu0 %v2087
        %2744 = vmatprep.subr.mxu0 0.0
        %2745 = vmatpush2.msra.mxu0 %v2086
        %2746 = vmatprep.subr.mxu0 0.0
        %2747 = vmatpush2.msra.mxu0 %v2085
        %2748 = vmatprep.subr.mxu0 0.0
        %2749 = vmatpush2.msra.mxu0 %v2084
        %2750 = vmatprep.subr.mxu0 0.0
        %2751 = vmatpush2.msra.mxu0 %v2083
        %2752 = vmatprep.subr.mxu0 0.0
        %2753 = vmatpush2.msra.mxu0 %v2082
        %2754 = vmatprep.subr.mxu0 0.0
        %2755 = vmatpush2.msra.mxu0 %v2081
        %2756 = vmatprep.subr.mxu0 0.0
        %2757 = vmatpush2.msra.mxu0 %v2080
        %2758 = vmatprep.subr.mxu0 0.0
        %2759 = vmatpush2.msra.mxu0 %v2079
        %2760 = vmatprep.mubr.f32.mxu0 %v2272
        %2761 = vmatmul.mubr.f32.gmra.mxu0 %v2240
        %v2762 = vpop.f32.mrf.mxu0
        %v2763 = vadd.f32 %v2538, %v2762
        %v2764 = vpop.f32.mrf.mxu0
        %2765 = vmatprep.mubr.f32.mxu0 %v2273
        %2766 = vmatmul.mubr.f32.gmra.mxu0 %v2241
        %v2767 = vpop.f32.mrf.mxu0
        %v2768 = vadd.f32 %v2543, %v2767
        %v2769 = vpop.f32.mrf.mxu0
        %2770 = vmatprep.mubr.f32.mxu0 %v2274
        %2771 = vmatmul.mubr.f32.gmra.mxu0 %v2242
        %v2772 = vpop.f32.mrf.mxu0
        %v2773 = vadd.f32 %v2548, %v2772
        %v2774 = vpop.f32.mrf.mxu0
        %2775 = vmatprep.mubr.f32.mxu0 %v2275
        %2776 = vmatmul.mubr.f32.gmra.mxu0 %v2243
        %v2777 = vpop.f32.mrf.mxu0
        %v2778 = vadd.f32 %v2553, %v2777
        %v2779 = vpop.f32.mrf.mxu0
        %2780 = vmatprep.mubr.f32.mxu0 %v2276
        %2781 = vmatmul.mubr.f32.gmra.mxu0 %v2244
        %v2782 = vpop.f32.mrf.mxu0
        %v2783 = vadd.f32 %v2558, %v2782
        %v2784 = vpop.f32.mrf.mxu0
        %2785 = vmatprep.mubr.f32.mxu0 %v2277
        %2786 = vmatmul.mubr.f32.gmra.mxu0 %v2245
        %v2787 = vpop.f32.mrf.mxu0
        %v2788 = vadd.f32 %v2563, %v2787
        %v2789 = vpop.f32.mrf.mxu0
        %2790 = vmatprep.mubr.f32.mxu0 %v2278
        %2791 = vmatmul.mubr.f32.gmra.mxu0 %v2246
        %v2792 = vpop.f32.mrf.mxu0
        %v2793 = vadd.f32 %v2568, %v2792
        %v2794 = vpop.f32.mrf.mxu0
        %2795 = vmatprep.mubr.f32.mxu0 %v2279
        %2796 = vmatmul.mubr.f32.gmra.mxu0 %v2247
        %v2797 = vpop.f32.mrf.mxu0
        %v2798 = vadd.f32 %v2573, %v2797
        %v2799 = vpop.f32.mrf.mxu0
        %2800 = vmatprep.mubr.f32.mxu0 %v2280
        %2801 = vmatmul.mubr.f32.gmra.mxu0 %v2248
        %v2802 = vpop.f32.mrf.mxu0
        %v2803 = vadd.f32 %v2578, %v2802
        %v2804 = vpop.f32.mrf.mxu0
        %2805 = vmatprep.mubr.f32.mxu0 %v2281
        %2806 = vmatmul.mubr.f32.gmra.mxu0 %v2249
        %v2807 = vpop.f32.mrf.mxu0
        %v2808 = vadd.f32 %v2583, %v2807
        %v2809 = vpop.f32.mrf.mxu0
        %2810 = vmatprep.mubr.f32.mxu0 %v2282
        %2811 = vmatmul.mubr.f32.gmra.mxu0 %v2250
        %v2812 = vpop.f32.mrf.mxu0
        %v2813 = vadd.f32 %v2588, %v2812
        %v2814 = vpop.f32.mrf.mxu0
        %2815 = vmatprep.mubr.f32.mxu0 %v2283
        %2816 = vmatmul.mubr.f32.gmra.mxu0 %v2251
        %v2817 = vpop.f32.mrf.mxu0
        %v2818 = vadd.f32 %v2593, %v2817
        %v2819 = vpop.f32.mrf.mxu0
        %2820 = vmatprep.mubr.f32.mxu0 %v2284
        %2821 = vmatmul.mubr.f32.gmra.mxu0 %v2252
        %v2822 = vpop.f32.mrf.mxu0
        %v2823 = vadd.f32 %v2598, %v2822
        %v2824 = vpop.f32.mrf.mxu0
        %2825 = vmatprep.mubr.f32.mxu0 %v2285
        %2826 = vmatmul.mubr.f32.gmra.mxu0 %v2253
        %v2827 = vpop.f32.mrf.mxu0
        %v2828 = vadd.f32 %v2603, %v2827
        %v2829 = vpop.f32.mrf.mxu0
        %2830 = vmatprep.mubr.f32.mxu0 %v2286
        %2831 = vmatmul.mubr.f32.gmra.mxu0 %v2254
        %v2832 = vpop.f32.mrf.mxu0
        %v2833 = vadd.f32 %v2608, %v2832
        %v2834 = vpop.f32.mrf.mxu0
        %2835 = vmatprep.mubr.f32.mxu0 %v2287
        %2836 = vmatmul.mubr.f32.gmra.mxu0 %v2255
        %v2837 = vpop.f32.mrf.mxu0
        %v2838 = vadd.f32 %v2613, %v2837
        %v2839 = vpop.f32.mrf.mxu0
        %2840 = vmatprep.mubr.f32.mxu0 %v2288
        %2841 = vmatmul.mubr.f32.gmra.mxu0 %v2256
        %v2842 = vpop.f32.mrf.mxu0
        %v2843 = vadd.f32 %v2618, %v2842
        %v2844 = vpop.f32.mrf.mxu0
        %2845 = vmatprep.mubr.f32.mxu0 %v2289
        %2846 = vmatmul.mubr.f32.gmra.mxu0 %v2257
        %v2847 = vpop.f32.mrf.mxu0
        %v2848 = vadd.f32 %v2623, %v2847
        %v2849 = vpop.f32.mrf.mxu0
        %2850 = vmatprep.mubr.f32.mxu0 %v2290
        %2851 = vmatmul.mubr.f32.gmra.mxu0 %v2258
        %v2852 = vpop.f32.mrf.mxu0
        %v2853 = vadd.f32 %v2628, %v2852
        %v2854 = vpop.f32.mrf.mxu0
        %2855 = vmatprep.mubr.f32.mxu0 %v2291
        %2856 = vmatmul.mubr.f32.gmra.mxu0 %v2259
        %v2857 = vpop.f32.mrf.mxu0
        %v2858 = vadd.f32 %v2633, %v2857
        %v2859 = vpop.f32.mrf.mxu0
        %2860 = vmatprep.mubr.f32.mxu0 %v2292
        %2861 = vmatmul.mubr.f32.gmra.mxu0 %v2260
        %v2862 = vpop.f32.mrf.mxu0
        %v2863 = vadd.f32 %v2638, %v2862
        %v2864 = vpop.f32.mrf.mxu0
        %2865 = vmatprep.mubr.f32.mxu0 %v2293
        %2866 = vmatmul.mubr.f32.gmra.mxu0 %v2261
        %v2867 = vpop.f32.mrf.mxu0
        %v2868 = vadd.f32 %v2643, %v2867
        %v2869 = vpop.f32.mrf.mxu0
        %2870 = vmatprep.mubr.f32.mxu0 %v2294
        %2871 = vmatmul.mubr.f32.gmra.mxu0 %v2262
        %v2872 = vpop.f32.mrf.mxu0
        %v2873 = vadd.f32 %v2648, %v2872
        %v2874 = vpop.f32.mrf.mxu0
        %2875 = vmatprep.mubr.f32.mxu0 %v2295
        %2876 = vmatmul.mubr.f32.gmra.mxu0 %v2263
        %v2877 = vpop.f32.mrf.mxu0
        %v2878 = vadd.f32 %v2653, %v2877
        %v2879 = vpop.f32.mrf.mxu0
        %2880 = vmatprep.mubr.f32.mxu0 %v2296
        %2881 = vmatmul.mubr.f32.gmra.mxu0 %v2264
        %v2882 = vpop.f32.mrf.mxu0
        %v2883 = vadd.f32 %v2658, %v2882
        %v2884 = vpop.f32.mrf.mxu0
        %2885 = vmatprep.mubr.f32.mxu0 %v2297
        %2886 = vmatmul.mubr.f32.gmra.mxu0 %v2265
        %v2887 = vpop.f32.mrf.mxu0
        %v2888 = vadd.f32 %v2663, %v2887
        %v2889 = vpop.f32.mrf.mxu0
        %2890 = vmatprep.mubr.f32.mxu0 %v2298
        %2891 = vmatmul.mubr.f32.gmra.mxu0 %v2266
        %v2892 = vpop.f32.mrf.mxu0
        %v2893 = vadd.f32 %v2668, %v2892
        %v2894 = vpop.f32.mrf.mxu0
        %2895 = vmatprep.mubr.f32.mxu0 %v2299
        %2896 = vmatmul.mubr.f32.gmra.mxu0 %v2267
        %v2897 = vpop.f32.mrf.mxu0
        %v2898 = vadd.f32 %v2673, %v2897
        %v2899 = vpop.f32.mrf.mxu0
        %2900 = vmatprep.mubr.f32.mxu0 %v2300
        %2901 = vmatmul.mubr.f32.gmra.mxu0 %v2268
        %v2902 = vpop.f32.mrf.mxu0
        %v2903 = vadd.f32 %v2678, %v2902
        %v2904 = vpop.f32.mrf.mxu0
        %2905 = vmatprep.mubr.f32.mxu0 %v2301
        %2906 = vmatmul.mubr.f32.gmra.mxu0 %v2269
        %v2907 = vpop.f32.mrf.mxu0
        %v2908 = vadd.f32 %v2683, %v2907
        %v2909 = vpop.f32.mrf.mxu0
        %2910 = vmatprep.mubr.f32.mxu0 %v2302
        %2911 = vmatmul.mubr.f32.gmra.mxu0 %v2270
        %v2912 = vpop.f32.mrf.mxu0
        %v2913 = vadd.f32 %v2688, %v2912
        %v2914 = vpop.f32.mrf.mxu0
        %2915 = vmatprep.mubr.f32.mxu0 %v2303
        %2916 = vmatmul.mubr.f32.gmra.mxu0 %v2271
        %v2917 = vpop.f32.mrf.mxu0
        %v2918 = vadd.f32 %v2693, %v2917
        %v2919 = vpop.f32.mrf.mxu0
        %2920 = vdwg.mxu0
        %2921 = vmatprep.subr.mxu0 0.0
        %2922 = vmatpush1.msra.mxu0 %v2110
        %2923 = vmatprep.subr.mxu0 0.0
        %2924 = vmatpush1.msra.mxu0 %v2109
        %2925 = vmatprep.subr.mxu0 0.0
        %2926 = vmatpush1.msra.mxu0 %v2108
        %2927 = vmatprep.subr.mxu0 0.0
        %2928 = vmatpush1.msra.mxu0 %v2107
        %2929 = vmatprep.subr.mxu0 0.0
        %2930 = vmatpush1.msra.mxu0 %v2106
        %2931 = vmatprep.subr.mxu0 0.0
        %2932 = vmatpush1.msra.mxu0 %v2105
        %2933 = vmatprep.subr.mxu0 0.0
        %2934 = vmatpush1.msra.mxu0 %v2104
        %2935 = vmatprep.subr.mxu0 0.0
        %2936 = vmatpush1.msra.mxu0 %v2103
        %2937 = vmatprep.subr.mxu0 0.0
        %2938 = vmatpush1.msra.mxu0 %v2102
        %2939 = vmatprep.subr.mxu0 0.0
        %2940 = vmatpush1.msra.mxu0 %v2101
        %2941 = vmatprep.subr.mxu0 0.0
        %2942 = vmatpush1.msra.mxu0 %v2100
        %2943 = vmatprep.subr.mxu0 0.0
        %2944 = vmatpush1.msra.mxu0 %v2099
        %2945 = vmatprep.subr.mxu0 0.0
        %2946 = vmatpush1.msra.mxu0 %v2098
        %2947 = vmatprep.subr.mxu0 0.0
        %2948 = vmatpush1.msra.mxu0 %v2097
        %2949 = vmatprep.subr.mxu0 0.0
        %2950 = vmatpush1.msra.mxu0 %v2096
        %2951 = vmatprep.subr.mxu0 0.0
        %2952 = vmatpush1.msra.mxu0 %v2095
        %2953 = vmatprep.subr.mxu0 0.0
        %2954 = vmatpush2.msra.mxu0 %v2126
        %2955 = vmatprep.subr.mxu0 0.0
        %2956 = vmatpush2.msra.mxu0 %v2125
        %2957 = vmatprep.subr.mxu0 0.0
        %2958 = vmatpush2.msra.mxu0 %v2124
        %2959 = vmatprep.subr.mxu0 0.0
        %2960 = vmatpush2.msra.mxu0 %v2123
        %2961 = vmatprep.subr.mxu0 0.0
        %2962 = vmatpush2.msra.mxu0 %v2122
        %2963 = vmatprep.subr.mxu0 0.0
        %2964 = vmatpush2.msra.mxu0 %v2121
        %2965 = vmatprep.subr.mxu0 0.0
        %2966 = vmatpush2.msra.mxu0 %v2120
        %2967 = vmatprep.subr.mxu0 0.0
        %2968 = vmatpush2.msra.mxu0 %v2119
        %2969 = vmatprep.subr.mxu0 0.0
        %2970 = vmatpush2.msra.mxu0 %v2118
        %2971 = vmatprep.subr.mxu0 0.0
        %2972 = vmatpush2.msra.mxu0 %v2117
        %2973 = vmatprep.subr.mxu0 0.0
        %2974 = vmatpush2.msra.mxu0 %v2116
        %2975 = vmatprep.subr.mxu0 0.0
        %2976 = vmatpush2.msra.mxu0 %v2115
        %2977 = vmatprep.subr.mxu0 0.0
        %2978 = vmatpush2.msra.mxu0 %v2114
        %2979 = vmatprep.subr.mxu0 0.0
        %2980 = vmatpush2.msra.mxu0 %v2113
        %2981 = vmatprep.subr.mxu0 0.0
        %2982 = vmatpush2.msra.mxu0 %v2112
        %2983 = vmatprep.subr.mxu0 0.0
        %2984 = vmatpush2.msra.mxu0 %v2111
        %2985 = vmatprep.mubr.f32.mxu0 %v2336
        %2986 = vmatmul.mubr.f32.gmra.mxu0 %v2304
        %v2987 = vpop.f32.mrf.mxu0
        %v2988 = vadd.f32 %v2763, %v2987
        %v2989 = vpop.f32.mrf.mxu0
        %2990 = vmatprep.mubr.f32.mxu0 %v2337
        %2991 = vmatmul.mubr.f32.gmra.mxu0 %v2305
        %v2992 = vpop.f32.mrf.mxu0
        %v2993 = vadd.f32 %v2768, %v2992
        %v2994 = vpop.f32.mrf.mxu0
        %2995 = vmatprep.mubr.f32.mxu0 %v2338
        %2996 = vmatmul.mubr.f32.gmra.mxu0 %v2306
        %v2997 = vpop.f32.mrf.mxu0
        %v2998 = vadd.f32 %v2773, %v2997
        %v2999 = vpop.f32.mrf.mxu0
        %3000 = vmatprep.mubr.f32.mxu0 %v2339
        %3001 = vmatmul.mubr.f32.gmra.mxu0 %v2307
        %v3002 = vpop.f32.mrf.mxu0
        %v3003 = vadd.f32 %v2778, %v3002
        %v3004 = vpop.f32.mrf.mxu0
        %3005 = vmatprep.mubr.f32.mxu0 %v2340
        %3006 = vmatmul.mubr.f32.gmra.mxu0 %v2308
        %v3007 = vpop.f32.mrf.mxu0
        %v3008 = vadd.f32 %v2783, %v3007
        %v3009 = vpop.f32.mrf.mxu0
        %3010 = vmatprep.mubr.f32.mxu0 %v2341
        %3011 = vmatmul.mubr.f32.gmra.mxu0 %v2309
        %v3012 = vpop.f32.mrf.mxu0
        %v3013 = vadd.f32 %v2788, %v3012
        %v3014 = vpop.f32.mrf.mxu0
        %3015 = vmatprep.mubr.f32.mxu0 %v2342
        %3016 = vmatmul.mubr.f32.gmra.mxu0 %v2310
        %v3017 = vpop.f32.mrf.mxu0
        %v3018 = vadd.f32 %v2793, %v3017
        %v3019 = vpop.f32.mrf.mxu0
        %3020 = vmatprep.mubr.f32.mxu0 %v2343
        %3021 = vmatmul.mubr.f32.gmra.mxu0 %v2311
        %v3022 = vpop.f32.mrf.mxu0
        %v3023 = vadd.f32 %v2798, %v3022
        %v3024 = vpop.f32.mrf.mxu0
        %3025 = vmatprep.mubr.f32.mxu0 %v2344
        %3026 = vmatmul.mubr.f32.gmra.mxu0 %v2312
        %v3027 = vpop.f32.mrf.mxu0
        %v3028 = vadd.f32 %v2803, %v3027
        %v3029 = vpop.f32.mrf.mxu0
        %3030 = vmatprep.mubr.f32.mxu0 %v2345
        %3031 = vmatmul.mubr.f32.gmra.mxu0 %v2313
        %v3032 = vpop.f32.mrf.mxu0
        %v3033 = vadd.f32 %v2808, %v3032
        %v3034 = vpop.f32.mrf.mxu0
        %3035 = vmatprep.mubr.f32.mxu0 %v2346
        %3036 = vmatmul.mubr.f32.gmra.mxu0 %v2314
        %v3037 = vpop.f32.mrf.mxu0
        %v3038 = vadd.f32 %v2813, %v3037
        %v3039 = vpop.f32.mrf.mxu0
        %3040 = vmatprep.mubr.f32.mxu0 %v2347
        %3041 = vmatmul.mubr.f32.gmra.mxu0 %v2315
        %v3042 = vpop.f32.mrf.mxu0
        %v3043 = vadd.f32 %v2818, %v3042
        %v3044 = vpop.f32.mrf.mxu0
        %3045 = vmatprep.mubr.f32.mxu0 %v2348
        %3046 = vmatmul.mubr.f32.gmra.mxu0 %v2316
        %v3047 = vpop.f32.mrf.mxu0
        %v3048 = vadd.f32 %v2823, %v3047
        %v3049 = vpop.f32.mrf.mxu0
        %3050 = vmatprep.mubr.f32.mxu0 %v2349
        %3051 = vmatmul.mubr.f32.gmra.mxu0 %v2317
        %v3052 = vpop.f32.mrf.mxu0
        %v3053 = vadd.f32 %v2828, %v3052
        %v3054 = vpop.f32.mrf.mxu0
        %3055 = vmatprep.mubr.f32.mxu0 %v2350
        %3056 = vmatmul.mubr.f32.gmra.mxu0 %v2318
        %v3057 = vpop.f32.mrf.mxu0
        %v3058 = vadd.f32 %v2833, %v3057
        %v3059 = vpop.f32.mrf.mxu0
        %3060 = vmatprep.mubr.f32.mxu0 %v2351
        %3061 = vmatmul.mubr.f32.gmra.mxu0 %v2319
        %v3062 = vpop.f32.mrf.mxu0
        %v3063 = vadd.f32 %v2838, %v3062
        %v3064 = vpop.f32.mrf.mxu0
        %3065 = vmatprep.mubr.f32.mxu0 %v2352
        %3066 = vmatmul.mubr.f32.gmra.mxu0 %v2320
        %v3067 = vpop.f32.mrf.mxu0
        %v3068 = vadd.f32 %v2843, %v3067
        %v3069 = vpop.f32.mrf.mxu0
        %3070 = vmatprep.mubr.f32.mxu0 %v2353
        %3071 = vmatmul.mubr.f32.gmra.mxu0 %v2321
        %v3072 = vpop.f32.mrf.mxu0
        %v3073 = vadd.f32 %v2848, %v3072
        %v3074 = vpop.f32.mrf.mxu0
        %3075 = vmatprep.mubr.f32.mxu0 %v2354
        %3076 = vmatmul.mubr.f32.gmra.mxu0 %v2322
        %v3077 = vpop.f32.mrf.mxu0
        %v3078 = vadd.f32 %v2853, %v3077
        %v3079 = vpop.f32.mrf.mxu0
        %3080 = vmatprep.mubr.f32.mxu0 %v2355
        %3081 = vmatmul.mubr.f32.gmra.mxu0 %v2323
        %v3082 = vpop.f32.mrf.mxu0
        %v3083 = vadd.f32 %v2858, %v3082
        %v3084 = vpop.f32.mrf.mxu0
        %3085 = vmatprep.mubr.f32.mxu0 %v2356
        %3086 = vmatmul.mubr.f32.gmra.mxu0 %v2324
        %v3087 = vpop.f32.mrf.mxu0
        %v3088 = vadd.f32 %v2863, %v3087
        %v3089 = vpop.f32.mrf.mxu0
        %3090 = vmatprep.mubr.f32.mxu0 %v2357
        %3091 = vmatmul.mubr.f32.gmra.mxu0 %v2325
        %v3092 = vpop.f32.mrf.mxu0
        %v3093 = vadd.f32 %v2868, %v3092
        %v3094 = vpop.f32.mrf.mxu0
        %3095 = vmatprep.mubr.f32.mxu0 %v2358
        %3096 = vmatmul.mubr.f32.gmra.mxu0 %v2326
        %v3097 = vpop.f32.mrf.mxu0
        %v3098 = vadd.f32 %v2873, %v3097
        %v3099 = vpop.f32.mrf.mxu0
        %3100 = vmatprep.mubr.f32.mxu0 %v2359
        %3101 = vmatmul.mubr.f32.gmra.mxu0 %v2327
        %v3102 = vpop.f32.mrf.mxu0
        %v3103 = vadd.f32 %v2878, %v3102
        %v3104 = vpop.f32.mrf.mxu0
        %3105 = vmatprep.mubr.f32.mxu0 %v2360
        %3106 = vmatmul.mubr.f32.gmra.mxu0 %v2328
        %v3107 = vpop.f32.mrf.mxu0
        %v3108 = vadd.f32 %v2883, %v3107
        %v3109 = vpop.f32.mrf.mxu0
        %3110 = vmatprep.mubr.f32.mxu0 %v2361
        %3111 = vmatmul.mubr.f32.gmra.mxu0 %v2329
        %v3112 = vpop.f32.mrf.mxu0
        %v3113 = vadd.f32 %v2888, %v3112
        %v3114 = vpop.f32.mrf.mxu0
        %3115 = vmatprep.mubr.f32.mxu0 %v2362
        %3116 = vmatmul.mubr.f32.gmra.mxu0 %v2330
        %v3117 = vpop.f32.mrf.mxu0
        %v3118 = vadd.f32 %v2893, %v3117
        %v3119 = vpop.f32.mrf.mxu0
        %3120 = vmatprep.mubr.f32.mxu0 %v2363
        %3121 = vmatmul.mubr.f32.gmra.mxu0 %v2331
        %v3122 = vpop.f32.mrf.mxu0
        %v3123 = vadd.f32 %v2898, %v3122
        %v3124 = vpop.f32.mrf.mxu0
        %3125 = vmatprep.mubr.f32.mxu0 %v2364
        %3126 = vmatmul.mubr.f32.gmra.mxu0 %v2332
        %v3127 = vpop.f32.mrf.mxu0
        %v3128 = vadd.f32 %v2903, %v3127
        %v3129 = vpop.f32.mrf.mxu0
        %3130 = vmatprep.mubr.f32.mxu0 %v2365
        %3131 = vmatmul.mubr.f32.gmra.mxu0 %v2333
        %v3132 = vpop.f32.mrf.mxu0
        %v3133 = vadd.f32 %v2908, %v3132
        %v3134 = vpop.f32.mrf.mxu0
        %3135 = vmatprep.mubr.f32.mxu0 %v2366
        %3136 = vmatmul.mubr.f32.gmra.mxu0 %v2334
        %v3137 = vpop.f32.mrf.mxu0
        %v3138 = vadd.f32 %v2913, %v3137
        %v3139 = vpop.f32.mrf.mxu0
        %3140 = vmatprep.mubr.f32.mxu0 %v2367
        %3141 = vmatmul.mubr.f32.gmra.mxu0 %v2335
        %v3142 = vpop.f32.mrf.mxu0
        %v3143 = vadd.f32 %v2918, %v3142
        %v3144 = vpop.f32.mrf.mxu0
        %3145 = vdwg.mxu0
        %3146 = vmatprep.subr.mxu0 0.0
        %3147 = vmatpush1.msra.mxu0 %v2142
        %3148 = vmatprep.subr.mxu0 0.0
        %3149 = vmatpush1.msra.mxu0 %v2141
        %3150 = vmatprep.subr.mxu0 0.0
        %3151 = vmatpush1.msra.mxu0 %v2140
        %3152 = vmatprep.subr.mxu0 0.0
        %3153 = vmatpush1.msra.mxu0 %v2139
        %3154 = vmatprep.subr.mxu0 0.0
        %3155 = vmatpush1.msra.mxu0 %v2138
        %3156 = vmatprep.subr.mxu0 0.0
        %3157 = vmatpush1.msra.mxu0 %v2137
        %3158 = vmatprep.subr.mxu0 0.0
        %3159 = vmatpush1.msra.mxu0 %v2136
        %3160 = vmatprep.subr.mxu0 0.0
        %3161 = vmatpush1.msra.mxu0 %v2135
        %3162 = vmatprep.subr.mxu0 0.0
        %3163 = vmatpush1.msra.mxu0 %v2134
        %3164 = vmatprep.subr.mxu0 0.0
        %3165 = vmatpush1.msra.mxu0 %v2133
        %3166 = vmatprep.subr.mxu0 0.0
        %3167 = vmatpush1.msra.mxu0 %v2132
        %3168 = vmatprep.subr.mxu0 0.0
        %3169 = vmatpush1.msra.mxu0 %v2131
        %3170 = vmatprep.subr.mxu0 0.0
        %3171 = vmatpush1.msra.mxu0 %v2130
        %3172 = vmatprep.subr.mxu0 0.0
        %3173 = vmatpush1.msra.mxu0 %v2129
        %3174 = vmatprep.subr.mxu0 0.0
        %3175 = vmatpush1.msra.mxu0 %v2128
        %3176 = vmatprep.subr.mxu0 0.0
        %3177 = vmatpush1.msra.mxu0 %v2127
        %3178 = vmatprep.subr.mxu0 0.0
        %3179 = vmatpush2.msra.mxu0 %v2158
        %3180 = vmatprep.subr.mxu0 0.0
        %3181 = vmatpush2.msra.mxu0 %v2157
        %3182 = vmatprep.subr.mxu0 0.0
        %3183 = vmatpush2.msra.mxu0 %v2156
        %3184 = vmatprep.subr.mxu0 0.0
        %3185 = vmatpush2.msra.mxu0 %v2155
        %3186 = vmatprep.subr.mxu0 0.0
        %3187 = vmatpush2.msra.mxu0 %v2154
        %3188 = vmatprep.subr.mxu0 0.0
        %3189 = vmatpush2.msra.mxu0 %v2153
        %3190 = vmatprep.subr.mxu0 0.0
        %3191 = vmatpush2.msra.mxu0 %v2152
        %3192 = vmatprep.subr.mxu0 0.0
        %3193 = vmatpush2.msra.mxu0 %v2151
        %3194 = vmatprep.subr.mxu0 0.0
        %3195 = vmatpush2.msra.mxu0 %v2150
        %3196 = vmatprep.subr.mxu0 0.0
        %3197 = vmatpush2.msra.mxu0 %v2149
        %3198 = vmatprep.subr.mxu0 0.0
        %3199 = vmatpush2.msra.mxu0 %v2148
        %3200 = vmatprep.subr.mxu0 0.0
        %3201 = vmatpush2.msra.mxu0 %v2147
        %3202 = vmatprep.subr.mxu0 0.0
        %3203 = vmatpush2.msra.mxu0 %v2146
        %3204 = vmatprep.subr.mxu0 0.0
        %3205 = vmatpush2.msra.mxu0 %v2145
        %3206 = vmatprep.subr.mxu0 0.0
        %3207 = vmatpush2.msra.mxu0 %v2144
        %3208 = vmatprep.subr.mxu0 0.0
        %3209 = vmatpush2.msra.mxu0 %v2143
        %3210 = vmatprep.mubr.f32.mxu0 %v2401
        %3211 = vmatmul.mubr.f32.gmra.mxu0 %v2369
        %v3212 = vpop.f32.mrf.mxu0
        %v3213 = vadd.f32 %v2988, %v3212
        %v3214 = vpop.f32.mrf.mxu0
        %3215 = vmatprep.mubr.f32.mxu0 %v2402
        %3216 = vmatmul.mubr.f32.gmra.mxu0 %v2370
        %v3217 = vpop.f32.mrf.mxu0
        %v3218 = vadd.f32 %v2993, %v3217
        %v3219 = vpop.f32.mrf.mxu0
        %3220 = vmatprep.mubr.f32.mxu0 %v2403
        %3221 = vmatmul.mubr.f32.gmra.mxu0 %v2371
        %v3222 = vpop.f32.mrf.mxu0
        %v3223 = vadd.f32 %v2998, %v3222
        %v3224 = vpop.f32.mrf.mxu0
        %3225 = vmatprep.mubr.f32.mxu0 %v2404
        %3226 = vmatmul.mubr.f32.gmra.mxu0 %v2372
        %v3227 = vpop.f32.mrf.mxu0
        %v3228 = vadd.f32 %v3003, %v3227
        %v3229 = vpop.f32.mrf.mxu0
        %3230 = vmatprep.mubr.f32.mxu0 %v2405
        %3231 = vmatmul.mubr.f32.gmra.mxu0 %v2373
        %v3232 = vpop.f32.mrf.mxu0
        %v3233 = vadd.f32 %v3008, %v3232
        %v3234 = vpop.f32.mrf.mxu0
        %3235 = vmatprep.mubr.f32.mxu0 %v2406
        %3236 = vmatmul.mubr.f32.gmra.mxu0 %v2374
        %v3237 = vpop.f32.mrf.mxu0
        %v3238 = vadd.f32 %v3013, %v3237
        %v3239 = vpop.f32.mrf.mxu0
        %3240 = vmatprep.mubr.f32.mxu0 %v2407
        %3241 = vmatmul.mubr.f32.gmra.mxu0 %v2375
        %v3242 = vpop.f32.mrf.mxu0
        %v3243 = vadd.f32 %v3018, %v3242
        %v3244 = vpop.f32.mrf.mxu0
        %3245 = vmatprep.mubr.f32.mxu0 %v2408
        %3246 = vmatmul.mubr.f32.gmra.mxu0 %v2376
        %v3247 = vpop.f32.mrf.mxu0
        %v3248 = vadd.f32 %v3023, %v3247
        %v3249 = vpop.f32.mrf.mxu0
        %3250 = vmatprep.mubr.f32.mxu0 %v2409
        %3251 = vmatmul.mubr.f32.gmra.mxu0 %v2377
        %v3252 = vpop.f32.mrf.mxu0
        %v3253 = vadd.f32 %v3028, %v3252
        %v3254 = vpop.f32.mrf.mxu0
        %3255 = vmatprep.mubr.f32.mxu0 %v2410
        %3256 = vmatmul.mubr.f32.gmra.mxu0 %v2378
        %v3257 = vpop.f32.mrf.mxu0
        %v3258 = vadd.f32 %v3033, %v3257
        %v3259 = vpop.f32.mrf.mxu0
        %3260 = vmatprep.mubr.f32.mxu0 %v2411
        %3261 = vmatmul.mubr.f32.gmra.mxu0 %v2379
        %v3262 = vpop.f32.mrf.mxu0
        %v3263 = vadd.f32 %v3038, %v3262
        %v3264 = vpop.f32.mrf.mxu0
        %3265 = vmatprep.mubr.f32.mxu0 %v2412
        %3266 = vmatmul.mubr.f32.gmra.mxu0 %v2380
        %v3267 = vpop.f32.mrf.mxu0
        %v3268 = vadd.f32 %v3043, %v3267
        %v3269 = vpop.f32.mrf.mxu0
        %3270 = vmatprep.mubr.f32.mxu0 %v2413
        %3271 = vmatmul.mubr.f32.gmra.mxu0 %v2381
        %v3272 = vpop.f32.mrf.mxu0
        %v3273 = vadd.f32 %v3048, %v3272
        %v3274 = vpop.f32.mrf.mxu0
        %3275 = vmatprep.mubr.f32.mxu0 %v2414
        %3276 = vmatmul.mubr.f32.gmra.mxu0 %v2382
        %v3277 = vpop.f32.mrf.mxu0
        %v3278 = vadd.f32 %v3053, %v3277
        %v3279 = vpop.f32.mrf.mxu0
        %3280 = vmatprep.mubr.f32.mxu0 %v2415
        %3281 = vmatmul.mubr.f32.gmra.mxu0 %v2383
        %v3282 = vpop.f32.mrf.mxu0
        %v3283 = vadd.f32 %v3058, %v3282
        %v3284 = vpop.f32.mrf.mxu0
        %3285 = vmatprep.mubr.f32.mxu0 %v2416
        %3286 = vmatmul.mubr.f32.gmra.mxu0 %v2384
        %v3287 = vpop.f32.mrf.mxu0
        %v3288 = vadd.f32 %v3063, %v3287
        %v3289 = vpop.f32.mrf.mxu0
        %3290 = vmatprep.mubr.f32.mxu0 %v2417
        %3291 = vmatmul.mubr.f32.gmra.mxu0 %v2385
        %v3292 = vpop.f32.mrf.mxu0
        %v3293 = vadd.f32 %v3068, %v3292
        %v3294 = vpop.f32.mrf.mxu0
        %3295 = vmatprep.mubr.f32.mxu0 %v2418
        %3296 = vmatmul.mubr.f32.gmra.mxu0 %v2386
        %v3297 = vpop.f32.mrf.mxu0
        %v3298 = vadd.f32 %v3073, %v3297
        %v3299 = vpop.f32.mrf.mxu0
        %3300 = vmatprep.mubr.f32.mxu0 %v2419
        %3301 = vmatmul.mubr.f32.gmra.mxu0 %v2387
        %v3302 = vpop.f32.mrf.mxu0
        %v3303 = vadd.f32 %v3078, %v3302
        %v3304 = vpop.f32.mrf.mxu0
        %3305 = vmatprep.mubr.f32.mxu0 %v2420
        %3306 = vmatmul.mubr.f32.gmra.mxu0 %v2388
        %v3307 = vpop.f32.mrf.mxu0
        %v3308 = vadd.f32 %v3083, %v3307
        %v3309 = vpop.f32.mrf.mxu0
        %3310 = vmatprep.mubr.f32.mxu0 %v2421
        %3311 = vmatmul.mubr.f32.gmra.mxu0 %v2389
        %v3312 = vpop.f32.mrf.mxu0
        %v3313 = vadd.f32 %v3088, %v3312
        %v3314 = vpop.f32.mrf.mxu0
        %3315 = vmatprep.mubr.f32.mxu0 %v2422
        %3316 = vmatmul.mubr.f32.gmra.mxu0 %v2390
        %v3317 = vpop.f32.mrf.mxu0
        %v3318 = vadd.f32 %v3093, %v3317
        %v3319 = vpop.f32.mrf.mxu0
        %3320 = vmatprep.mubr.f32.mxu0 %v2423
        %3321 = vmatmul.mubr.f32.gmra.mxu0 %v2391
        %v3322 = vpop.f32.mrf.mxu0
        %v3323 = vadd.f32 %v3098, %v3322
        %v3324 = vpop.f32.mrf.mxu0
        %3325 = vmatprep.mubr.f32.mxu0 %v2424
        %3326 = vmatmul.mubr.f32.gmra.mxu0 %v2392
        %v3327 = vpop.f32.mrf.mxu0
        %v3328 = vadd.f32 %v3103, %v3327
        %v3329 = vpop.f32.mrf.mxu0
        %3330 = vmatprep.mubr.f32.mxu0 %v2425
        %3331 = vmatmul.mubr.f32.gmra.mxu0 %v2393
        %v3332 = vpop.f32.mrf.mxu0
        %v3333 = vadd.f32 %v3108, %v3332
        %v3334 = vpop.f32.mrf.mxu0
        %3335 = vmatprep.mubr.f32.mxu0 %v2426
        %3336 = vmatmul.mubr.f32.gmra.mxu0 %v2394
        %v3337 = vpop.f32.mrf.mxu0
        %v3338 = vadd.f32 %v3113, %v3337
        %v3339 = vpop.f32.mrf.mxu0
        %3340 = vmatprep.mubr.f32.mxu0 %v2427
        %3341 = vmatmul.mubr.f32.gmra.mxu0 %v2395
        %v3342 = vpop.f32.mrf.mxu0
        %v3343 = vadd.f32 %v3118, %v3342
        %v3344 = vpop.f32.mrf.mxu0
        %3345 = vmatprep.mubr.f32.mxu0 %v2428
        %3346 = vmatmul.mubr.f32.gmra.mxu0 %v2396
        %v3347 = vpop.f32.mrf.mxu0
        %v3348 = vadd.f32 %v3123, %v3347
        %v3349 = vpop.f32.mrf.mxu0
        %3350 = vmatprep.mubr.f32.mxu0 %v2429
        %3351 = vmatmul.mubr.f32.gmra.mxu0 %v2397
        %v3352 = vpop.f32.mrf.mxu0
        %v3353 = vadd.f32 %v3128, %v3352
        %v3354 = vpop.f32.mrf.mxu0
        %3355 = vmatprep.mubr.f32.mxu0 %v2430
        %3356 = vmatmul.mubr.f32.gmra.mxu0 %v2398
        %v3357 = vpop.f32.mrf.mxu0
        %v3358 = vadd.f32 %v3133, %v3357
        %v3359 = vpop.f32.mrf.mxu0
        %3360 = vmatprep.mubr.f32.mxu0 %v2431
        %3361 = vmatmul.mubr.f32.gmra.mxu0 %v2399
        %v3362 = vpop.f32.mrf.mxu0
        %v3363 = vadd.f32 %v3138, %v3362
        %v3364 = vpop.f32.mrf.mxu0
        %3365 = vmatprep.mubr.f32.mxu0 %v2432
        %3366 = vmatmul.mubr.f32.gmra.mxu0 %v2400
        %v3367 = vpop.f32.mrf.mxu0
        %v3368 = vadd.f32 %v3143, %v3367
        %v3369 = vpop.f32.mrf.mxu0
        %3370 = vdwg.mxu0
        %3371 = vmatprep.subr.mxu0 0.0
        %3372 = vmatpush1.msra.mxu0 %v2174
        %3373 = vmatprep.subr.mxu0 0.0
        %3374 = vmatpush1.msra.mxu0 %v2173
        %3375 = vmatprep.subr.mxu0 0.0
        %3376 = vmatpush1.msra.mxu0 %v2172
        %3377 = vmatprep.subr.mxu0 0.0
        %3378 = vmatpush1.msra.mxu0 %v2171
        %3379 = vmatprep.subr.mxu0 0.0
        %3380 = vmatpush1.msra.mxu0 %v2170
        %3381 = vmatprep.subr.mxu0 0.0
        %3382 = vmatpush1.msra.mxu0 %v2169
        %3383 = vmatprep.subr.mxu0 0.0
        %3384 = vmatpush1.msra.mxu0 %v2168
        %3385 = vmatprep.subr.mxu0 0.0
        %3386 = vmatpush1.msra.mxu0 %v2167
        %3387 = vmatprep.subr.mxu0 0.0
        %3388 = vmatpush1.msra.mxu0 %v2166
        %3389 = vmatprep.subr.mxu0 0.0
        %3390 = vmatpush1.msra.mxu0 %v2165
        %3391 = vmatprep.subr.mxu0 0.0
        %3392 = vmatpush1.msra.mxu0 %v2164
        %3393 = vmatprep.subr.mxu0 0.0
        %3394 = vmatpush1.msra.mxu0 %v2163
        %3395 = vmatprep.subr.mxu0 0.0
        %3396 = vmatpush1.msra.mxu0 %v2162
        %3397 = vmatprep.subr.mxu0 0.0
        %3398 = vmatpush1.msra.mxu0 %v2161
        %3399 = vmatprep.subr.mxu0 0.0
        %3400 = vmatpush1.msra.mxu0 %v2160
        %3401 = vmatprep.subr.mxu0 0.0
        %3402 = vmatpush1.msra.mxu0 %v2159
        %3403 = vmatprep.subr.mxu0 0.0
        %3404 = vmatpush2.msra.mxu0 0.0
        %3405 = vmatprep.subr.mxu0 0.0
        %3406 = vmatpush2.msra.mxu0 0.0
        %3407 = vmatprep.subr.mxu0 0.0
        %3408 = vmatpush2.msra.mxu0 0.0
        %3409 = vmatprep.subr.mxu0 0.0
        %3410 = vmatpush2.msra.mxu0 0.0
        %3411 = vmatprep.subr.mxu0 0.0
        %3412 = vmatpush2.msra.mxu0 0.0
        %3413 = vmatprep.subr.mxu0 0.0
        %3414 = vmatpush2.msra.mxu0 0.0
        %3415 = vmatprep.subr.mxu0 0.0
        %3416 = vmatpush2.msra.mxu0 0.0
        %3417 = vmatprep.subr.mxu0 0.0
        %3418 = vmatpush2.msra.mxu0 0.0
        %3419 = vmatprep.subr.mxu0 0.0
        %3420 = vmatpush2.msra.mxu0 0.0
        %3421 = vmatprep.subr.mxu0 0.0
        %3422 = vmatpush2.msra.mxu0 0.0
        %3423 = vmatprep.subr.mxu0 0.0
        %3424 = vmatpush2.msra.mxu0 0.0
        %3425 = vmatprep.subr.mxu0 0.0
        %3426 = vmatpush2.msra.mxu0 0.0
        %3427 = vmatprep.subr.mxu0 0.0
        %3428 = vmatpush2.msra.mxu0 0.0
        %3429 = vmatprep.subr.mxu0 0.0
        %3430 = vmatpush2.msra.mxu0 0.0
        %3431 = vmatprep.subr.mxu0 0.0
        %3432 = vmatpush2.msra.mxu0 0.0
        %3433 = vmatprep.subr.mxu0 0.0
        %3434 = vmatpush2.msra.mxu0 0.0
        %3435 = vmatprep.mubr.f32.mxu0 0.0
        %3436 = vmatmul.mubr.f32.gmra.mxu0 %v2433
        %v3437 = vpop.f32.mrf.mxu0
        %v3438 = vadd.f32 %v3213, %v3437
        %v3439 = vpop.f32.mrf.mxu0
        %3440 = vmatprep.mubr.f32.mxu0 0.0
        %3441 = vmatmul.mubr.f32.gmra.mxu0 %v2434
        %v3442 = vpop.f32.mrf.mxu0
        %v3443 = vadd.f32 %v3218, %v3442
        %v3444 = vpop.f32.mrf.mxu0
        %3445 = vmatprep.mubr.f32.mxu0 0.0
        %3446 = vmatmul.mubr.f32.gmra.mxu0 %v2435
        %v3447 = vpop.f32.mrf.mxu0
        %v3448 = vadd.f32 %v3223, %v3447
        %v3449 = vpop.f32.mrf.mxu0
        %3450 = vmatprep.mubr.f32.mxu0 0.0
        %3451 = vmatmul.mubr.f32.gmra.mxu0 %v2436
        %v3452 = vpop.f32.mrf.mxu0
        %v3453 = vadd.f32 %v3228, %v3452
        %v3454 = vpop.f32.mrf.mxu0
        %3455 = vmatprep.mubr.f32.mxu0 0.0
        %3456 = vmatmul.mubr.f32.gmra.mxu0 %v2437
        %v3457 = vpop.f32.mrf.mxu0
        %v3458 = vadd.f32 %v3233, %v3457
        %v3459 = vpop.f32.mrf.mxu0
        %3460 = vmatprep.mubr.f32.mxu0 0.0
        %3461 = vmatmul.mubr.f32.gmra.mxu0 %v2438
        %v3462 = vpop.f32.mrf.mxu0
        %v3463 = vadd.f32 %v3238, %v3462
        %v3464 = vpop.f32.mrf.mxu0
        %3465 = vmatprep.mubr.f32.mxu0 0.0
        %3466 = vmatmul.mubr.f32.gmra.mxu0 %v2439
        %v3467 = vpop.f32.mrf.mxu0
        %v3468 = vadd.f32 %v3243, %v3467
        %v3469 = vpop.f32.mrf.mxu0
        %3470 = vmatprep.mubr.f32.mxu0 0.0
        %3471 = vmatmul.mubr.f32.gmra.mxu0 %v2440
        %v3472 = vpop.f32.mrf.mxu0
        %v3473 = vadd.f32 %v3248, %v3472
        %v3474 = vpop.f32.mrf.mxu0
        %3475 = vmatprep.mubr.f32.mxu0 0.0
        %3476 = vmatmul.mubr.f32.gmra.mxu0 %v2441
        %v3477 = vpop.f32.mrf.mxu0
        %v3478 = vadd.f32 %v3253, %v3477
        %v3479 = vpop.f32.mrf.mxu0
        %3480 = vmatprep.mubr.f32.mxu0 0.0
        %3481 = vmatmul.mubr.f32.gmra.mxu0 %v2442
        %v3482 = vpop.f32.mrf.mxu0
        %v3483 = vadd.f32 %v3258, %v3482
        %v3484 = vpop.f32.mrf.mxu0
        %3485 = vmatprep.mubr.f32.mxu0 0.0
        %3486 = vmatmul.mubr.f32.gmra.mxu0 %v2443
        %v3487 = vpop.f32.mrf.mxu0
        %v3488 = vadd.f32 %v3263, %v3487
        %v3489 = vpop.f32.mrf.mxu0
        %3490 = vmatprep.mubr.f32.mxu0 0.0
        %3491 = vmatmul.mubr.f32.gmra.mxu0 %v2444
        %v3492 = vpop.f32.mrf.mxu0
        %v3493 = vadd.f32 %v3268, %v3492
        %v3494 = vpop.f32.mrf.mxu0
        %3495 = vmatprep.mubr.f32.mxu0 0.0
        %3496 = vmatmul.mubr.f32.gmra.mxu0 %v2445
        %v3497 = vpop.f32.mrf.mxu0
        %v3498 = vadd.f32 %v3273, %v3497
        %v3499 = vpop.f32.mrf.mxu0
        %3500 = vmatprep.mubr.f32.mxu0 0.0
        %3501 = vmatmul.mubr.f32.gmra.mxu0 %v2446
        %v3502 = vpop.f32.mrf.mxu0
        %v3503 = vadd.f32 %v3278, %v3502
        %v3504 = vpop.f32.mrf.mxu0
        %3505 = vmatprep.mubr.f32.mxu0 0.0
        %3506 = vmatmul.mubr.f32.gmra.mxu0 %v2447
        %v3507 = vpop.f32.mrf.mxu0
        %v3508 = vadd.f32 %v3283, %v3507
        %v3509 = vpop.f32.mrf.mxu0
        %3510 = vmatprep.mubr.f32.mxu0 0.0
        %3511 = vmatmul.mubr.f32.gmra.mxu0 %v2448
        %v3512 = vpop.f32.mrf.mxu0
        %v3513 = vadd.f32 %v3288, %v3512
        %v3514 = vpop.f32.mrf.mxu0
        %3515 = vmatprep.mubr.f32.mxu0 0.0
        %3516 = vmatmul.mubr.f32.gmra.mxu0 %v2449
        %v3517 = vpop.f32.mrf.mxu0
        %v3518 = vadd.f32 %v3293, %v3517
        %v3519 = vpop.f32.mrf.mxu0
        %3520 = vmatprep.mubr.f32.mxu0 0.0
        %3521 = vmatmul.mubr.f32.gmra.mxu0 %v2450
        %v3522 = vpop.f32.mrf.mxu0
        %v3523 = vadd.f32 %v3298, %v3522
        %v3524 = vpop.f32.mrf.mxu0
        %3525 = vmatprep.mubr.f32.mxu0 0.0
        %3526 = vmatmul.mubr.f32.gmra.mxu0 %v2451
        %v3527 = vpop.f32.mrf.mxu0
        %v3528 = vadd.f32 %v3303, %v3527
        %v3529 = vpop.f32.mrf.mxu0
        %3530 = vmatprep.mubr.f32.mxu0 0.0
        %3531 = vmatmul.mubr.f32.gmra.mxu0 %v2452
        %v3532 = vpop.f32.mrf.mxu0
        %v3533 = vadd.f32 %v3308, %v3532
        %v3534 = vpop.f32.mrf.mxu0
        %3535 = vmatprep.mubr.f32.mxu0 0.0
        %3536 = vmatmul.mubr.f32.gmra.mxu0 %v2453
        %v3537 = vpop.f32.mrf.mxu0
        %v3538 = vadd.f32 %v3313, %v3537
        %v3539 = vpop.f32.mrf.mxu0
        %3540 = vmatprep.mubr.f32.mxu0 0.0
        %3541 = vmatmul.mubr.f32.gmra.mxu0 %v2454
        %v3542 = vpop.f32.mrf.mxu0
        %v3543 = vadd.f32 %v3318, %v3542
        %v3544 = vpop.f32.mrf.mxu0
        %3545 = vmatprep.mubr.f32.mxu0 0.0
        %3546 = vmatmul.mubr.f32.gmra.mxu0 %v2455
        %v3547 = vpop.f32.mrf.mxu0
        %v3548 = vadd.f32 %v3323, %v3547
        %v3549 = vpop.f32.mrf.mxu0
        %3550 = vmatprep.mubr.f32.mxu0 0.0
        %3551 = vmatmul.mubr.f32.gmra.mxu0 %v2456
        %v3552 = vpop.f32.mrf.mxu0
        %v3553 = vadd.f32 %v3328, %v3552
        %v3554 = vpop.f32.mrf.mxu0
        %3555 = vmatprep.mubr.f32.mxu0 0.0
        %3556 = vmatmul.mubr.f32.gmra.mxu0 %v2457
        %v3557 = vpop.f32.mrf.mxu0
        %v3558 = vadd.f32 %v3333, %v3557
        %v3559 = vpop.f32.mrf.mxu0
        %3560 = vmatprep.mubr.f32.mxu0 0.0
        %3561 = vmatmul.mubr.f32.gmra.mxu0 %v2458
        %v3562 = vpop.f32.mrf.mxu0
        %v3563 = vadd.f32 %v3338, %v3562
        %v3564 = vpop.f32.mrf.mxu0
        %3565 = vmatprep.mubr.f32.mxu0 0.0
        %3566 = vmatmul.mubr.f32.gmra.mxu0 %v2459
        %v3567 = vpop.f32.mrf.mxu0
        %v3568 = vadd.f32 %v3343, %v3567
        %v3569 = vpop.f32.mrf.mxu0
        %3570 = vmatprep.mubr.f32.mxu0 0.0
        %3571 = vmatmul.mubr.f32.gmra.mxu0 %v2460
        %v3572 = vpop.f32.mrf.mxu0
        %v3573 = vadd.f32 %v3348, %v3572
        %v3574 = vpop.f32.mrf.mxu0
        %3575 = vmatprep.mubr.f32.mxu0 0.0
        %3576 = vmatmul.mubr.f32.gmra.mxu0 %v2461
        %v3577 = vpop.f32.mrf.mxu0
        %v3578 = vadd.f32 %v3353, %v3577
        %v3579 = vpop.f32.mrf.mxu0
        %3580 = vmatprep.mubr.f32.mxu0 0.0
        %3581 = vmatmul.mubr.f32.gmra.mxu0 %v2462
        %v3582 = vpop.f32.mrf.mxu0
        %v3583 = vadd.f32 %v3358, %v3582
        %v3584 = vpop.f32.mrf.mxu0
        %3585 = vmatprep.mubr.f32.mxu0 0.0
        %3586 = vmatmul.mubr.f32.gmra.mxu0 %v2463
        %v3587 = vpop.f32.mrf.mxu0
        %v3588 = vadd.f32 %v3363, %v3587
        %v3589 = vpop.f32.mrf.mxu0
        %3590 = vmatprep.mubr.f32.mxu0 0.0
        %3591 = vmatmul.mubr.f32.gmra.mxu0 %v2464
        %v3592 = vpop.f32.mrf.mxu0
        %v3593 = vadd.f32 %v3368, %v3592
        %v3594 = vpop.f32.mrf.mxu0
        %3595 = vdwg.mxu0
        %v3596 = vadd.f32 %v3438, %v3443
        %v3597 = vadd.f32 %v3596, %v3448
        %v3598 = vadd.f32 %v3597, %v3453
        %v3599 = vadd.f32 %v3598, %v3458
        %v3600 = vadd.f32 %v3599, %v3463
        %v3601 = vadd.f32 %v3600, %v3468
        %v3602 = vadd.f32 %v3601, %v3473
        %v3603 = vadd.f32 %v3602, %v3478
        %v3604 = vadd.f32 %v3603, %v3483
        %v3605 = vadd.f32 %v3604, %v3488
        %v3606 = vadd.f32 %v3605, %v3493
        %v3607 = vadd.f32 %v3606, %v3498
        %v3608 = vadd.f32 %v3607, %v3503
        %v3609 = vadd.f32 %v3608, %v3508
        %v3610 = vadd.f32 %v3609, %v3513
        %v3611 = vadd.f32 %v3610, %v3518
        %v3612 = vadd.f32 %v3611, %v3523
        %v3613 = vadd.f32 %v3612, %v3528
        %v3614 = vadd.f32 %v3613, %v3533
        %v3615 = vadd.f32 %v3614, %v3538
        %v3616 = vadd.f32 %v3615, %v3543
        %v3617 = vadd.f32 %v3616, %v3548
        %v3618 = vadd.f32 %v3617, %v3553
        %v3619 = vadd.f32 %v3618, %v3558
        %v3620 = vadd.f32 %v3619, %v3563
        %v3621 = vadd.f32 %v3620, %v3568
        %v3622 = vadd.f32 %v3621, %v3573
        %v3623 = vadd.f32 %v3622, %v3578
        %v3624 = vadd.f32 %v3623, %v3583
        %v3625 = vadd.f32 %v3624, %v3588
        %v3626 = vadd.f32 %v3625, %v3593
        %v3627 = vrot.slane %v3626, 4
        %v3628 = vadd.f32 %v3626, %v3627
        %v3629 = vrot.slane %v3628, 2
        %v3630 = vadd.f32 %v3628, %v3629
        %v3631 = vrot.slane %v3630, 1
        %v3632 = vadd.f32 %v3630, %v3631
        %v3633 = vmul.f32 %v3632, 0.00390625
        %v3634 = vld [vmem:[%s5] sm:$0xff]
        %v3635 = vld [vmem:[%s5 + $0x8] sm:$0xff]
        %v3636 = vld [vmem:[%s5 + $0x10] sm:$0xff]
        %v3637 = vld [vmem:[%s5 + $0x18] sm:$0xff]
        %v3638 = vld [vmem:[%s5 + $0x20] sm:$0xff]
        %v3639 = vld [vmem:[%s5 + $0x28] sm:$0xff]
        %v3640 = vld [vmem:[%s5 + $0x30] sm:$0xff]
        %v3641 = vld [vmem:[%s5 + $0x38] sm:$0xff]
        %v3642 = vld [vmem:[%s5 + $0x40] sm:$0xff]
        %v3643 = vld [vmem:[%s5 + $0x48] sm:$0xff]
        %v3644 = vld [vmem:[%s5 + $0x50] sm:$0xff]
        %v3645 = vld [vmem:[%s5 + $0x58] sm:$0xff]
        %v3646 = vld [vmem:[%s5 + $0x60] sm:$0xff]
        %v3647 = vld [vmem:[%s5 + $0x68] sm:$0xff]
        %v3648 = vld [vmem:[%s5 + $0x70] sm:$0xff]
        %v3649 = vld [vmem:[%s5 + $0x78] sm:$0xff]
        %v3650 = vld [vmem:[%s6] sm:$0x1]
        %3651 = vmatprep.subr.mxu0 0.0
        %3652 = vmatpush1.msra.mxu0 %v3649
        %3653 = vmatprep.subr.mxu0 0.0
        %3654 = vmatpush1.msra.mxu0 %v3648
        %3655 = vmatprep.subr.mxu0 0.0
        %3656 = vmatpush1.msra.mxu0 %v3647
        %3657 = vmatprep.subr.mxu0 0.0
        %3658 = vmatpush1.msra.mxu0 %v3646
        %3659 = vmatprep.subr.mxu0 0.0
        %3660 = vmatpush1.msra.mxu0 %v3645
        %3661 = vmatprep.subr.mxu0 0.0
        %3662 = vmatpush1.msra.mxu0 %v3644
        %3663 = vmatprep.subr.mxu0 0.0
        %3664 = vmatpush1.msra.mxu0 %v3643
        %3665 = vmatprep.subr.mxu0 0.0
        %3666 = vmatpush1.msra.mxu0 %v3642
        %3667 = vmatprep.subr.mxu0 0.0
        %3668 = vmatpush1.msra.mxu0 %v3641
        %3669 = vmatprep.subr.mxu0 0.0
        %3670 = vmatpush1.msra.mxu0 %v3640
        %3671 = vmatprep.subr.mxu0 0.0
        %3672 = vmatpush1.msra.mxu0 %v3639
        %3673 = vmatprep.subr.mxu0 0.0
        %3674 = vmatpush1.msra.mxu0 %v3638
        %3675 = vmatprep.subr.mxu0 0.0
        %3676 = vmatpush1.msra.mxu0 %v3637
        %3677 = vmatprep.subr.mxu0 0.0
        %3678 = vmatpush1.msra.mxu0 %v3636
        %3679 = vmatprep.subr.mxu0 0.0
        %3680 = vmatpush1.msra.mxu0 %v3635
        %3681 = vmatprep.subr.mxu0 0.0
        %3682 = vmatpush1.msra.mxu0 %v3634
        %3683 = vmatprep.subr.mxu0 0.0
        %3684 = vmatpush2.msra.mxu0 0.0
        %3685 = vmatprep.subr.mxu0 0.0
        %3686 = vmatpush2.msra.mxu0 0.0
        %3687 = vmatprep.subr.mxu0 0.0
        %3688 = vmatpush2.msra.mxu0 0.0
        %3689 = vmatprep.subr.mxu0 0.0
        %3690 = vmatpush2.msra.mxu0 0.0
        %3691 = vmatprep.subr.mxu0 0.0
        %3692 = vmatpush2.msra.mxu0 0.0
        %3693 = vmatprep.subr.mxu0 0.0
        %3694 = vmatpush2.msra.mxu0 0.0
        %3695 = vmatprep.subr.mxu0 0.0
        %3696 = vmatpush2.msra.mxu0 0.0
        %3697 = vmatprep.subr.mxu0 0.0
        %3698 = vmatpush2.msra.mxu0 0.0
        %3699 = vmatprep.subr.mxu0 0.0
        %3700 = vmatpush2.msra.mxu0 0.0
        %3701 = vmatprep.subr.mxu0 0.0
        %3702 = vmatpush2.msra.mxu0 0.0
        %3703 = vmatprep.subr.mxu0 0.0
        %3704 = vmatpush2.msra.mxu0 0.0
        %3705 = vmatprep.subr.mxu0 0.0
        %3706 = vmatpush2.msra.mxu0 0.0
        %3707 = vmatprep.subr.mxu0 0.0
        %3708 = vmatpush2.msra.mxu0 0.0
        %3709 = vmatprep.subr.mxu0 0.0
        %3710 = vmatpush2.msra.mxu0 0.0
        %3711 = vmatprep.subr.mxu0 0.0
        %3712 = vmatpush2.msra.mxu0 0.0
        %3713 = vmatprep.subr.mxu0 0.0
        %3714 = vmatpush2.msra.mxu0 0.0
        %3715 = vmatprep.mubr.f32.mxu0 0.0
        %3716 = vmatmul.mubr.f32.gmra.mxu0 %v3633
        %v3717 = vpop.f32.mrf.mxu0
        %v3718 = vadd.f32 %v3650, %v3717
        %v3719 = vpop.f32.mrf.mxu0
        %3720 = vdwg.mxu0
        %v3721 = vmax.f32 %v3718, 0.0
        %v3722 = vld [vmem:[%s7] sm:$0xff]
        %v3723 = vld [vmem:[%s8] sm:$0x1]
        %vm3724 = vcmask 64512
        %v3726 = vsel %vm3724, %v3721, 0
        %3728 = vmatprep.subr.mxu0 0.0
        %3729 = vmatpush1.msra.mxu0 0.0
        %3730 = vmatprep.subr.mxu0 0.0
        %3731 = vmatpush1.msra.mxu0 0.0
        %3732 = vmatprep.subr.mxu0 0.0
        %3733 = vmatpush1.msra.mxu0 0.0
        %3734 = vmatprep.subr.mxu0 0.0
        %3735 = vmatpush1.msra.mxu0 0.0
        %3736 = vmatprep.subr.mxu0 0.0
        %3737 = vmatpush1.msra.mxu0 0.0
        %3738 = vmatprep.subr.mxu0 0.0
        %3739 = vmatpush1.msra.mxu0 0.0
        %3740 = vmatprep.subr.mxu0 0.0
        %3741 = vmatpush1.msra.mxu0 0.0
        %3742 = vmatprep.subr.mxu0 0.0
        %3743 = vmatpush1.msra.mxu0 0.0
        %3744 = vmatprep.subr.mxu0 0.0
        %3745 = vmatpush1.msra.mxu0 0.0
        %3746 = vmatprep.subr.mxu0 0.0
        %3747 = vmatpush1.msra.mxu0 0.0
        %3748 = vmatprep.subr.mxu0 0.0
        %3749 = vmatpush1.msra.mxu0 0.0
        %3750 = vmatprep.subr.mxu0 0.0
        %3751 = vmatpush1.msra.mxu0 0.0
        %3752 = vmatprep.subr.mxu0 0.0
        %3753 = vmatpush1.msra.mxu0 0.0
        %3754 = vmatprep.subr.mxu0 0.0
        %3755 = vmatpush1.msra.mxu0 0.0
        %3756 = vmatprep.subr.mxu0 0.0
        %3757 = vmatpush1.msra.mxu0 0.0
        %3758 = vmatprep.subr.mxu0 0.0
        %3759 = vmatpush1.msra.mxu0 %v3722
        %3760 = vmatprep.subr.mxu0 0.0
        %3761 = vmatpush2.msra.mxu0 0.0
        %3762 = vmatprep.subr.mxu0 0.0
        %3763 = vmatpush2.msra.mxu0 0.0
        %3764 = vmatprep.subr.mxu0 0.0
        %3765 = vmatpush2.msra.mxu0 0.0
        %3766 = vmatprep.subr.mxu0 0.0
        %3767 = vmatpush2.msra.mxu0 0.0
        %3768 = vmatprep.subr.mxu0 0.0
        %3769 = vmatpush2.msra.mxu0 0.0
        %3770 = vmatprep.subr.mxu0 0.0
        %3771 = vmatpush2.msra.mxu0 0.0
        %3772 = vmatprep.subr.mxu0 0.0
        %3773 = vmatpush2.msra.mxu0 0.0
        %3774 = vmatprep.subr.mxu0 0.0
        %3775 = vmatpush2.msra.mxu0 0.0
        %3776 = vmatprep.subr.mxu0 0.0
        %3777 = vmatpush2.msra.mxu0 0.0
        %3778 = vmatprep.subr.mxu0 0.0
        %3779 = vmatpush2.msra.mxu0 0.0
        %3780 = vmatprep.subr.mxu0 0.0
        %3781 = vmatpush2.msra.mxu0 0.0
        %3782 = vmatprep.subr.mxu0 0.0
        %3783 = vmatpush2.msra.mxu0 0.0
        %3784 = vmatprep.subr.mxu0 0.0
        %3785 = vmatpush2.msra.mxu0 0.0
        %3786 = vmatprep.subr.mxu0 0.0
        %3787 = vmatpush2.msra.mxu0 0.0
        %3788 = vmatprep.subr.mxu0 0.0
        %3789 = vmatpush2.msra.mxu0 0.0
        %3790 = vmatprep.subr.mxu0 0.0
        %3791 = vmatpush2.msra.mxu0 0.0
        %3792 = vmatprep.mubr.f32.mxu0 0.0
        %3793 = vmatmul.mubr.f32.gmra.mxu0 %v3726
        %v3794 = vpop.f32.mrf.mxu0
        %v3795 = vadd.f32 %v3723, %v3794
        %v3796 = vpop.f32.mrf.mxu0
        %3797 = vdwg.mxu0
        %v3798 = vsub.f32 0.0, %v3795
        %v3799 = vmul.f32 %v3798, 1.442695
        %v3800 = vpow.pop %v3799
        %v3801 = vadd.f32 %v3800, 1.0
        %v3802 = vrcp.pop %v3801
        %v3803 = vmul.f32 1.0, %v3802
        %v3804 = vld [vmem:[%s587 + $0x1] sm:$0xff]
        %v3805 = vld [vmem:[%s587 + $0x9] sm:$0xff]
        %v3806 = vld [vmem:[%s587 + $0x19] sm:$0xff]
        %v3807 = vld [vmem:[%s587 + $0x21] sm:$0xff]
        %v3808 = vld [vmem:[%s587 + $0x31] sm:$0xff]
        %v3809 = vld [vmem:[%s587 + $0x39] sm:$0xff]
        %v3810 = vld [vmem:[%s587 + $0x49] sm:$0xff]
        %v3811 = vld [vmem:[%s587 + $0x51] sm:$0xff]
        %v3812 = vld [vmem:[%s587 + $0x61] sm:$0xff]
        %v3813 = vld [vmem:[%s587 + $0x69] sm:$0xff]
        %v3814 = vld [vmem:[%s587 + $0x79] sm:$0xff]
        %v3815 = vld [vmem:[%s587 + $0x81] sm:$0xff]
        %v3816 = vld [vmem:[%s587 + $0x91] sm:$0xff]
        %v3817 = vld [vmem:[%s587 + $0x99] sm:$0xff]
        %v3818 = vld [vmem:[%s587 + $0xa9] sm:$0xff]
        %v3819 = vld [vmem:[%s587 + $0xb1] sm:$0xff]
        %v3820 = vld [vmem:[%s587 + $0xc1] sm:$0xff]
        %v3821 = vld [vmem:[%s587 + $0xc9] sm:$0xff]
        %v3822 = vld [vmem:[%s587 + $0xd9] sm:$0xff]
        %v3823 = vld [vmem:[%s587 + $0xe1] sm:$0xff]
        %v3824 = vld [vmem:[%s587 + $0xf1] sm:$0xff]
        %v3825 = vld [vmem:[%s587 + $0xf9] sm:$0xff]
        %v3826 = vld [vmem:[%s587 + $0x109] sm:$0xff]
        %v3827 = vld [vmem:[%s587 + $0x111] sm:$0xff]
        %v3828 = vld [vmem:[%s587 + $0x121] sm:$0xff]
        %v3829 = vld [vmem:[%s587 + $0x129] sm:$0xff]
        %v3830 = vld [vmem:[%s587 + $0x139] sm:$0xff]
        %v3831 = vld [vmem:[%s587 + $0x141] sm:$0xff]
        %v3832 = vld [vmem:[%s587 + $0x151] sm:$0xff]
        %v3833 = vld [vmem:[%s587 + $0x159] sm:$0xff]
        %v3834 = vld [vmem:[%s587 + $0x169] sm:$0xff]
        %v3835 = vld [vmem:[%s587 + $0x171] sm:$0xff]
        %v3836 = vlaneseq
        %v3837 = vshrl.u32 %v3836, 7
        %v3838 = vsub.s32 0, %v3837
        %v3839 = vrot.slane %v3803, %v3838
        %v3840 = vmul.f32 %v3438, %v3839
        %v3841 = vmul.f32 %v3443, %v3839
        %v3842 = vmul.f32 %v3448, %v3839
        %v3843 = vmul.f32 %v3453, %v3839
        %v3844 = vmul.f32 %v3458, %v3839
        %v3845 = vmul.f32 %v3463, %v3839
        %v3846 = vmul.f32 %v3468, %v3839
        %v3847 = vmul.f32 %v3473, %v3839
        %v3848 = vmul.f32 %v3478, %v3839
        %v3849 = vmul.f32 %v3483, %v3839
        %v3850 = vmul.f32 %v3488, %v3839
        %v3851 = vmul.f32 %v3493, %v3839
        %v3852 = vmul.f32 %v3498, %v3839
        %v3853 = vmul.f32 %v3503, %v3839
        %v3854 = vmul.f32 %v3508, %v3839
        %v3855 = vmul.f32 %v3513, %v3839
        %v3856 = vmul.f32 %v3518, %v3839
        %v3857 = vmul.f32 %v3523, %v3839
        %v3858 = vmul.f32 %v3528, %v3839
        %v3859 = vmul.f32 %v3533, %v3839
        %v3860 = vmul.f32 %v3538, %v3839
        %v3861 = vmul.f32 %v3543, %v3839
        %v3862 = vmul.f32 %v3548, %v3839
        %v3863 = vmul.f32 %v3553, %v3839
        %v3864 = vmul.f32 %v3558, %v3839
        %v3865 = vmul.f32 %v3563, %v3839
        %v3866 = vmul.f32 %v3568, %v3839
        %v3867 = vmul.f32 %v3573, %v3839
        %v3868 = vmul.f32 %v3578, %v3839
        %v3869 = vmul.f32 %v3583, %v3839
        %v3870 = vmul.f32 %v3588, %v3839
        %v3871 = vmul.f32 %v3593, %v3839
        %v3872 = vadd.f32 %v3840, %v3804
        %v3873 = vadd.f32 %v3841, %v3805
        %v3874 = vadd.f32 %v3842, %v3806
        %v3875 = vadd.f32 %v3843, %v3807
        %v3876 = vadd.f32 %v3844, %v3808
        %v3877 = vadd.f32 %v3845, %v3809
        %v3878 = vadd.f32 %v3846, %v3810
        %v3879 = vadd.f32 %v3847, %v3811
        %v3880 = vadd.f32 %v3848, %v3812
        %v3881 = vadd.f32 %v3849, %v3813
        %v3882 = vadd.f32 %v3850, %v3814
        %v3883 = vadd.f32 %v3851, %v3815
        %v3884 = vadd.f32 %v3852, %v3816
        %v3885 = vadd.f32 %v3853, %v3817
        %v3886 = vadd.f32 %v3854, %v3818
        %v3887 = vadd.f32 %v3855, %v3819
        %v3888 = vadd.f32 %v3856, %v3820
        %v3889 = vadd.f32 %v3857, %v3821
        %v3890 = vadd.f32 %v3858, %v3822
        %v3891 = vadd.f32 %v3859, %v3823
        %v3892 = vadd.f32 %v3860, %v3824
        %v3893 = vadd.f32 %v3861, %v3825
        %v3894 = vadd.f32 %v3862, %v3826
        %v3895 = vadd.f32 %v3863, %v3827
        %v3896 = vadd.f32 %v3864, %v3828
        %v3897 = vadd.f32 %v3865, %v3829
        %v3898 = vadd.f32 %v3866, %v3830
        %v3899 = vadd.f32 %v3867, %v3831
        %v3900 = vadd.f32 %v3868, %v3832
        %v3901 = vadd.f32 %v3869, %v3833
        %v3902 = vadd.f32 %v3870, %v3834
        %v3903 = vadd.f32 %v3871, %v3835
        %3904 = vst [vmem:[%s340] sm:$0xff] %v3872
        %3905 = vst [vmem:[%s340 + $0x8] sm:$0xff] %v3873
        %3906 = vst [vmem:[%s340 + $0x10] sm:$0xff] %v3874
        %3907 = vst [vmem:[%s340 + $0x18] sm:$0xff] %v3875
        %3908 = vst [vmem:[%s340 + $0x20] sm:$0xff] %v3876
        %3909 = vst [vmem:[%s340 + $0x28] sm:$0xff] %v3877
        %3910 = vst [vmem:[%s340 + $0x30] sm:$0xff] %v3878
        %3911 = vst [vmem:[%s340 + $0x38] sm:$0xff] %v3879
        %3912 = vst [vmem:[%s340 + $0x40] sm:$0xff] %v3880
        %3913 = vst [vmem:[%s340 + $0x48] sm:$0xff] %v3881
        %3914 = vst [vmem:[%s340 + $0x50] sm:$0xff] %v3882
        %3915 = vst [vmem:[%s340 + $0x58] sm:$0xff] %v3883
        %3916 = vst [vmem:[%s340 + $0x60] sm:$0xff] %v3884
        %3917 = vst [vmem:[%s340 + $0x68] sm:$0xff] %v3885
        %3918 = vst [vmem:[%s340 + $0x70] sm:$0xff] %v3886
        %3919 = vst [vmem:[%s340 + $0x78] sm:$0xff] %v3887
        %3920 = vst [vmem:[%s340 + $0x80] sm:$0xff] %v3888
        %3921 = vst [vmem:[%s340 + $0x88] sm:$0xff] %v3889
        %3922 = vst [vmem:[%s340 + $0x90] sm:$0xff] %v3890
        %3923 = vst [vmem:[%s340 + $0x98] sm:$0xff] %v3891
        %3924 = vst [vmem:[%s340 + $0xa0] sm:$0xff] %v3892
        %3925 = vst [vmem:[%s340 + $0xa8] sm:$0xff] %v3893
        %3926 = vst [vmem:[%s340 + $0xb0] sm:$0xff] %v3894
        %3927 = vst [vmem:[%s340 + $0xb8] sm:$0xff] %v3895
        %3928 = vst [vmem:[%s340 + $0xc0] sm:$0xff] %v3896
        %3929 = vst [vmem:[%s340 + $0xc8] sm:$0xff] %v3897
        %3930 = vst [vmem:[%s340 + $0xd0] sm:$0xff] %v3898
        %3931 = vst [vmem:[%s340 + $0xd8] sm:$0xff] %v3899
        %3932 = vst [vmem:[%s340 + $0xe0] sm:$0xff] %v3900
        %3933 = vst [vmem:[%s340 + $0xe8] sm:$0xff] %v3901
        %3934 = vst [vmem:[%s340 + $0xf0] sm:$0xff] %v3902
        %3935 = vst [vmem:[%s340 + $0xf8] sm:$0xff] %v3903
        %s3936 = sand.u32 %s226, 1
        %s3937 = scalar_lea.sflag [#allocation5], %s3936
        %s3938 = sand.u32 %s226, 1
        %s3939 = smul.addr %s3938, 256
        %s3940 = scalar_lea.vmem [#allocation6], %s3939
        // Predicated region
        $region61: #{rcab_forward.1} parent=55 // pred_check
          %p3941 = pneg %p236
        $region62: #{rcab_forward.1} parent=55 // pred_check_branch
          %3943 = sbr.rel (%p3941) target = $region64
        $region63: #{rcab_forward.1} parent=55 // pred_region
          %s3945 = ssub.s32 4096, 4096
          %3946 = vsyncadd %s3937, %s3945
          %s3947 = smul.addr %s24, 32
          %s3948 = smul.addr %s3947, 128
          %s3949 = scalar_lea.hbm %s9, %s3948
          %s3950 = sshll.u32 %s3940, 4
          %s3951 = int_to_ptr.vmem [resolvable:$true] %s3950
          %3956 = dma.vmem_to_hbm [thread:$0]  %s3951, 4096, %s3949, %s3937, 128, 128, 8
        $region64: #{rcab_forward.1} parent=55 // pred_fallthru
          _
      $region56: #{rcab_forward.1} parent=5 // pred_fallthru
        _
      %p3957 = scmp.le.s32.totalorder 2, %s19
      // Predicated region
      $region65: #{rcab_forward.1} parent=5 // pred_check
        %p3958 = pneg %p3957
      $region66: #{rcab_forward.1} parent=5 // pred_check_branch
        %3960 = sbr.rel (%p3958) target = $region68
      $region67: #{rcab_forward.1} parent=5 // pred_region
        %s3961 = ssub.s32 %s19, 2
        // Predicated region
        $region69: #{rcab_forward.1} parent=67 // pred_check
          %p3962 = pneg %p242
        $region70: #{rcab_forward.1} parent=67 // pred_check_branch
          %3964 = sbr.rel (%p3962) target = $region72
        $region71: #{rcab_forward.1} parent=67 // pred_region
          %s3965 = sand.u32 %s227, 1
          %s3966 = scalar_lea.sflag [#allocation5], %s3965
          %s3967 = sand.u32 %s227, 1
          %s3968 = smul.addr %s3967, 256
          %s3969 = scalar_lea.vmem [#allocation6], %s3968
          %3970 = dma.done %s3966, 4096
        $region72: #{rcab_forward.1} parent=67 // pred_fallthru
          _
      $region68: #{rcab_forward.1} parent=5 // pred_fallthru
        _
    $region6: #{rcab_forward.1} parent=1 // loop_footer
      %s23 = sadd.s32 1, %s19
    $region7: #{rcab_forward.1} parent=1 // loop_footer_branch
      %18 = sbr.rel target = $region3
    $region8: #{rcab_forward.1} parent=1 // loop_exit
      _
    %3971 = vsyncpa [#allocation4], 1
    %s3972 = scalar_lea.sflag [#allocation4], 1
    %3973 = vsyncpa %s3972, 1
    %3974 = vsyncpa [#allocation5], 1
    %s3975 = scalar_lea.sflag [#allocation5], 1
    %3976 = vsyncpa %s3975, 1

</llo_original>
